<compile_context>
chip_gen: v5e
topology: v5e:2x2
jax: 0.10.0
libtpu: 0.0.40
codegen_flags: <defaults>
</compile_context>

<pallas_src>
import functools

import jax
import jax.numpy as jnp
import numpy as np
from jax.experimental import pallas as pl
from jax.experimental.pallas import tpu as pltpu


# ------------------------------- Pallas kernel -------------------------------
def sylvester_flow_kernel(mu_ref, var_ref, eps_ref,
                          r1_ref, r2_ref, b_ref, dprod_ref,
                          z0_ref, zk_ref, ld_ref, *, num_flows, z_size):
    Z = z_size

    # reparameterize: z0 = mu + sqrt(var) * eps        (Z, BT), batch on lanes
    z0 = mu_ref[...] + jnp.sqrt(var_ref[...]) * eps_ref[...]
    z0_ref[...] = z0

    # Carry z as a Python list of (1, BT) lane-rows: the odd-flow reverse
    # permutation is then a free Python list reversal (no data movement).
    z_rows = [z0[i:i + 1, :] for i in range(Z)]

    # log|det J| accumulated as a (Z, BT) slab; one sublane reduce at the end.
    ld_acc = jnp.zeros_like(z0)

    # Flow loop fully unrolled at trace time (small static trip count); all flow
    # parameters for this batch tile are already resident in VMEM.
    for k in range(num_flows):
        flipped = (k % 2 == 1)
        if flipped:
            # z_new = z + P r1 tanh(r2 P z + b)  ==  P around a plain flow on y = P z
            z_rows = z_rows[::-1]

        # ---- r2qzb = r2 @ y + b : 16 lane-dense VPU FMAs on (Z_i, BT) slabs ----
        pre = b_ref[k]                                   # (Z_i, BT)
        for j in range(Z):
            # r2_ref[k, j] is (Z_i, BT) with entries r2[b, i, j]
            pre = pre + r2_ref[k, j] * z_rows[j]
        h = jnp.tanh(pre)                                # (Z_i, BT)  (EUP)

        # ---- z <- z + r1 @ h : per-output-row slab multiply + sublane reduce ---
        new_rows = []
        for m in range(Z):
            # r1_ref[k, m] is (Z_i, BT) with entries r1[b, m, i]
            contrib = jnp.sum(r1_ref[k, m] * h, axis=0, keepdims=True)   # (1, BT)
            new_rows.append(z_rows[m] + contrib)
        z_rows = new_rows

        if flipped:
            z_rows = z_rows[::-1]

        # ---- log|det J| : diag(r1)*diag(r2)*tanh'(r2qzb) + 1 --------------------
        diag_j = dprod_ref[k] * (1.0 - h * h) + 1.0      # (Z, BT)
        ld_acc = ld_acc + jnp.log(jnp.abs(diag_j))

    zk_ref[...] = jnp.concatenate(z_rows, axis=0)        # (Z, BT), lane-dense store
    ld_ref[...] = jnp.sum(ld_acc, axis=0, keepdims=True) # (1, BT), lane-dense store


# --------------------------------- wrapper ------------------------------------
def _default_batch_tile(B):
    if B % 128 != 0:
        return B                       # single step; block == full batch dim
    for bt in (512, 384, 256, 128):    # prefer >=2 grid steps (v7x dual TC)
        if bt <= B // 2 and B % bt == 0:
            return bt
    return B                           # B == 128


def triangular_sylvester_forward(z_mu, z_var, eps, r1, r2, b, *, num_flows,
                                 batch_tile=None):
    """Reparameterize + TriangularSylvester flow chain (module forward, flow part).

    z_mu, z_var, eps : (B, Z)
    r1, r2           : (B, Z, Z, F) amortized triangular matrices (encode() layout)
    b                : (B, 1, Z, F) amortized offsets
    Returns (z0, z_k, log_det_j) with shapes (B, Z), (B, Z), (B,).
    """
    B, Z = z_mu.shape
    F = num_flows
    assert r1.shape == (B, Z, Z, F) and r2.shape == (B, Z, Z, F)
    assert b.shape == (B, 1, Z, F)

    f32 = jnp.float32

    # ---- batch-minor (lanes = batch) staging: single transposes, no flips ------
    mu_t = z_mu.T.astype(f32)                                     # (Z, B)
    var_t = z_var.T.astype(f32)                                   # (Z, B)
    eps_t = eps.T.astype(f32)                                     # (Z, B)
    r2_t = jnp.transpose(r2, (3, 2, 1, 0)).astype(f32)            # (F, Zj, Zi, B)
    r1_t = jnp.transpose(r1, (3, 1, 2, 0)).astype(f32)            # (F, Zm, Zi, B)
    b_t = jnp.transpose(b[:, 0, :, :], (2, 1, 0)).astype(f32)     # (F, Z, B)
    d = jnp.arange(Z)
    dprod = jnp.transpose(r1[:, d, d, :] * r2[:, d, d, :],
                          (2, 1, 0)).astype(f32)                  # (F, Z, B)

    BT = batch_tile if batch_tile is not None else _default_batch_tile(B)
    assert B % BT == 0, "batch must be divisible by the batch tile"
    grid = (B // BT,)

    # Explicit VMEM budget: all blocks for one step, double-buffered, + headroom.
    per_step = 4 * BT * (3 * Z + 2 * F * Z * Z + 2 * F * Z + 2 * Z + 1)
    vmem_bytes = int(min(max(4 * per_step + (4 << 20), 32 << 20), 48 << 20))

    kernel = functools.partial(sylvester_flow_kernel, num_flows=F, z_size=Z)

    z0_t, zk_t, ld = pl.pallas_call(
        kernel,
        out_shape=(jax.ShapeDtypeStruct((Z, B), f32),
                   jax.ShapeDtypeStruct((Z, B), f32),
                   jax.ShapeDtypeStruct((1, B), f32)),
        grid=grid,
        in_specs=[
            pl.BlockSpec((Z, BT), lambda i: (0, i)),               # mu
            pl.BlockSpec((Z, BT), lambda i: (0, i)),               # var
            pl.BlockSpec((Z, BT), lambda i: (0, i)),               # eps
            pl.BlockSpec((F, Z, Z, BT), lambda i: (0, 0, 0, i)),   # r1 (F,Zm,Zi,B)
            pl.BlockSpec((F, Z, Z, BT), lambda i: (0, 0, 0, i)),   # r2 (F,Zj,Zi,B)
            pl.BlockSpec((F, Z, BT), lambda i: (0, 0, i)),         # b
            pl.BlockSpec((F, Z, BT), lambda i: (0, 0, i)),         # diag(r1)*diag(r2)
        ],
        out_specs=(
            pl.BlockSpec((Z, BT), lambda i: (0, i)),               # z0
            pl.BlockSpec((Z, BT), lambda i: (0, i)),               # z_k
            pl.BlockSpec((1, BT), lambda i: (0, i)),               # log det J (lane-dense)
        ),
        compiler_params=pltpu.CompilerParams(
            dimension_semantics=("parallel",),
            vmem_limit_bytes=vmem_bytes),
    )(mu_t, var_t, eps_t, r1_t, r2_t, b_t, dprod)

    return z0_t.T, zk_t.T, ld[0]


# ------------------------------ pure-JAX reference ----------------------------
def reference_forward(z_mu, z_var, eps, r1, r2, b, *, num_flows):
    """Mirrors TriangularSylvesterVAE.forward flow loop / TriangularSylvester._forward."""
    B, Z = z_mu.shape
    flip = jnp.arange(Z - 1, -1, -1)
    diag = jnp.arange(Z)

    z0 = z_mu + jnp.sqrt(z_var) * eps
    z = z0
    logdet = jnp.zeros((B,), jnp.float32)
    for k in range(num_flows):
        r1k = r1[:, :, :, k]
        r2k = r2[:, :, :, k]
        bk = b[:, 0, :, k]
        diag_r1 = r1k[:, diag, diag]
        diag_r2 = r2k[:, diag, diag]

        z_per = z[:, flip] if k % 2 == 1 else z
        r2qzb = jnp.einsum('bj,bij->bi', z_per, r2k) + bk
        h = jnp.tanh(r2qzb)
        zz = jnp.einsum('bi,bmi->bm', h, r1k)
        if k % 2 == 1:
            zz = zz[:, flip]
        z = z + zz

        diag_j = diag_r1 * diag_r2 * (1.0 - h ** 2) + 1.0
        logdet = logdet + jnp.sum(jnp.log(jnp.abs(diag_j)), axis=-1)
    return z0, z, logdet


# ------------------------------------ main -------------------------------------
if __name__ == "__main__":
    # z_size=16, num_flows=4 (exercises both parities of the alternating permutation);
    # B=256 gives a 2-step batch grid with BT=128 (lane-dense tiles, both TCs on v7x).
    B, Z, NUM_FLOWS = 256, 16, 4

    key = jax.random.PRNGKey(0)
    k_mu, k_var, k_eps, k_d, k_d1, k_d2, k_b = jax.random.split(key, 7)

    z_mu = jax.random.normal(k_mu, (B, Z), jnp.float32)
    z_var = jax.nn.softplus(jax.random.normal(k_var, (B, Z), jnp.float32)) + 1e-3
    eps = jax.random.normal(k_eps, (B, Z), jnp.float32)

    # Amortized flow parameters constructed exactly like TriangularSylvesterVAE.encode():
    #   r1 = full_d * triu_mask ; r2 = full_d^T * triu_mask ; diagonals <- tanh(.)
    full_d = 0.1 * jax.random.normal(k_d, (B, Z, Z, NUM_FLOWS), jnp.float32)
    diag1 = jnp.tanh(0.5 * jax.random.normal(k_d1, (B, Z, NUM_FLOWS), jnp.float32))
    diag2 = jnp.tanh(0.5 * jax.random.normal(k_d2, (B, Z, NUM_FLOWS), jnp.float32))
    b_amor = 0.1 * jax.random.normal(k_b, (B, 1, Z, NUM_FLOWS), jnp.float32)

    triu = jnp.triu(jnp.ones((Z, Z), jnp.float32), k=1)[None, :, :, None]
    diag_idx = jnp.arange(Z)
    r1 = full_d * triu
    r2 = jnp.transpose(full_d, (0, 2, 1, 3)) * triu
    r1 = r1.at[:, diag_idx, diag_idx, :].set(diag1)
    r2 = r2.at[:, diag_idx, diag_idx, :].set(diag2)

    z0, zk, logdet = triangular_sylvester_forward(
        z_mu, z_var, eps, r1, r2, b_amor, num_flows=NUM_FLOWS)
    jax.block_until_ready((z0, zk, logdet))

    z0_ref, zk_ref, ld_ref = reference_forward(
        z_mu, z_var, eps, r1, r2, b_amor, num_flows=NUM_FLOWS)

    np.testing.assert_allclose(np.asarray(z0), np.asarray(z0_ref), rtol=1e-4, atol=1e-4)
    np.testing.assert_allclose(np.asarray(zk), np.asarray(zk_ref), rtol=1e-4, atol=1e-4)
    np.testing.assert_allclose(np.asarray(logdet), np.asarray(ld_ref), rtol=1e-4, atol=1e-4)

    print("KERNEL_OK")
</pallas_src>

<mosaic_0001>
module attributes {stable_mosaic.version = 11 : i64} {
  func.func @sylvester_flow_kernel(%arg0: i32, %arg1: memref<16x128xf32, #tpu.memory_space<vmem>>, %arg2: memref<16x128xf32, #tpu.memory_space<vmem>>, %arg3: memref<16x128xf32, #tpu.memory_space<vmem>>, %arg4: memref<4x16x16x128xf32, #tpu.memory_space<vmem>>, %arg5: memref<4x16x16x128xf32, #tpu.memory_space<vmem>>, %arg6: memref<4x16x128xf32, #tpu.memory_space<vmem>>, %arg7: memref<4x16x128xf32, #tpu.memory_space<vmem>>, %arg8: memref<16x128xf32, #tpu.memory_space<vmem>>, %arg9: memref<16x128xf32, #tpu.memory_space<vmem>>, %arg10: memref<1x128xf32, #tpu.memory_space<vmem>>) attributes {dimension_semantics = [#tpu.dimension_semantics<parallel>], iteration_bounds = array<i64: 2>, scalar_prefetch = 0 : i64, scratch_operands = 0 : i64, tpu.core_type = #tpu.core_type<tc>, window_params = [{transform_indices = @transform_0, window_bounds = array<i64: 16, 128>}, {transform_indices = @transform_1, window_bounds = array<i64: 16, 128>}, {transform_indices = @transform_2, window_bounds = array<i64: 16, 128>}, {transform_indices = @transform_3, window_bounds = array<i64: 4, 16, 16, 128>}, {transform_indices = @transform_4, window_bounds = array<i64: 4, 16, 16, 128>}, {transform_indices = @transform_5, window_bounds = array<i64: 4, 16, 128>}, {transform_indices = @transform_6, window_bounds = array<i64: 4, 16, 128>}, {transform_indices = @transform_7, window_bounds = array<i64: 16, 128>}, {transform_indices = @transform_8, window_bounds = array<i64: 16, 128>}, {transform_indices = @transform_9, window_bounds = array<i64: 1, 128>}]} {
    %c0 = arith.constant 0 : index
    %c0_0 = arith.constant 0 : index
    %0 = vector.load %arg1[%c0, %c0_0] : memref<16x128xf32, #tpu.memory_space<vmem>>, vector<16x128xf32>
    %c0_1 = arith.constant 0 : index
    %c0_2 = arith.constant 0 : index
    %1 = vector.load %arg2[%c0_1, %c0_2] : memref<16x128xf32, #tpu.memory_space<vmem>>, vector<16x128xf32>
    %2 = math.sqrt %1 : vector<16x128xf32>
    %c0_3 = arith.constant 0 : index
    %c0_4 = arith.constant 0 : index
    %3 = vector.load %arg3[%c0_3, %c0_4] : memref<16x128xf32, #tpu.memory_space<vmem>>, vector<16x128xf32>
    %4 = arith.mulf %2, %3 : vector<16x128xf32>
    %5 = arith.addf %0, %4 : vector<16x128xf32>
    %c0_5 = arith.constant 0 : index
    %c0_6 = arith.constant 0 : index
    %6 = vector.load %arg8[%c0_5, %c0_6] : memref<16x128xf32, #tpu.memory_space<vmem>>, vector<16x128xf32>
    tpu.vector_store %arg8[%c0_5, %c0_6], %5 {strides = array<i32>} : memref<16x128xf32, #tpu.memory_space<vmem>>, vector<16x128xf32>,
    %7 = vector.extract_strided_slice %5 {offsets = [0, 0], sizes = [1, 128], strides = [1, 1]} : vector<16x128xf32> to vector<1x128xf32>
    %8 = vector.extract_strided_slice %5 {offsets = [1, 0], sizes = [1, 128], strides = [1, 1]} : vector<16x128xf32> to vector<1x128xf32>
    %9 = vector.extract_strided_slice %5 {offsets = [2, 0], sizes = [1, 128], strides = [1, 1]} : vector<16x128xf32> to vector<1x128xf32>
    %10 = vector.extract_strided_slice %5 {offsets = [3, 0], sizes = [1, 128], strides = [1, 1]} : vector<16x128xf32> to vector<1x128xf32>
    %11 = vector.extract_strided_slice %5 {offsets = [4, 0], sizes = [1, 128], strides = [1, 1]} : vector<16x128xf32> to vector<1x128xf32>
    %12 = vector.extract_strided_slice %5 {offsets = [5, 0], sizes = [1, 128], strides = [1, 1]} : vector<16x128xf32> to vector<1x128xf32>
    %13 = vector.extract_strided_slice %5 {offsets = [6, 0], sizes = [1, 128], strides = [1, 1]} : vector<16x128xf32> to vector<1x128xf32>
    %14 = vector.extract_strided_slice %5 {offsets = [7, 0], sizes = [1, 128], strides = [1, 1]} : vector<16x128xf32> to vector<1x128xf32>
    %15 = vector.extract_strided_slice %5 {offsets = [8, 0], sizes = [1, 128], strides = [1, 1]} : vector<16x128xf32> to vector<1x128xf32>
    %16 = vector.extract_strided_slice %5 {offsets = [9, 0], sizes = [1, 128], strides = [1, 1]} : vector<16x128xf32> to vector<1x128xf32>
    %17 = vector.extract_strided_slice %5 {offsets = [10, 0], sizes = [1, 128], strides = [1, 1]} : vector<16x128xf32> to vector<1x128xf32>
    %18 = vector.extract_strided_slice %5 {offsets = [11, 0], sizes = [1, 128], strides = [1, 1]} : vector<16x128xf32> to vector<1x128xf32>
    %19 = vector.extract_strided_slice %5 {offsets = [12, 0], sizes = [1, 128], strides = [1, 1]} : vector<16x128xf32> to vector<1x128xf32>
    %20 = vector.extract_strided_slice %5 {offsets = [13, 0], sizes = [1, 128], strides = [1, 1]} : vector<16x128xf32> to vector<1x128xf32>
    %21 = vector.extract_strided_slice %5 {offsets = [14, 0], sizes = [1, 128], strides = [1, 1]} : vector<16x128xf32> to vector<1x128xf32>
    %22 = vector.extract_strided_slice %5 {offsets = [15, 0], sizes = [1, 128], strides = [1, 1]} : vector<16x128xf32> to vector<1x128xf32>
    %cst = arith.constant 0.000000e+00 : f32
    %23 = vector.broadcast %cst : f32 to vector<16x128xf32>
    %c0_7 = arith.constant 0 : index
    %c0_8 = arith.constant 0 : index
    %c0_9 = arith.constant 0 : index
    %24 = vector.load %arg6[%c0_7, %c0_8, %c0_9] : memref<4x16x128xf32, #tpu.memory_space<vmem>>, vector<1x16x128xf32>
    %25 = vector.shape_cast %24 : vector<1x16x128xf32> to vector<16x128xf32>
    %c0_10 = arith.constant 0 : index
    %c0_11 = arith.constant 0 : index
    %c0_12 = arith.constant 0 : index
    %c0_13 = arith.constant 0 : index
    %26 = vector.load %arg5[%c0_10, %c0_11, %c0_12, %c0_13] : memref<4x16x16x128xf32, #tpu.memory_space<vmem>>, vector<1x1x16x128xf32>
    %27 = vector.shape_cast %26 : vector<1x1x16x128xf32> to vector<16x128xf32>
    %28 = vector.broadcast %7 : vector<1x128xf32> to vector<16x128xf32>
    %29 = arith.mulf %27, %28 : vector<16x128xf32>
    %30 = arith.addf %25, %29 : vector<16x128xf32>
    %c0_14 = arith.constant 0 : index
    %c1 = arith.constant 1 : index
    %c0_15 = arith.constant 0 : index
    %c0_16 = arith.constant 0 : index
    %31 = vector.load %arg5[%c0_14, %c1, %c0_15, %c0_16] : memref<4x16x16x128xf32, #tpu.memory_space<vmem>>, vector<1x1x16x128xf32>
    %32 = vector.shape_cast %31 : vector<1x1x16x128xf32> to vector<16x128xf32>
    %33 = vector.broadcast %8 : vector<1x128xf32> to vector<16x128xf32>
    %34 = arith.mulf %32, %33 : vector<16x128xf32>
    %35 = arith.addf %30, %34 : vector<16x128xf32>
    %c0_17 = arith.constant 0 : index
    %c2 = arith.constant 2 : index
    %c0_18 = arith.constant 0 : index
    %c0_19 = arith.constant 0 : index
    %36 = vector.load %arg5[%c0_17, %c2, %c0_18, %c0_19] : memref<4x16x16x128xf32, #tpu.memory_space<vmem>>, vector<1x1x16x128xf32>
    %37 = vector.shape_cast %36 : vector<1x1x16x128xf32> to vector<16x128xf32>
    %38 = vector.broadcast %9 : vector<1x128xf32> to vector<16x128xf32>
    %39 = arith.mulf %37, %38 : vector<16x128xf32>
    %40 = arith.addf %35, %39 : vector<16x128xf32>
    %c0_20 = arith.constant 0 : index
    %c3 = arith.constant 3 : index
    %c0_21 = arith.constant 0 : index
    %c0_22 = arith.constant 0 : index
    %41 = vector.load %arg5[%c0_20, %c3, %c0_21, %c0_22] : memref<4x16x16x128xf32, #tpu.memory_space<vmem>>, vector<1x1x16x128xf32>
    %42 = vector.shape_cast %41 : vector<1x1x16x128xf32> to vector<16x128xf32>
    %43 = vector.broadcast %10 : vector<1x128xf32> to vector<16x128xf32>
    %44 = arith.mulf %42, %43 : vector<16x128xf32>
    %45 = arith.addf %40, %44 : vector<16x128xf32>
    %c0_23 = arith.constant 0 : index
    %c4 = arith.constant 4 : index
    %c0_24 = arith.constant 0 : index
    %c0_25 = arith.constant 0 : index
    %46 = vector.load %arg5[%c0_23, %c4, %c0_24, %c0_25] : memref<4x16x16x128xf32, #tpu.memory_space<vmem>>, vector<1x1x16x128xf32>
    %47 = vector.shape_cast %46 : vector<1x1x16x128xf32> to vector<16x128xf32>
    %48 = vector.broadcast %11 : vector<1x128xf32> to vector<16x128xf32>
    %49 = arith.mulf %47, %48 : vector<16x128xf32>
    %50 = arith.addf %45, %49 : vector<16x128xf32>
    %c0_26 = arith.constant 0 : index
    %c5 = arith.constant 5 : index
    %c0_27 = arith.constant 0 : index
    %c0_28 = arith.constant 0 : index
    %51 = vector.load %arg5[%c0_26, %c5, %c0_27, %c0_28] : memref<4x16x16x128xf32, #tpu.memory_space<vmem>>, vector<1x1x16x128xf32>
    %52 = vector.shape_cast %51 : vector<1x1x16x128xf32> to vector<16x128xf32>
    %53 = vector.broadcast %12 : vector<1x128xf32> to vector<16x128xf32>
    %54 = arith.mulf %52, %53 : vector<16x128xf32>
    %55 = arith.addf %50, %54 : vector<16x128xf32>
    %c0_29 = arith.constant 0 : index
    %c6 = arith.constant 6 : index
    %c0_30 = arith.constant 0 : index
    %c0_31 = arith.constant 0 : index
    %56 = vector.load %arg5[%c0_29, %c6, %c0_30, %c0_31] : memref<4x16x16x128xf32, #tpu.memory_space<vmem>>, vector<1x1x16x128xf32>
    %57 = vector.shape_cast %56 : vector<1x1x16x128xf32> to vector<16x128xf32>
    %58 = vector.broadcast %13 : vector<1x128xf32> to vector<16x128xf32>
    %59 = arith.mulf %57, %58 : vector<16x128xf32>
    %60 = arith.addf %55, %59 : vector<16x128xf32>
    %c0_32 = arith.constant 0 : index
    %c7 = arith.constant 7 : index
    %c0_33 = arith.constant 0 : index
    %c0_34 = arith.constant 0 : index
    %61 = vector.load %arg5[%c0_32, %c7, %c0_33, %c0_34] : memref<4x16x16x128xf32, #tpu.memory_space<vmem>>, vector<1x1x16x128xf32>
    %62 = vector.shape_cast %61 : vector<1x1x16x128xf32> to vector<16x128xf32>
    %63 = vector.broadcast %14 : vector<1x128xf32> to vector<16x128xf32>
    %64 = arith.mulf %62, %63 : vector<16x128xf32>
    %65 = arith.addf %60, %64 : vector<16x128xf32>
    %c0_35 = arith.constant 0 : index
    %c8 = arith.constant 8 : index
    %c0_36 = arith.constant 0 : index
    %c0_37 = arith.constant 0 : index
    %66 = vector.load %arg5[%c0_35, %c8, %c0_36, %c0_37] : memref<4x16x16x128xf32, #tpu.memory_space<vmem>>, vector<1x1x16x128xf32>
    %67 = vector.shape_cast %66 : vector<1x1x16x128xf32> to vector<16x128xf32>
    %68 = vector.broadcast %15 : vector<1x128xf32> to vector<16x128xf32>
    %69 = arith.mulf %67, %68 : vector<16x128xf32>
    %70 = arith.addf %65, %69 : vector<16x128xf32>
    %c0_38 = arith.constant 0 : index
    %c9 = arith.constant 9 : index
    %c0_39 = arith.constant 0 : index
    %c0_40 = arith.constant 0 : index
    %71 = vector.load %arg5[%c0_38, %c9, %c0_39, %c0_40] : memref<4x16x16x128xf32, #tpu.memory_space<vmem>>, vector<1x1x16x128xf32>
    %72 = vector.shape_cast %71 : vector<1x1x16x128xf32> to vector<16x128xf32>
    %73 = vector.broadcast %16 : vector<1x128xf32> to vector<16x128xf32>
    %74 = arith.mulf %72, %73 : vector<16x128xf32>
    %75 = arith.addf %70, %74 : vector<16x128xf32>
    %c0_41 = arith.constant 0 : index
    %c10 = arith.constant 10 : index
    %c0_42 = arith.constant 0 : index
    %c0_43 = arith.constant 0 : index
    %76 = vector.load %arg5[%c0_41, %c10, %c0_42, %c0_43] : memref<4x16x16x128xf32, #tpu.memory_space<vmem>>, vector<1x1x16x128xf32>
    %77 = vector.shape_cast %76 : vector<1x1x16x128xf32> to vector<16x128xf32>
    %78 = vector.broadcast %17 : vector<1x128xf32> to vector<16x128xf32>
    %79 = arith.mulf %77, %78 : vector<16x128xf32>
    %80 = arith.addf %75, %79 : vector<16x128xf32>
    %c0_44 = arith.constant 0 : index
    %c11 = arith.constant 11 : index
    %c0_45 = arith.constant 0 : index
    %c0_46 = arith.constant 0 : index
    %81 = vector.load %arg5[%c0_44, %c11, %c0_45, %c0_46] : memref<4x16x16x128xf32, #tpu.memory_space<vmem>>, vector<1x1x16x128xf32>
    %82 = vector.shape_cast %81 : vector<1x1x16x128xf32> to vector<16x128xf32>
    %83 = vector.broadcast %18 : vector<1x128xf32> to vector<16x128xf32>
    %84 = arith.mulf %82, %83 : vector<16x128xf32>
    %85 = arith.addf %80, %84 : vector<16x128xf32>
    %c0_47 = arith.constant 0 : index
    %c12 = arith.constant 12 : index
    %c0_48 = arith.constant 0 : index
    %c0_49 = arith.constant 0 : index
    %86 = vector.load %arg5[%c0_47, %c12, %c0_48, %c0_49] : memref<4x16x16x128xf32, #tpu.memory_space<vmem>>, vector<1x1x16x128xf32>
    %87 = vector.shape_cast %86 : vector<1x1x16x128xf32> to vector<16x128xf32>
    %88 = vector.broadcast %19 : vector<1x128xf32> to vector<16x128xf32>
    %89 = arith.mulf %87, %88 : vector<16x128xf32>
    %90 = arith.addf %85, %89 : vector<16x128xf32>
    %c0_50 = arith.constant 0 : index
    %c13 = arith.constant 13 : index
    %c0_51 = arith.constant 0 : index
    %c0_52 = arith.constant 0 : index
    %91 = vector.load %arg5[%c0_50, %c13, %c0_51, %c0_52] : memref<4x16x16x128xf32, #tpu.memory_space<vmem>>, vector<1x1x16x128xf32>
    %92 = vector.shape_cast %91 : vector<1x1x16x128xf32> to vector<16x128xf32>
    %93 = vector.broadcast %20 : vector<1x128xf32> to vector<16x128xf32>
    %94 = arith.mulf %92, %93 : vector<16x128xf32>
    %95 = arith.addf %90, %94 : vector<16x128xf32>
    %c0_53 = arith.constant 0 : index
    %c14 = arith.constant 14 : index
    %c0_54 = arith.constant 0 : index
    %c0_55 = arith.constant 0 : index
    %96 = vector.load %arg5[%c0_53, %c14, %c0_54, %c0_55] : memref<4x16x16x128xf32, #tpu.memory_space<vmem>>, vector<1x1x16x128xf32>
    %97 = vector.shape_cast %96 : vector<1x1x16x128xf32> to vector<16x128xf32>
    %98 = vector.broadcast %21 : vector<1x128xf32> to vector<16x128xf32>
    %99 = arith.mulf %97, %98 : vector<16x128xf32>
    %100 = arith.addf %95, %99 : vector<16x128xf32>
    %c0_56 = arith.constant 0 : index
    %c15 = arith.constant 15 : index
    %c0_57 = arith.constant 0 : index
    %c0_58 = arith.constant 0 : index
    %101 = vector.load %arg5[%c0_56, %c15, %c0_57, %c0_58] : memref<4x16x16x128xf32, #tpu.memory_space<vmem>>, vector<1x1x16x128xf32>
    %102 = vector.shape_cast %101 : vector<1x1x16x128xf32> to vector<16x128xf32>
    %103 = vector.broadcast %22 : vector<1x128xf32> to vector<16x128xf32>
    %104 = arith.mulf %102, %103 : vector<16x128xf32>
    %105 = arith.addf %100, %104 : vector<16x128xf32>
    %106 = math.tanh %105 : vector<16x128xf32>
    %c0_59 = arith.constant 0 : index
    %c0_60 = arith.constant 0 : index
    %c0_61 = arith.constant 0 : index
    %c0_62 = arith.constant 0 : index
    %107 = vector.load %arg4[%c0_59, %c0_60, %c0_61, %c0_62] : memref<4x16x16x128xf32, #tpu.memory_space<vmem>>, vector<1x1x16x128xf32>
    %108 = vector.shape_cast %107 : vector<1x1x16x128xf32> to vector<16x128xf32>
    %109 = arith.mulf %108, %106 : vector<16x128xf32>
    %cst_63 = arith.constant dense<0.000000e+00> : vector<128xf32>
    %110 = vector.multi_reduction <add>, %109, %cst_63 [0] : vector<16x128xf32> to vector<128xf32>
    %111 = vector.shape_cast %110 : vector<128xf32> to vector<1x128xf32>
    %112 = arith.addf %7, %111 : vector<1x128xf32>
    %c0_64 = arith.constant 0 : index
    %c1_65 = arith.constant 1 : index
    %c0_66 = arith.constant 0 : index
    %c0_67 = arith.constant 0 : index
    %113 = vector.load %arg4[%c0_64, %c1_65, %c0_66, %c0_67] : memref<4x16x16x128xf32, #tpu.memory_space<vmem>>, vector<1x1x16x128xf32>
    %114 = vector.shape_cast %113 : vector<1x1x16x128xf32> to vector<16x128xf32>
    %115 = arith.mulf %114, %106 : vector<16x128xf32>
    %cst_68 = arith.constant dense<0.000000e+00> : vector<128xf32>
    %116 = vector.multi_reduction <add>, %115, %cst_68 [0] : vector<16x128xf32> to vector<128xf32>
    %117 = vector.shape_cast %116 : vector<128xf32> to vector<1x128xf32>
    %118 = arith.addf %8, %117 : vector<1x128xf32>
    %c0_69 = arith.constant 0 : index
    %c2_70 = arith.constant 2 : index
    %c0_71 = arith.constant 0 : index
    %c0_72 = arith.constant 0 : index
    %119 = vector.load %arg4[%c0_69, %c2_70, %c0_71, %c0_72] : memref<4x16x16x128xf32, #tpu.memory_space<vmem>>, vector<1x1x16x128xf32>
    %120 = vector.shape_cast %119 : vector<1x1x16x128xf32> to vector<16x128xf32>
    %121 = arith.mulf %120, %106 : vector<16x128xf32>
    %cst_73 = arith.constant dense<0.000000e+00> : vector<128xf32>
    %122 = vector.multi_reduction <add>, %121, %cst_73 [0] : vector<16x128xf32> to vector<128xf32>
    %123 = vector.shape_cast %122 : vector<128xf32> to vector<1x128xf32>
    %124 = arith.addf %9, %123 : vector<1x128xf32>
    %c0_74 = arith.constant 0 : index
    %c3_75 = arith.constant 3 : index
    %c0_76 = arith.constant 0 : index
    %c0_77 = arith.constant 0 : index
    %125 = vector.load %arg4[%c0_74, %c3_75, %c0_76, %c0_77] : memref<4x16x16x128xf32, #tpu.memory_space<vmem>>, vector<1x1x16x128xf32>
    %126 = vector.shape_cast %125 : vector<1x1x16x128xf32> to vector<16x128xf32>
    %127 = arith.mulf %126, %106 : vector<16x128xf32>
    %cst_78 = arith.constant dense<0.000000e+00> : vector<128xf32>
    %128 = vector.multi_reduction <add>, %127, %cst_78 [0] : vector<16x128xf32> to vector<128xf32>
    %129 = vector.shape_cast %128 : vector<128xf32> to vector<1x128xf32>
    %130 = arith.addf %10, %129 : vector<1x128xf32>
    %c0_79 = arith.constant 0 : index
    %c4_80 = arith.constant 4 : index
    %c0_81 = arith.constant 0 : index
    %c0_82 = arith.constant 0 : index
    %131 = vector.load %arg4[%c0_79, %c4_80, %c0_81, %c0_82] : memref<4x16x16x128xf32, #tpu.memory_space<vmem>>, vector<1x1x16x128xf32>
    %132 = vector.shape_cast %131 : vector<1x1x16x128xf32> to vector<16x128xf32>
    %133 = arith.mulf %132, %106 : vector<16x128xf32>
    %cst_83 = arith.constant dense<0.000000e+00> : vector<128xf32>
    %134 = vector.multi_reduction <add>, %133, %cst_83 [0] : vector<16x128xf32> to vector<128xf32>
    %135 = vector.shape_cast %134 : vector<128xf32> to vector<1x128xf32>
    %136 = arith.addf %11, %135 : vector<1x128xf32>
    %c0_84 = arith.constant 0 : index
    %c5_85 = arith.constant 5 : index
    %c0_86 = arith.constant 0 : index
    %c0_87 = arith.constant 0 : index
    %137 = vector.load %arg4[%c0_84, %c5_85, %c0_86, %c0_87] : memref<4x16x16x128xf32, #tpu.memory_space<vmem>>, vector<1x1x16x128xf32>
    %138 = vector.shape_cast %137 : vector<1x1x16x128xf32> to vector<16x128xf32>
    %139 = arith.mulf %138, %106 : vector<16x128xf32>
    %cst_88 = arith.constant dense<0.000000e+00> : vector<128xf32>
    %140 = vector.multi_reduction <add>, %139, %cst_88 [0] : vector<16x128xf32> to vector<128xf32>
    %141 = vector.shape_cast %140 : vector<128xf32> to vector<1x128xf32>
    %142 = arith.addf %12, %141 : vector<1x128xf32>
    %c0_89 = arith.constant 0 : index
    %c6_90 = arith.constant 6 : index
    %c0_91 = arith.constant 0 : index
    %c0_92 = arith.constant 0 : index
    %143 = vector.load %arg4[%c0_89, %c6_90, %c0_91, %c0_92] : memref<4x16x16x128xf32, #tpu.memory_space<vmem>>, vector<1x1x16x128xf32>
    %144 = vector.shape_cast %143 : vector<1x1x16x128xf32> to vector<16x128xf32>
    %145 = arith.mulf %144, %106 : vector<16x128xf32>
    %cst_93 = arith.constant dense<0.000000e+00> : vector<128xf32>
    %146 = vector.multi_reduction <add>, %145, %cst_93 [0] : vector<16x128xf32> to vector<128xf32>
    %147 = vector.shape_cast %146 : vector<128xf32> to vector<1x128xf32>
    %148 = arith.addf %13, %147 : vector<1x128xf32>
    %c0_94 = arith.constant 0 : index
    %c7_95 = arith.constant 7 : index
    %c0_96 = arith.constant 0 : index
    %c0_97 = arith.constant 0 : index
    %149 = vector.load %arg4[%c0_94, %c7_95, %c0_96, %c0_97] : memref<4x16x16x128xf32, #tpu.memory_space<vmem>>, vector<1x1x16x128xf32>
    %150 = vector.shape_cast %149 : vector<1x1x16x128xf32> to vector<16x128xf32>
    %151 = arith.mulf %150, %106 : vector<16x128xf32>
    %cst_98 = arith.constant dense<0.000000e+00> : vector<128xf32>
    %152 = vector.multi_reduction <add>, %151, %cst_98 [0] : vector<16x128xf32> to vector<128xf32>
    %153 = vector.shape_cast %152 : vector<128xf32> to vector<1x128xf32>
    %154 = arith.addf %14, %153 : vector<1x128xf32>
    %c0_99 = arith.constant 0 : index
    %c8_100 = arith.constant 8 : index
    %c0_101 = arith.constant 0 : index
    %c0_102 = arith.constant 0 : index
    %155 = vector.load %arg4[%c0_99, %c8_100, %c0_101, %c0_102] : memref<4x16x16x128xf32, #tpu.memory_space<vmem>>, vector<1x1x16x128xf32>
    %156 = vector.shape_cast %155 : vector<1x1x16x128xf32> to vector<16x128xf32>
    %157 = arith.mulf %156, %106 : vector<16x128xf32>
    %cst_103 = arith.constant dense<0.000000e+00> : vector<128xf32>
    %158 = vector.multi_reduction <add>, %157, %cst_103 [0] : vector<16x128xf32> to vector<128xf32>
    %159 = vector.shape_cast %158 : vector<128xf32> to vector<1x128xf32>
    %160 = arith.addf %15, %159 : vector<1x128xf32>
    %c0_104 = arith.constant 0 : index
    %c9_105 = arith.constant 9 : index
    %c0_106 = arith.constant 0 : index
    %c0_107 = arith.constant 0 : index
    %161 = vector.load %arg4[%c0_104, %c9_105, %c0_106, %c0_107] : memref<4x16x16x128xf32, #tpu.memory_space<vmem>>, vector<1x1x16x128xf32>
    %162 = vector.shape_cast %161 : vector<1x1x16x128xf32> to vector<16x128xf32>
    %163 = arith.mulf %162, %106 : vector<16x128xf32>
    %cst_108 = arith.constant dense<0.000000e+00> : vector<128xf32>
    %164 = vector.multi_reduction <add>, %163, %cst_108 [0] : vector<16x128xf32> to vector<128xf32>
    %165 = vector.shape_cast %164 : vector<128xf32> to vector<1x128xf32>
    %166 = arith.addf %16, %165 : vector<1x128xf32>
    %c0_109 = arith.constant 0 : index
    %c10_110 = arith.constant 10 : index
    %c0_111 = arith.constant 0 : index
    %c0_112 = arith.constant 0 : index
    %167 = vector.load %arg4[%c0_109, %c10_110, %c0_111, %c0_112] : memref<4x16x16x128xf32, #tpu.memory_space<vmem>>, vector<1x1x16x128xf32>
    %168 = vector.shape_cast %167 : vector<1x1x16x128xf32> to vector<16x128xf32>
    %169 = arith.mulf %168, %106 : vector<16x128xf32>
    %cst_113 = arith.constant dense<0.000000e+00> : vector<128xf32>
    %170 = vector.multi_reduction <add>, %169, %cst_113 [0] : vector<16x128xf32> to vector<128xf32>
    %171 = vector.shape_cast %170 : vector<128xf32> to vector<1x128xf32>
    %172 = arith.addf %17, %171 : vector<1x128xf32>
    %c0_114 = arith.constant 0 : index
    %c11_115 = arith.constant 11 : index
    %c0_116 = arith.constant 0 : index
    %c0_117 = arith.constant 0 : index
    %173 = vector.load %arg4[%c0_114, %c11_115, %c0_116, %c0_117] : memref<4x16x16x128xf32, #tpu.memory_space<vmem>>, vector<1x1x16x128xf32>
    %174 = vector.shape_cast %173 : vector<1x1x16x128xf32> to vector<16x128xf32>
    %175 = arith.mulf %174, %106 : vector<16x128xf32>
    %cst_118 = arith.constant dense<0.000000e+00> : vector<128xf32>
    %176 = vector.multi_reduction <add>, %175, %cst_118 [0] : vector<16x128xf32> to vector<128xf32>
    %177 = vector.shape_cast %176 : vector<128xf32> to vector<1x128xf32>
    %178 = arith.addf %18, %177 : vector<1x128xf32>
    %c0_119 = arith.constant 0 : index
    %c12_120 = arith.constant 12 : index
    %c0_121 = arith.constant 0 : index
    %c0_122 = arith.constant 0 : index
    %179 = vector.load %arg4[%c0_119, %c12_120, %c0_121, %c0_122] : memref<4x16x16x128xf32, #tpu.memory_space<vmem>>, vector<1x1x16x128xf32>
    %180 = vector.shape_cast %179 : vector<1x1x16x128xf32> to vector<16x128xf32>
    %181 = arith.mulf %180, %106 : vector<16x128xf32>
    %cst_123 = arith.constant dense<0.000000e+00> : vector<128xf32>
    %182 = vector.multi_reduction <add>, %181, %cst_123 [0] : vector<16x128xf32> to vector<128xf32>
    %183 = vector.shape_cast %182 : vector<128xf32> to vector<1x128xf32>
    %184 = arith.addf %19, %183 : vector<1x128xf32>
    %c0_124 = arith.constant 0 : index
    %c13_125 = arith.constant 13 : index
    %c0_126 = arith.constant 0 : index
    %c0_127 = arith.constant 0 : index
    %185 = vector.load %arg4[%c0_124, %c13_125, %c0_126, %c0_127] : memref<4x16x16x128xf32, #tpu.memory_space<vmem>>, vector<1x1x16x128xf32>
    %186 = vector.shape_cast %185 : vector<1x1x16x128xf32> to vector<16x128xf32>
    %187 = arith.mulf %186, %106 : vector<16x128xf32>
    %cst_128 = arith.constant dense<0.000000e+00> : vector<128xf32>
    %188 = vector.multi_reduction <add>, %187, %cst_128 [0] : vector<16x128xf32> to vector<128xf32>
    %189 = vector.shape_cast %188 : vector<128xf32> to vector<1x128xf32>
    %190 = arith.addf %20, %189 : vector<1x128xf32>
    %c0_129 = arith.constant 0 : index
    %c14_130 = arith.constant 14 : index
    %c0_131 = arith.constant 0 : index
    %c0_132 = arith.constant 0 : index
    %191 = vector.load %arg4[%c0_129, %c14_130, %c0_131, %c0_132] : memref<4x16x16x128xf32, #tpu.memory_space<vmem>>, vector<1x1x16x128xf32>
    %192 = vector.shape_cast %191 : vector<1x1x16x128xf32> to vector<16x128xf32>
    %193 = arith.mulf %192, %106 : vector<16x128xf32>
    %cst_133 = arith.constant dense<0.000000e+00> : vector<128xf32>
    %194 = vector.multi_reduction <add>, %193, %cst_133 [0] : vector<16x128xf32> to vector<128xf32>
    %195 = vector.shape_cast %194 : vector<128xf32> to vector<1x128xf32>
    %196 = arith.addf %21, %195 : vector<1x128xf32>
    %c0_134 = arith.constant 0 : index
    %c15_135 = arith.constant 15 : index
    %c0_136 = arith.constant 0 : index
    %c0_137 = arith.constant 0 : index
    %197 = vector.load %arg4[%c0_134, %c15_135, %c0_136, %c0_137] : memref<4x16x16x128xf32, #tpu.memory_space<vmem>>, vector<1x1x16x128xf32>
    %198 = vector.shape_cast %197 : vector<1x1x16x128xf32> to vector<16x128xf32>
    %199 = arith.mulf %198, %106 : vector<16x128xf32>
    %cst_138 = arith.constant dense<0.000000e+00> : vector<128xf32>
    %200 = vector.multi_reduction <add>, %199, %cst_138 [0] : vector<16x128xf32> to vector<128xf32>
    %201 = vector.shape_cast %200 : vector<128xf32> to vector<1x128xf32>
    %202 = arith.addf %22, %201 : vector<1x128xf32>
    %c0_139 = arith.constant 0 : index
    %c0_140 = arith.constant 0 : index
    %c0_141 = arith.constant 0 : index
    %203 = vector.load %arg7[%c0_139, %c0_140, %c0_141] : memref<4x16x128xf32, #tpu.memory_space<vmem>>, vector<1x16x128xf32>
    %204 = vector.shape_cast %203 : vector<1x16x128xf32> to vector<16x128xf32>
    %205 = arith.mulf %106, %106 : vector<16x128xf32>
    %cst_142 = arith.constant 1.000000e+00 : f32
    %206 = vector.broadcast %cst_142 : f32 to vector<16x128xf32>
    %207 = arith.subf %206, %205 : vector<16x128xf32>
    %208 = arith.mulf %204, %207 : vector<16x128xf32>
    %cst_143 = arith.constant 1.000000e+00 : f32
    %209 = vector.broadcast %cst_143 : f32 to vector<16x128xf32>
    %210 = arith.addf %208, %209 : vector<16x128xf32>
    %211 = math.absf %210 : vector<16x128xf32>
    %212 = math.log %211 : vector<16x128xf32>
    %213 = arith.addf %23, %212 : vector<16x128xf32>
    %c1_144 = arith.constant 1 : index
    %c0_145 = arith.constant 0 : index
    %c0_146 = arith.constant 0 : index
    %214 = vector.load %arg6[%c1_144, %c0_145, %c0_146] : memref<4x16x128xf32, #tpu.memory_space<vmem>>, vector<1x16x128xf32>
    %215 = vector.shape_cast %214 : vector<1x16x128xf32> to vector<16x128xf32>
    %c1_147 = arith.constant 1 : index
    %c0_148 = arith.constant 0 : index
    %c0_149 = arith.constant 0 : index
    %c0_150 = arith.constant 0 : index
    %216 = vector.load %arg5[%c1_147, %c0_148, %c0_149, %c0_150] : memref<4x16x16x128xf32, #tpu.memory_space<vmem>>, vector<1x1x16x128xf32>
    %217 = vector.shape_cast %216 : vector<1x1x16x128xf32> to vector<16x128xf32>
    %218 = vector.broadcast %202 : vector<1x128xf32> to vector<16x128xf32>
    %219 = arith.mulf %217, %218 : vector<16x128xf32>
    %220 = arith.addf %215, %219 : vector<16x128xf32>
    %c1_151 = arith.constant 1 : index
    %c1_152 = arith.constant 1 : index
    %c0_153 = arith.constant 0 : index
    %c0_154 = arith.constant 0 : index
    %221 = vector.load %arg5[%c1_151, %c1_152, %c0_153, %c0_154] : memref<4x16x16x128xf32, #tpu.memory_space<vmem>>, vector<1x1x16x128xf32>
    %222 = vector.shape_cast %221 : vector<1x1x16x128xf32> to vector<16x128xf32>
    %223 = vector.broadcast %196 : vector<1x128xf32> to vector<16x128xf32>
    %224 = arith.mulf %222, %223 : vector<16x128xf32>
    %225 = arith.addf %220, %224 : vector<16x128xf32>
    %c1_155 = arith.constant 1 : index
    %c2_156 = arith.constant 2 : index
    %c0_157 = arith.constant 0 : index
    %c0_158 = arith.constant 0 : index
    %226 = vector.load %arg5[%c1_155, %c2_156, %c0_157, %c0_158] : memref<4x16x16x128xf32, #tpu.memory_space<vmem>>, vector<1x1x16x128xf32>
    %227 = vector.shape_cast %226 : vector<1x1x16x128xf32> to vector<16x128xf32>
    %228 = vector.broadcast %190 : vector<1x128xf32> to vector<16x128xf32>
    %229 = arith.mulf %227, %228 : vector<16x128xf32>
    %230 = arith.addf %225, %229 : vector<16x128xf32>
    %c1_159 = arith.constant 1 : index
    %c3_160 = arith.constant 3 : index
    %c0_161 = arith.constant 0 : index
    %c0_162 = arith.constant 0 : index
    %231 = vector.load %arg5[%c1_159, %c3_160, %c0_161, %c0_162] : memref<4x16x16x128xf32, #tpu.memory_space<vmem>>, vector<1x1x16x128xf32>
    %232 = vector.shape_cast %231 : vector<1x1x16x128xf32> to vector<16x128xf32>
    %233 = vector.broadcast %184 : vector<1x128xf32> to vector<16x128xf32>
    %234 = arith.mulf %232, %233 : vector<16x128xf32>
    %235 = arith.addf %230, %234 : vector<16x128xf32>
    %c1_163 = arith.constant 1 : index
    %c4_164 = arith.constant 4 : index
    %c0_165 = arith.constant 0 : index
    %c0_166 = arith.constant 0 : index
    %236 = vector.load %arg5[%c1_163, %c4_164, %c0_165, %c0_166] : memref<4x16x16x128xf32, #tpu.memory_space<vmem>>, vector<1x1x16x128xf32>
    %237 = vector.shape_cast %236 : vector<1x1x16x128xf32> to vector<16x128xf32>
    %238 = vector.broadcast %178 : vector<1x128xf32> to vector<16x128xf32>
    %239 = arith.mulf %237, %238 : vector<16x128xf32>
    %240 = arith.addf %235, %239 : vector<16x128xf32>
    %c1_167 = arith.constant 1 : index
    %c5_168 = arith.constant 5 : index
    %c0_169 = arith.constant 0 : index
    %c0_170 = arith.constant 0 : index
    %241 = vector.load %arg5[%c1_167, %c5_168, %c0_169, %c0_170] : memref<4x16x16x128xf32, #tpu.memory_space<vmem>>, vector<1x1x16x128xf32>
    %242 = vector.shape_cast %241 : vector<1x1x16x128xf32> to vector<16x128xf32>
    %243 = vector.broadcast %172 : vector<1x128xf32> to vector<16x128xf32>
    %244 = arith.mulf %242, %243 : vector<16x128xf32>
    %245 = arith.addf %240, %244 : vector<16x128xf32>
    %c1_171 = arith.constant 1 : index
    %c6_172 = arith.constant 6 : index
    %c0_173 = arith.constant 0 : index
    %c0_174 = arith.constant 0 : index
    %246 = vector.load %arg5[%c1_171, %c6_172, %c0_173, %c0_174] : memref<4x16x16x128xf32, #tpu.memory_space<vmem>>, vector<1x1x16x128xf32>
    %247 = vector.shape_cast %246 : vector<1x1x16x128xf32> to vector<16x128xf32>
    %248 = vector.broadcast %166 : vector<1x128xf32> to vector<16x128xf32>
    %249 = arith.mulf %247, %248 : vector<16x128xf32>
    %250 = arith.addf %245, %249 : vector<16x128xf32>
    %c1_175 = arith.constant 1 : index
    %c7_176 = arith.constant 7 : index
    %c0_177 = arith.constant 0 : index
    %c0_178 = arith.constant 0 : index
    %251 = vector.load %arg5[%c1_175, %c7_176, %c0_177, %c0_178] : memref<4x16x16x128xf32, #tpu.memory_space<vmem>>, vector<1x1x16x128xf32>
    %252 = vector.shape_cast %251 : vector<1x1x16x128xf32> to vector<16x128xf32>
    %253 = vector.broadcast %160 : vector<1x128xf32> to vector<16x128xf32>
    %254 = arith.mulf %252, %253 : vector<16x128xf32>
    %255 = arith.addf %250, %254 : vector<16x128xf32>
    %c1_179 = arith.constant 1 : index
    %c8_180 = arith.constant 8 : index
    %c0_181 = arith.constant 0 : index
    %c0_182 = arith.constant 0 : index
    %256 = vector.load %arg5[%c1_179, %c8_180, %c0_181, %c0_182] : memref<4x16x16x128xf32, #tpu.memory_space<vmem>>, vector<1x1x16x128xf32>
    %257 = vector.shape_cast %256 : vector<1x1x16x128xf32> to vector<16x128xf32>
    %258 = vector.broadcast %154 : vector<1x128xf32> to vector<16x128xf32>
    %259 = arith.mulf %257, %258 : vector<16x128xf32>
    %260 = arith.addf %255, %259 : vector<16x128xf32>
    %c1_183 = arith.constant 1 : index
    %c9_184 = arith.constant 9 : index
    %c0_185 = arith.constant 0 : index
    %c0_186 = arith.constant 0 : index
    %261 = vector.load %arg5[%c1_183, %c9_184, %c0_185, %c0_186] : memref<4x16x16x128xf32, #tpu.memory_space<vmem>>, vector<1x1x16x128xf32>
    %262 = vector.shape_cast %261 : vector<1x1x16x128xf32> to vector<16x128xf32>
    %263 = vector.broadcast %148 : vector<1x128xf32> to vector<16x128xf32>
    %264 = arith.mulf %262, %263 : vector<16x128xf32>
    %265 = arith.addf %260, %264 : vector<16x128xf32>
    %c1_187 = arith.constant 1 : index
    %c10_188 = arith.constant 10 : index
    %c0_189 = arith.constant 0 : index
    %c0_190 = arith.constant 0 : index
    %266 = vector.load %arg5[%c1_187, %c10_188, %c0_189, %c0_190] : memref<4x16x16x128xf32, #tpu.memory_space<vmem>>, vector<1x1x16x128xf32>
    %267 = vector.shape_cast %266 : vector<1x1x16x128xf32> to vector<16x128xf32>
    %268 = vector.broadcast %142 : vector<1x128xf32> to vector<16x128xf32>
    %269 = arith.mulf %267, %268 : vector<16x128xf32>
    %270 = arith.addf %265, %269 : vector<16x128xf32>
    %c1_191 = arith.constant 1 : index
    %c11_192 = arith.constant 11 : index
    %c0_193 = arith.constant 0 : index
    %c0_194 = arith.constant 0 : index
    %271 = vector.load %arg5[%c1_191, %c11_192, %c0_193, %c0_194] : memref<4x16x16x128xf32, #tpu.memory_space<vmem>>, vector<1x1x16x128xf32>
    %272 = vector.shape_cast %271 : vector<1x1x16x128xf32> to vector<16x128xf32>
    %273 = vector.broadcast %136 : vector<1x128xf32> to vector<16x128xf32>
    %274 = arith.mulf %272, %273 : vector<16x128xf32>
    %275 = arith.addf %270, %274 : vector<16x128xf32>
    %c1_195 = arith.constant 1 : index
    %c12_196 = arith.constant 12 : index
    %c0_197 = arith.constant 0 : index
    %c0_198 = arith.constant 0 : index
    %276 = vector.load %arg5[%c1_195, %c12_196, %c0_197, %c0_198] : memref<4x16x16x128xf32, #tpu.memory_space<vmem>>, vector<1x1x16x128xf32>
    %277 = vector.shape_cast %276 : vector<1x1x16x128xf32> to vector<16x128xf32>
    %278 = vector.broadcast %130 : vector<1x128xf32> to vector<16x128xf32>
    %279 = arith.mulf %277, %278 : vector<16x128xf32>
    %280 = arith.addf %275, %279 : vector<16x128xf32>
    %c1_199 = arith.constant 1 : index
    %c13_200 = arith.constant 13 : index
    %c0_201 = arith.constant 0 : index
    %c0_202 = arith.constant 0 : index
    %281 = vector.load %arg5[%c1_199, %c13_200, %c0_201, %c0_202] : memref<4x16x16x128xf32, #tpu.memory_space<vmem>>, vector<1x1x16x128xf32>
    %282 = vector.shape_cast %281 : vector<1x1x16x128xf32> to vector<16x128xf32>
    %283 = vector.broadcast %124 : vector<1x128xf32> to vector<16x128xf32>
    %284 = arith.mulf %282, %283 : vector<16x128xf32>
    %285 = arith.addf %280, %284 : vector<16x128xf32>
    %c1_203 = arith.constant 1 : index
    %c14_204 = arith.constant 14 : index
    %c0_205 = arith.constant 0 : index
    %c0_206 = arith.constant 0 : index
    %286 = vector.load %arg5[%c1_203, %c14_204, %c0_205, %c0_206] : memref<4x16x16x128xf32, #tpu.memory_space<vmem>>, vector<1x1x16x128xf32>
    %287 = vector.shape_cast %286 : vector<1x1x16x128xf32> to vector<16x128xf32>
    %288 = vector.broadcast %118 : vector<1x128xf32> to vector<16x128xf32>
    %289 = arith.mulf %287, %288 : vector<16x128xf32>
    %290 = arith.addf %285, %289 : vector<16x128xf32>
    %c1_207 = arith.constant 1 : index
    %c15_208 = arith.constant 15 : index
    %c0_209 = arith.constant 0 : index
    %c0_210 = arith.constant 0 : index
    %291 = vector.load %arg5[%c1_207, %c15_208, %c0_209, %c0_210] : memref<4x16x16x128xf32, #tpu.memory_space<vmem>>, vector<1x1x16x128xf32>
    %292 = vector.shape_cast %291 : vector<1x1x16x128xf32> to vector<16x128xf32>
    %293 = vector.broadcast %112 : vector<1x128xf32> to vector<16x128xf32>
    %294 = arith.mulf %292, %293 : vector<16x128xf32>
    %295 = arith.addf %290, %294 : vector<16x128xf32>
    %296 = math.tanh %295 : vector<16x128xf32>
    %c1_211 = arith.constant 1 : index
    %c0_212 = arith.constant 0 : index
    %c0_213 = arith.constant 0 : index
    %c0_214 = arith.constant 0 : index
    %297 = vector.load %arg4[%c1_211, %c0_212, %c0_213, %c0_214] : memref<4x16x16x128xf32, #tpu.memory_space<vmem>>, vector<1x1x16x128xf32>
    %298 = vector.shape_cast %297 : vector<1x1x16x128xf32> to vector<16x128xf32>
    %299 = arith.mulf %298, %296 : vector<16x128xf32>
    %cst_215 = arith.constant dense<0.000000e+00> : vector<128xf32>
    %300 = vector.multi_reduction <add>, %299, %cst_215 [0] : vector<16x128xf32> to vector<128xf32>
    %301 = vector.shape_cast %300 : vector<128xf32> to vector<1x128xf32>
    %302 = arith.addf %202, %301 : vector<1x128xf32>
    %c1_216 = arith.constant 1 : index
    %c1_217 = arith.constant 1 : index
    %c0_218 = arith.constant 0 : index
    %c0_219 = arith.constant 0 : index
    %303 = vector.load %arg4[%c1_216, %c1_217, %c0_218, %c0_219] : memref<4x16x16x128xf32, #tpu.memory_space<vmem>>, vector<1x1x16x128xf32>
    %304 = vector.shape_cast %303 : vector<1x1x16x128xf32> to vector<16x128xf32>
    %305 = arith.mulf %304, %296 : vector<16x128xf32>
    %cst_220 = arith.constant dense<0.000000e+00> : vector<128xf32>
    %306 = vector.multi_reduction <add>, %305, %cst_220 [0] : vector<16x128xf32> to vector<128xf32>
    %307 = vector.shape_cast %306 : vector<128xf32> to vector<1x128xf32>
    %308 = arith.addf %196, %307 : vector<1x128xf32>
    %c1_221 = arith.constant 1 : index
    %c2_222 = arith.constant 2 : index
    %c0_223 = arith.constant 0 : index
    %c0_224 = arith.constant 0 : index
    %309 = vector.load %arg4[%c1_221, %c2_222, %c0_223, %c0_224] : memref<4x16x16x128xf32, #tpu.memory_space<vmem>>, vector<1x1x16x128xf32>
    %310 = vector.shape_cast %309 : vector<1x1x16x128xf32> to vector<16x128xf32>
    %311 = arith.mulf %310, %296 : vector<16x128xf32>
    %cst_225 = arith.constant dense<0.000000e+00> : vector<128xf32>
    %312 = vector.multi_reduction <add>, %311, %cst_225 [0] : vector<16x128xf32> to vector<128xf32>
    %313 = vector.shape_cast %312 : vector<128xf32> to vector<1x128xf32>
    %314 = arith.addf %190, %313 : vector<1x128xf32>
    %c1_226 = arith.constant 1 : index
    %c3_227 = arith.constant 3 : index
    %c0_228 = arith.constant 0 : index
    %c0_229 = arith.constant 0 : index
    %315 = vector.load %arg4[%c1_226, %c3_227, %c0_228, %c0_229] : memref<4x16x16x128xf32, #tpu.memory_space<vmem>>, vector<1x1x16x128xf32>
    %316 = vector.shape_cast %315 : vector<1x1x16x128xf32> to vector<16x128xf32>
    %317 = arith.mulf %316, %296 : vector<16x128xf32>
    %cst_230 = arith.constant dense<0.000000e+00> : vector<128xf32>
    %318 = vector.multi_reduction <add>, %317, %cst_230 [0] : vector<16x128xf32> to vector<128xf32>
    %319 = vector.shape_cast %318 : vector<128xf32> to vector<1x128xf32>
    %320 = arith.addf %184, %319 : vector<1x128xf32>
    %c1_231 = arith.constant 1 : index
    %c4_232 = arith.constant 4 : index
    %c0_233 = arith.constant 0 : index
    %c0_234 = arith.constant 0 : index
    %321 = vector.load %arg4[%c1_231, %c4_232, %c0_233, %c0_234] : memref<4x16x16x128xf32, #tpu.memory_space<vmem>>, vector<1x1x16x128xf32>
    %322 = vector.shape_cast %321 : vector<1x1x16x128xf32> to vector<16x128xf32>
    %323 = arith.mulf %322, %296 : vector<16x128xf32>
    %cst_235 = arith.constant dense<0.000000e+00> : vector<128xf32>
    %324 = vector.multi_reduction <add>, %323, %cst_235 [0] : vector<16x128xf32> to vector<128xf32>
    %325 = vector.shape_cast %324 : vector<128xf32> to vector<1x128xf32>
    %326 = arith.addf %178, %325 : vector<1x128xf32>
    %c1_236 = arith.constant 1 : index
    %c5_237 = arith.constant 5 : index
    %c0_238 = arith.constant 0 : index
    %c0_239 = arith.constant 0 : index
    %327 = vector.load %arg4[%c1_236, %c5_237, %c0_238, %c0_239] : memref<4x16x16x128xf32, #tpu.memory_space<vmem>>, vector<1x1x16x128xf32>
    %328 = vector.shape_cast %327 : vector<1x1x16x128xf32> to vector<16x128xf32>
    %329 = arith.mulf %328, %296 : vector<16x128xf32>
    %cst_240 = arith.constant dense<0.000000e+00> : vector<128xf32>
    %330 = vector.multi_reduction <add>, %329, %cst_240 [0] : vector<16x128xf32> to vector<128xf32>
    %331 = vector.shape_cast %330 : vector<128xf32> to vector<1x128xf32>
    %332 = arith.addf %172, %331 : vector<1x128xf32>
    %c1_241 = arith.constant 1 : index
    %c6_242 = arith.constant 6 : index
    %c0_243 = arith.constant 0 : index
    %c0_244 = arith.constant 0 : index
    %333 = vector.load %arg4[%c1_241, %c6_242, %c0_243, %c0_244] : memref<4x16x16x128xf32, #tpu.memory_space<vmem>>, vector<1x1x16x128xf32>
    %334 = vector.shape_cast %333 : vector<1x1x16x128xf32> to vector<16x128xf32>
    %335 = arith.mulf %334, %296 : vector<16x128xf32>
    %cst_245 = arith.constant dense<0.000000e+00> : vector<128xf32>
    %336 = vector.multi_reduction <add>, %335, %cst_245 [0] : vector<16x128xf32> to vector<128xf32>
    %337 = vector.shape_cast %336 : vector<128xf32> to vector<1x128xf32>
    %338 = arith.addf %166, %337 : vector<1x128xf32>
    %c1_246 = arith.constant 1 : index
    %c7_247 = arith.constant 7 : index
    %c0_248 = arith.constant 0 : index
    %c0_249 = arith.constant 0 : index
    %339 = vector.load %arg4[%c1_246, %c7_247, %c0_248, %c0_249] : memref<4x16x16x128xf32, #tpu.memory_space<vmem>>, vector<1x1x16x128xf32>
    %340 = vector.shape_cast %339 : vector<1x1x16x128xf32> to vector<16x128xf32>
    %341 = arith.mulf %340, %296 : vector<16x128xf32>
    %cst_250 = arith.constant dense<0.000000e+00> : vector<128xf32>
    %342 = vector.multi_reduction <add>, %341, %cst_250 [0] : vector<16x128xf32> to vector<128xf32>
    %343 = vector.shape_cast %342 : vector<128xf32> to vector<1x128xf32>
    %344 = arith.addf %160, %343 : vector<1x128xf32>
    %c1_251 = arith.constant 1 : index
    %c8_252 = arith.constant 8 : index
    %c0_253 = arith.constant 0 : index
    %c0_254 = arith.constant 0 : index
    %345 = vector.load %arg4[%c1_251, %c8_252, %c0_253, %c0_254] : memref<4x16x16x128xf32, #tpu.memory_space<vmem>>, vector<1x1x16x128xf32>
    %346 = vector.shape_cast %345 : vector<1x1x16x128xf32> to vector<16x128xf32>
    %347 = arith.mulf %346, %296 : vector<16x128xf32>
    %cst_255 = arith.constant dense<0.000000e+00> : vector<128xf32>
    %348 = vector.multi_reduction <add>, %347, %cst_255 [0] : vector<16x128xf32> to vector<128xf32>
    %349 = vector.shape_cast %348 : vector<128xf32> to vector<1x128xf32>
    %350 = arith.addf %154, %349 : vector<1x128xf32>
    %c1_256 = arith.constant 1 : index
    %c9_257 = arith.constant 9 : index
    %c0_258 = arith.constant 0 : index
    %c0_259 = arith.constant 0 : index
    %351 = vector.load %arg4[%c1_256, %c9_257, %c0_258, %c0_259] : memref<4x16x16x128xf32, #tpu.memory_space<vmem>>, vector<1x1x16x128xf32>
    %352 = vector.shape_cast %351 : vector<1x1x16x128xf32> to vector<16x128xf32>
    %353 = arith.mulf %352, %296 : vector<16x128xf32>
    %cst_260 = arith.constant dense<0.000000e+00> : vector<128xf32>
    %354 = vector.multi_reduction <add>, %353, %cst_260 [0] : vector<16x128xf32> to vector<128xf32>
    %355 = vector.shape_cast %354 : vector<128xf32> to vector<1x128xf32>
    %356 = arith.addf %148, %355 : vector<1x128xf32>
    %c1_261 = arith.constant 1 : index
    %c10_262 = arith.constant 10 : index
    %c0_263 = arith.constant 0 : index
    %c0_264 = arith.constant 0 : index
    %357 = vector.load %arg4[%c1_261, %c10_262, %c0_263, %c0_264] : memref<4x16x16x128xf32, #tpu.memory_space<vmem>>, vector<1x1x16x128xf32>
    %358 = vector.shape_cast %357 : vector<1x1x16x128xf32> to vector<16x128xf32>
    %359 = arith.mulf %358, %296 : vector<16x128xf32>
    %cst_265 = arith.constant dense<0.000000e+00> : vector<128xf32>
    %360 = vector.multi_reduction <add>, %359, %cst_265 [0] : vector<16x128xf32> to vector<128xf32>
    %361 = vector.shape_cast %360 : vector<128xf32> to vector<1x128xf32>
    %362 = arith.addf %142, %361 : vector<1x128xf32>
    %c1_266 = arith.constant 1 : index
    %c11_267 = arith.constant 11 : index
    %c0_268 = arith.constant 0 : index
    %c0_269 = arith.constant 0 : index
    %363 = vector.load %arg4[%c1_266, %c11_267, %c0_268, %c0_269] : memref<4x16x16x128xf32, #tpu.memory_space<vmem>>, vector<1x1x16x128xf32>
    %364 = vector.shape_cast %363 : vector<1x1x16x128xf32> to vector<16x128xf32>
    %365 = arith.mulf %364, %296 : vector<16x128xf32>
    %cst_270 = arith.constant dense<0.000000e+00> : vector<128xf32>
    %366 = vector.multi_reduction <add>, %365, %cst_270 [0] : vector<16x128xf32> to vector<128xf32>
    %367 = vector.shape_cast %366 : vector<128xf32> to vector<1x128xf32>
    %368 = arith.addf %136, %367 : vector<1x128xf32>
    %c1_271 = arith.constant 1 : index
    %c12_272 = arith.constant 12 : index
    %c0_273 = arith.constant 0 : index
    %c0_274 = arith.constant 0 : index
    %369 = vector.load %arg4[%c1_271, %c12_272, %c0_273, %c0_274] : memref<4x16x16x128xf32, #tpu.memory_space<vmem>>, vector<1x1x16x128xf32>
    %370 = vector.shape_cast %369 : vector<1x1x16x128xf32> to vector<16x128xf32>
    %371 = arith.mulf %370, %296 : vector<16x128xf32>
    %cst_275 = arith.constant dense<0.000000e+00> : vector<128xf32>
    %372 = vector.multi_reduction <add>, %371, %cst_275 [0] : vector<16x128xf32> to vector<128xf32>
    %373 = vector.shape_cast %372 : vector<128xf32> to vector<1x128xf32>
    %374 = arith.addf %130, %373 : vector<1x128xf32>
    %c1_276 = arith.constant 1 : index
    %c13_277 = arith.constant 13 : index
    %c0_278 = arith.constant 0 : index
    %c0_279 = arith.constant 0 : index
    %375 = vector.load %arg4[%c1_276, %c13_277, %c0_278, %c0_279] : memref<4x16x16x128xf32, #tpu.memory_space<vmem>>, vector<1x1x16x128xf32>
    %376 = vector.shape_cast %375 : vector<1x1x16x128xf32> to vector<16x128xf32>
    %377 = arith.mulf %376, %296 : vector<16x128xf32>
    %cst_280 = arith.constant dense<0.000000e+00> : vector<128xf32>
    %378 = vector.multi_reduction <add>, %377, %cst_280 [0] : vector<16x128xf32> to vector<128xf32>
    %379 = vector.shape_cast %378 : vector<128xf32> to vector<1x128xf32>
    %380 = arith.addf %124, %379 : vector<1x128xf32>
    %c1_281 = arith.constant 1 : index
    %c14_282 = arith.constant 14 : index
    %c0_283 = arith.constant 0 : index
    %c0_284 = arith.constant 0 : index
    %381 = vector.load %arg4[%c1_281, %c14_282, %c0_283, %c0_284] : memref<4x16x16x128xf32, #tpu.memory_space<vmem>>, vector<1x1x16x128xf32>
    %382 = vector.shape_cast %381 : vector<1x1x16x128xf32> to vector<16x128xf32>
    %383 = arith.mulf %382, %296 : vector<16x128xf32>
    %cst_285 = arith.constant dense<0.000000e+00> : vector<128xf32>
    %384 = vector.multi_reduction <add>, %383, %cst_285 [0] : vector<16x128xf32> to vector<128xf32>
    %385 = vector.shape_cast %384 : vector<128xf32> to vector<1x128xf32>
    %386 = arith.addf %118, %385 : vector<1x128xf32>
    %c1_286 = arith.constant 1 : index
    %c15_287 = arith.constant 15 : index
    %c0_288 = arith.constant 0 : index
    %c0_289 = arith.constant 0 : index
    %387 = vector.load %arg4[%c1_286, %c15_287, %c0_288, %c0_289] : memref<4x16x16x128xf32, #tpu.memory_space<vmem>>, vector<1x1x16x128xf32>
    %388 = vector.shape_cast %387 : vector<1x1x16x128xf32> to vector<16x128xf32>
    %389 = arith.mulf %388, %296 : vector<16x128xf32>
    %cst_290 = arith.constant dense<0.000000e+00> : vector<128xf32>
    %390 = vector.multi_reduction <add>, %389, %cst_290 [0] : vector<16x128xf32> to vector<128xf32>
    %391 = vector.shape_cast %390 : vector<128xf32> to vector<1x128xf32>
    %392 = arith.addf %112, %391 : vector<1x128xf32>
    %c1_291 = arith.constant 1 : index
    %c0_292 = arith.constant 0 : index
    %c0_293 = arith.constant 0 : index
    %393 = vector.load %arg7[%c1_291, %c0_292, %c0_293] : memref<4x16x128xf32, #tpu.memory_space<vmem>>, vector<1x16x128xf32>
    %394 = vector.shape_cast %393 : vector<1x16x128xf32> to vector<16x128xf32>
    %395 = arith.mulf %296, %296 : vector<16x128xf32>
    %cst_294 = arith.constant 1.000000e+00 : f32
    %396 = vector.broadcast %cst_294 : f32 to vector<16x128xf32>
    %397 = arith.subf %396, %395 : vector<16x128xf32>
    %398 = arith.mulf %394, %397 : vector<16x128xf32>
    %cst_295 = arith.constant 1.000000e+00 : f32
    %399 = vector.broadcast %cst_295 : f32 to vector<16x128xf32>
    %400 = arith.addf %398, %399 : vector<16x128xf32>
    %401 = math.absf %400 : vector<16x128xf32>
    %402 = math.log %401 : vector<16x128xf32>
    %403 = arith.addf %213, %402 : vector<16x128xf32>
    %c2_296 = arith.constant 2 : index
    %c0_297 = arith.constant 0 : index
    %c0_298 = arith.constant 0 : index
    %404 = vector.load %arg6[%c2_296, %c0_297, %c0_298] : memref<4x16x128xf32, #tpu.memory_space<vmem>>, vector<1x16x128xf32>
    %405 = vector.shape_cast %404 : vector<1x16x128xf32> to vector<16x128xf32>
    %c2_299 = arith.constant 2 : index
    %c0_300 = arith.constant 0 : index
    %c0_301 = arith.constant 0 : index
    %c0_302 = arith.constant 0 : index
    %406 = vector.load %arg5[%c2_299, %c0_300, %c0_301, %c0_302] : memref<4x16x16x128xf32, #tpu.memory_space<vmem>>, vector<1x1x16x128xf32>
    %407 = vector.shape_cast %406 : vector<1x1x16x128xf32> to vector<16x128xf32>
    %408 = vector.broadcast %392 : vector<1x128xf32> to vector<16x128xf32>
    %409 = arith.mulf %407, %408 : vector<16x128xf32>
    %410 = arith.addf %405, %409 : vector<16x128xf32>
    %c2_303 = arith.constant 2 : index
    %c1_304 = arith.constant 1 : index
    %c0_305 = arith.constant 0 : index
    %c0_306 = arith.constant 0 : index
    %411 = vector.load %arg5[%c2_303, %c1_304, %c0_305, %c0_306] : memref<4x16x16x128xf32, #tpu.memory_space<vmem>>, vector<1x1x16x128xf32>
    %412 = vector.shape_cast %411 : vector<1x1x16x128xf32> to vector<16x128xf32>
    %413 = vector.broadcast %386 : vector<1x128xf32> to vector<16x128xf32>
    %414 = arith.mulf %412, %413 : vector<16x128xf32>
    %415 = arith.addf %410, %414 : vector<16x128xf32>
    %c2_307 = arith.constant 2 : index
    %c2_308 = arith.constant 2 : index
    %c0_309 = arith.constant 0 : index
    %c0_310 = arith.constant 0 : index
    %416 = vector.load %arg5[%c2_307, %c2_308, %c0_309, %c0_310] : memref<4x16x16x128xf32, #tpu.memory_space<vmem>>, vector<1x1x16x128xf32>
    %417 = vector.shape_cast %416 : vector<1x1x16x128xf32> to vector<16x128xf32>
    %418 = vector.broadcast %380 : vector<1x128xf32> to vector<16x128xf32>
    %419 = arith.mulf %417, %418 : vector<16x128xf32>
    %420 = arith.addf %415, %419 : vector<16x128xf32>
    %c2_311 = arith.constant 2 : index
    %c3_312 = arith.constant 3 : index
    %c0_313 = arith.constant 0 : index
    %c0_314 = arith.constant 0 : index
    %421 = vector.load %arg5[%c2_311, %c3_312, %c0_313, %c0_314] : memref<4x16x16x128xf32, #tpu.memory_space<vmem>>, vector<1x1x16x128xf32>
    %422 = vector.shape_cast %421 : vector<1x1x16x128xf32> to vector<16x128xf32>
    %423 = vector.broadcast %374 : vector<1x128xf32> to vector<16x128xf32>
    %424 = arith.mulf %422, %423 : vector<16x128xf32>
    %425 = arith.addf %420, %424 : vector<16x128xf32>
    %c2_315 = arith.constant 2 : index
    %c4_316 = arith.constant 4 : index
    %c0_317 = arith.constant 0 : index
    %c0_318 = arith.constant 0 : index
    %426 = vector.load %arg5[%c2_315, %c4_316, %c0_317, %c0_318] : memref<4x16x16x128xf32, #tpu.memory_space<vmem>>, vector<1x1x16x128xf32>
    %427 = vector.shape_cast %426 : vector<1x1x16x128xf32> to vector<16x128xf32>
    %428 = vector.broadcast %368 : vector<1x128xf32> to vector<16x128xf32>
    %429 = arith.mulf %427, %428 : vector<16x128xf32>
    %430 = arith.addf %425, %429 : vector<16x128xf32>
    %c2_319 = arith.constant 2 : index
    %c5_320 = arith.constant 5 : index
    %c0_321 = arith.constant 0 : index
    %c0_322 = arith.constant 0 : index
    %431 = vector.load %arg5[%c2_319, %c5_320, %c0_321, %c0_322] : memref<4x16x16x128xf32, #tpu.memory_space<vmem>>, vector<1x1x16x128xf32>
    %432 = vector.shape_cast %431 : vector<1x1x16x128xf32> to vector<16x128xf32>
    %433 = vector.broadcast %362 : vector<1x128xf32> to vector<16x128xf32>
    %434 = arith.mulf %432, %433 : vector<16x128xf32>
    %435 = arith.addf %430, %434 : vector<16x128xf32>
    %c2_323 = arith.constant 2 : index
    %c6_324 = arith.constant 6 : index
    %c0_325 = arith.constant 0 : index
    %c0_326 = arith.constant 0 : index
    %436 = vector.load %arg5[%c2_323, %c6_324, %c0_325, %c0_326] : memref<4x16x16x128xf32, #tpu.memory_space<vmem>>, vector<1x1x16x128xf32>
    %437 = vector.shape_cast %436 : vector<1x1x16x128xf32> to vector<16x128xf32>
    %438 = vector.broadcast %356 : vector<1x128xf32> to vector<16x128xf32>
    %439 = arith.mulf %437, %438 : vector<16x128xf32>
    %440 = arith.addf %435, %439 : vector<16x128xf32>
    %c2_327 = arith.constant 2 : index
    %c7_328 = arith.constant 7 : index
    %c0_329 = arith.constant 0 : index
    %c0_330 = arith.constant 0 : index
    %441 = vector.load %arg5[%c2_327, %c7_328, %c0_329, %c0_330] : memref<4x16x16x128xf32, #tpu.memory_space<vmem>>, vector<1x1x16x128xf32>
    %442 = vector.shape_cast %441 : vector<1x1x16x128xf32> to vector<16x128xf32>
    %443 = vector.broadcast %350 : vector<1x128xf32> to vector<16x128xf32>
    %444 = arith.mulf %442, %443 : vector<16x128xf32>
    %445 = arith.addf %440, %444 : vector<16x128xf32>
    %c2_331 = arith.constant 2 : index
    %c8_332 = arith.constant 8 : index
    %c0_333 = arith.constant 0 : index
    %c0_334 = arith.constant 0 : index
    %446 = vector.load %arg5[%c2_331, %c8_332, %c0_333, %c0_334] : memref<4x16x16x128xf32, #tpu.memory_space<vmem>>, vector<1x1x16x128xf32>
    %447 = vector.shape_cast %446 : vector<1x1x16x128xf32> to vector<16x128xf32>
    %448 = vector.broadcast %344 : vector<1x128xf32> to vector<16x128xf32>
    %449 = arith.mulf %447, %448 : vector<16x128xf32>
    %450 = arith.addf %445, %449 : vector<16x128xf32>
    %c2_335 = arith.constant 2 : index
    %c9_336 = arith.constant 9 : index
    %c0_337 = arith.constant 0 : index
    %c0_338 = arith.constant 0 : index
    %451 = vector.load %arg5[%c2_335, %c9_336, %c0_337, %c0_338] : memref<4x16x16x128xf32, #tpu.memory_space<vmem>>, vector<1x1x16x128xf32>
    %452 = vector.shape_cast %451 : vector<1x1x16x128xf32> to vector<16x128xf32>
    %453 = vector.broadcast %338 : vector<1x128xf32> to vector<16x128xf32>
    %454 = arith.mulf %452, %453 : vector<16x128xf32>
    %455 = arith.addf %450, %454 : vector<16x128xf32>
    %c2_339 = arith.constant 2 : index
    %c10_340 = arith.constant 10 : index
    %c0_341 = arith.constant 0 : index
    %c0_342 = arith.constant 0 : index
    %456 = vector.load %arg5[%c2_339, %c10_340, %c0_341, %c0_342] : memref<4x16x16x128xf32, #tpu.memory_space<vmem>>, vector<1x1x16x128xf32>
    %457 = vector.shape_cast %456 : vector<1x1x16x128xf32> to vector<16x128xf32>
    %458 = vector.broadcast %332 : vector<1x128xf32> to vector<16x128xf32>
    %459 = arith.mulf %457, %458 : vector<16x128xf32>
    %460 = arith.addf %455, %459 : vector<16x128xf32>
    %c2_343 = arith.constant 2 : index
    %c11_344 = arith.constant 11 : index
    %c0_345 = arith.constant 0 : index
    %c0_346 = arith.constant 0 : index
    %461 = vector.load %arg5[%c2_343, %c11_344, %c0_345, %c0_346] : memref<4x16x16x128xf32, #tpu.memory_space<vmem>>, vector<1x1x16x128xf32>
    %462 = vector.shape_cast %461 : vector<1x1x16x128xf32> to vector<16x128xf32>
    %463 = vector.broadcast %326 : vector<1x128xf32> to vector<16x128xf32>
    %464 = arith.mulf %462, %463 : vector<16x128xf32>
    %465 = arith.addf %460, %464 : vector<16x128xf32>
    %c2_347 = arith.constant 2 : index
    %c12_348 = arith.constant 12 : index
    %c0_349 = arith.constant 0 : index
    %c0_350 = arith.constant 0 : index
    %466 = vector.load %arg5[%c2_347, %c12_348, %c0_349, %c0_350] : memref<4x16x16x128xf32, #tpu.memory_space<vmem>>, vector<1x1x16x128xf32>
    %467 = vector.shape_cast %466 : vector<1x1x16x128xf32> to vector<16x128xf32>
    %468 = vector.broadcast %320 : vector<1x128xf32> to vector<16x128xf32>
    %469 = arith.mulf %467, %468 : vector<16x128xf32>
    %470 = arith.addf %465, %469 : vector<16x128xf32>
    %c2_351 = arith.constant 2 : index
    %c13_352 = arith.constant 13 : index
    %c0_353 = arith.constant 0 : index
    %c0_354 = arith.constant 0 : index
    %471 = vector.load %arg5[%c2_351, %c13_352, %c0_353, %c0_354] : memref<4x16x16x128xf32, #tpu.memory_space<vmem>>, vector<1x1x16x128xf32>
    %472 = vector.shape_cast %471 : vector<1x1x16x128xf32> to vector<16x128xf32>
    %473 = vector.broadcast %314 : vector<1x128xf32> to vector<16x128xf32>
    %474 = arith.mulf %472, %473 : vector<16x128xf32>
    %475 = arith.addf %470, %474 : vector<16x128xf32>
    %c2_355 = arith.constant 2 : index
    %c14_356 = arith.constant 14 : index
    %c0_357 = arith.constant 0 : index
    %c0_358 = arith.constant 0 : index
    %476 = vector.load %arg5[%c2_355, %c14_356, %c0_357, %c0_358] : memref<4x16x16x128xf32, #tpu.memory_space<vmem>>, vector<1x1x16x128xf32>
    %477 = vector.shape_cast %476 : vector<1x1x16x128xf32> to vector<16x128xf32>
    %478 = vector.broadcast %308 : vector<1x128xf32> to vector<16x128xf32>
    %479 = arith.mulf %477, %478 : vector<16x128xf32>
    %480 = arith.addf %475, %479 : vector<16x128xf32>
    %c2_359 = arith.constant 2 : index
    %c15_360 = arith.constant 15 : index
    %c0_361 = arith.constant 0 : index
    %c0_362 = arith.constant 0 : index
    %481 = vector.load %arg5[%c2_359, %c15_360, %c0_361, %c0_362] : memref<4x16x16x128xf32, #tpu.memory_space<vmem>>, vector<1x1x16x128xf32>
    %482 = vector.shape_cast %481 : vector<1x1x16x128xf32> to vector<16x128xf32>
    %483 = vector.broadcast %302 : vector<1x128xf32> to vector<16x128xf32>
    %484 = arith.mulf %482, %483 : vector<16x128xf32>
    %485 = arith.addf %480, %484 : vector<16x128xf32>
    %486 = math.tanh %485 : vector<16x128xf32>
    %c2_363 = arith.constant 2 : index
    %c0_364 = arith.constant 0 : index
    %c0_365 = arith.constant 0 : index
    %c0_366 = arith.constant 0 : index
    %487 = vector.load %arg4[%c2_363, %c0_364, %c0_365, %c0_366] : memref<4x16x16x128xf32, #tpu.memory_space<vmem>>, vector<1x1x16x128xf32>
    %488 = vector.shape_cast %487 : vector<1x1x16x128xf32> to vector<16x128xf32>
    %489 = arith.mulf %488, %486 : vector<16x128xf32>
    %cst_367 = arith.constant dense<0.000000e+00> : vector<128xf32>
    %490 = vector.multi_reduction <add>, %489, %cst_367 [0] : vector<16x128xf32> to vector<128xf32>
    %491 = vector.shape_cast %490 : vector<128xf32> to vector<1x128xf32>
    %492 = arith.addf %392, %491 : vector<1x128xf32>
    %c2_368 = arith.constant 2 : index
    %c1_369 = arith.constant 1 : index
    %c0_370 = arith.constant 0 : index
    %c0_371 = arith.constant 0 : index
    %493 = vector.load %arg4[%c2_368, %c1_369, %c0_370, %c0_371] : memref<4x16x16x128xf32, #tpu.memory_space<vmem>>, vector<1x1x16x128xf32>
    %494 = vector.shape_cast %493 : vector<1x1x16x128xf32> to vector<16x128xf32>
    %495 = arith.mulf %494, %486 : vector<16x128xf32>
    %cst_372 = arith.constant dense<0.000000e+00> : vector<128xf32>
    %496 = vector.multi_reduction <add>, %495, %cst_372 [0] : vector<16x128xf32> to vector<128xf32>
    %497 = vector.shape_cast %496 : vector<128xf32> to vector<1x128xf32>
    %498 = arith.addf %386, %497 : vector<1x128xf32>
    %c2_373 = arith.constant 2 : index
    %c2_374 = arith.constant 2 : index
    %c0_375 = arith.constant 0 : index
    %c0_376 = arith.constant 0 : index
    %499 = vector.load %arg4[%c2_373, %c2_374, %c0_375, %c0_376] : memref<4x16x16x128xf32, #tpu.memory_space<vmem>>, vector<1x1x16x128xf32>
    %500 = vector.shape_cast %499 : vector<1x1x16x128xf32> to vector<16x128xf32>
    %501 = arith.mulf %500, %486 : vector<16x128xf32>
    %cst_377 = arith.constant dense<0.000000e+00> : vector<128xf32>
    %502 = vector.multi_reduction <add>, %501, %cst_377 [0] : vector<16x128xf32> to vector<128xf32>
    %503 = vector.shape_cast %502 : vector<128xf32> to vector<1x128xf32>
    %504 = arith.addf %380, %503 : vector<1x128xf32>
    %c2_378 = arith.constant 2 : index
    %c3_379 = arith.constant 3 : index
    %c0_380 = arith.constant 0 : index
    %c0_381 = arith.constant 0 : index
    %505 = vector.load %arg4[%c2_378, %c3_379, %c0_380, %c0_381] : memref<4x16x16x128xf32, #tpu.memory_space<vmem>>, vector<1x1x16x128xf32>
    %506 = vector.shape_cast %505 : vector<1x1x16x128xf32> to vector<16x128xf32>
    %507 = arith.mulf %506, %486 : vector<16x128xf32>
    %cst_382 = arith.constant dense<0.000000e+00> : vector<128xf32>
    %508 = vector.multi_reduction <add>, %507, %cst_382 [0] : vector<16x128xf32> to vector<128xf32>
    %509 = vector.shape_cast %508 : vector<128xf32> to vector<1x128xf32>
    %510 = arith.addf %374, %509 : vector<1x128xf32>
    %c2_383 = arith.constant 2 : index
    %c4_384 = arith.constant 4 : index
    %c0_385 = arith.constant 0 : index
    %c0_386 = arith.constant 0 : index
    %511 = vector.load %arg4[%c2_383, %c4_384, %c0_385, %c0_386] : memref<4x16x16x128xf32, #tpu.memory_space<vmem>>, vector<1x1x16x128xf32>
    %512 = vector.shape_cast %511 : vector<1x1x16x128xf32> to vector<16x128xf32>
    %513 = arith.mulf %512, %486 : vector<16x128xf32>
    %cst_387 = arith.constant dense<0.000000e+00> : vector<128xf32>
    %514 = vector.multi_reduction <add>, %513, %cst_387 [0] : vector<16x128xf32> to vector<128xf32>
    %515 = vector.shape_cast %514 : vector<128xf32> to vector<1x128xf32>
    %516 = arith.addf %368, %515 : vector<1x128xf32>
    %c2_388 = arith.constant 2 : index
    %c5_389 = arith.constant 5 : index
    %c0_390 = arith.constant 0 : index
    %c0_391 = arith.constant 0 : index
    %517 = vector.load %arg4[%c2_388, %c5_389, %c0_390, %c0_391] : memref<4x16x16x128xf32, #tpu.memory_space<vmem>>, vector<1x1x16x128xf32>
    %518 = vector.shape_cast %517 : vector<1x1x16x128xf32> to vector<16x128xf32>
    %519 = arith.mulf %518, %486 : vector<16x128xf32>
    %cst_392 = arith.constant dense<0.000000e+00> : vector<128xf32>
    %520 = vector.multi_reduction <add>, %519, %cst_392 [0] : vector<16x128xf32> to vector<128xf32>
    %521 = vector.shape_cast %520 : vector<128xf32> to vector<1x128xf32>
    %522 = arith.addf %362, %521 : vector<1x128xf32>
    %c2_393 = arith.constant 2 : index
    %c6_394 = arith.constant 6 : index
    %c0_395 = arith.constant 0 : index
    %c0_396 = arith.constant 0 : index
    %523 = vector.load %arg4[%c2_393, %c6_394, %c0_395, %c0_396] : memref<4x16x16x128xf32, #tpu.memory_space<vmem>>, vector<1x1x16x128xf32>
    %524 = vector.shape_cast %523 : vector<1x1x16x128xf32> to vector<16x128xf32>
    %525 = arith.mulf %524, %486 : vector<16x128xf32>
    %cst_397 = arith.constant dense<0.000000e+00> : vector<128xf32>
    %526 = vector.multi_reduction <add>, %525, %cst_397 [0] : vector<16x128xf32> to vector<128xf32>
    %527 = vector.shape_cast %526 : vector<128xf32> to vector<1x128xf32>
    %528 = arith.addf %356, %527 : vector<1x128xf32>
    %c2_398 = arith.constant 2 : index
    %c7_399 = arith.constant 7 : index
    %c0_400 = arith.constant 0 : index
    %c0_401 = arith.constant 0 : index
    %529 = vector.load %arg4[%c2_398, %c7_399, %c0_400, %c0_401] : memref<4x16x16x128xf32, #tpu.memory_space<vmem>>, vector<1x1x16x128xf32>
    %530 = vector.shape_cast %529 : vector<1x1x16x128xf32> to vector<16x128xf32>
    %531 = arith.mulf %530, %486 : vector<16x128xf32>
    %cst_402 = arith.constant dense<0.000000e+00> : vector<128xf32>
    %532 = vector.multi_reduction <add>, %531, %cst_402 [0] : vector<16x128xf32> to vector<128xf32>
    %533 = vector.shape_cast %532 : vector<128xf32> to vector<1x128xf32>
    %534 = arith.addf %350, %533 : vector<1x128xf32>
    %c2_403 = arith.constant 2 : index
    %c8_404 = arith.constant 8 : index
    %c0_405 = arith.constant 0 : index
    %c0_406 = arith.constant 0 : index
    %535 = vector.load %arg4[%c2_403, %c8_404, %c0_405, %c0_406] : memref<4x16x16x128xf32, #tpu.memory_space<vmem>>, vector<1x1x16x128xf32>
    %536 = vector.shape_cast %535 : vector<1x1x16x128xf32> to vector<16x128xf32>
    %537 = arith.mulf %536, %486 : vector<16x128xf32>
    %cst_407 = arith.constant dense<0.000000e+00> : vector<128xf32>
    %538 = vector.multi_reduction <add>, %537, %cst_407 [0] : vector<16x128xf32> to vector<128xf32>
    %539 = vector.shape_cast %538 : vector<128xf32> to vector<1x128xf32>
    %540 = arith.addf %344, %539 : vector<1x128xf32>
    %c2_408 = arith.constant 2 : index
    %c9_409 = arith.constant 9 : index
    %c0_410 = arith.constant 0 : index
    %c0_411 = arith.constant 0 : index
    %541 = vector.load %arg4[%c2_408, %c9_409, %c0_410, %c0_411] : memref<4x16x16x128xf32, #tpu.memory_space<vmem>>, vector<1x1x16x128xf32>
    %542 = vector.shape_cast %541 : vector<1x1x16x128xf32> to vector<16x128xf32>
    %543 = arith.mulf %542, %486 : vector<16x128xf32>
    %cst_412 = arith.constant dense<0.000000e+00> : vector<128xf32>
    %544 = vector.multi_reduction <add>, %543, %cst_412 [0] : vector<16x128xf32> to vector<128xf32>
    %545 = vector.shape_cast %544 : vector<128xf32> to vector<1x128xf32>
    %546 = arith.addf %338, %545 : vector<1x128xf32>
    %c2_413 = arith.constant 2 : index
    %c10_414 = arith.constant 10 : index
    %c0_415 = arith.constant 0 : index
    %c0_416 = arith.constant 0 : index
    %547 = vector.load %arg4[%c2_413, %c10_414, %c0_415, %c0_416] : memref<4x16x16x128xf32, #tpu.memory_space<vmem>>, vector<1x1x16x128xf32>
    %548 = vector.shape_cast %547 : vector<1x1x16x128xf32> to vector<16x128xf32>
    %549 = arith.mulf %548, %486 : vector<16x128xf32>
    %cst_417 = arith.constant dense<0.000000e+00> : vector<128xf32>
    %550 = vector.multi_reduction <add>, %549, %cst_417 [0] : vector<16x128xf32> to vector<128xf32>
    %551 = vector.shape_cast %550 : vector<128xf32> to vector<1x128xf32>
    %552 = arith.addf %332, %551 : vector<1x128xf32>
    %c2_418 = arith.constant 2 : index
    %c11_419 = arith.constant 11 : index
    %c0_420 = arith.constant 0 : index
    %c0_421 = arith.constant 0 : index
    %553 = vector.load %arg4[%c2_418, %c11_419, %c0_420, %c0_421] : memref<4x16x16x128xf32, #tpu.memory_space<vmem>>, vector<1x1x16x128xf32>
    %554 = vector.shape_cast %553 : vector<1x1x16x128xf32> to vector<16x128xf32>
    %555 = arith.mulf %554, %486 : vector<16x128xf32>
    %cst_422 = arith.constant dense<0.000000e+00> : vector<128xf32>
    %556 = vector.multi_reduction <add>, %555, %cst_422 [0] : vector<16x128xf32> to vector<128xf32>
    %557 = vector.shape_cast %556 : vector<128xf32> to vector<1x128xf32>
    %558 = arith.addf %326, %557 : vector<1x128xf32>
    %c2_423 = arith.constant 2 : index
    %c12_424 = arith.constant 12 : index
    %c0_425 = arith.constant 0 : index
    %c0_426 = arith.constant 0 : index
    %559 = vector.load %arg4[%c2_423, %c12_424, %c0_425, %c0_426] : memref<4x16x16x128xf32, #tpu.memory_space<vmem>>, vector<1x1x16x128xf32>
    %560 = vector.shape_cast %559 : vector<1x1x16x128xf32> to vector<16x128xf32>
    %561 = arith.mulf %560, %486 : vector<16x128xf32>
    %cst_427 = arith.constant dense<0.000000e+00> : vector<128xf32>
    %562 = vector.multi_reduction <add>, %561, %cst_427 [0] : vector<16x128xf32> to vector<128xf32>
    %563 = vector.shape_cast %562 : vector<128xf32> to vector<1x128xf32>
    %564 = arith.addf %320, %563 : vector<1x128xf32>
    %c2_428 = arith.constant 2 : index
    %c13_429 = arith.constant 13 : index
    %c0_430 = arith.constant 0 : index
    %c0_431 = arith.constant 0 : index
    %565 = vector.load %arg4[%c2_428, %c13_429, %c0_430, %c0_431] : memref<4x16x16x128xf32, #tpu.memory_space<vmem>>, vector<1x1x16x128xf32>
    %566 = vector.shape_cast %565 : vector<1x1x16x128xf32> to vector<16x128xf32>
    %567 = arith.mulf %566, %486 : vector<16x128xf32>
    %cst_432 = arith.constant dense<0.000000e+00> : vector<128xf32>
    %568 = vector.multi_reduction <add>, %567, %cst_432 [0] : vector<16x128xf32> to vector<128xf32>
    %569 = vector.shape_cast %568 : vector<128xf32> to vector<1x128xf32>
    %570 = arith.addf %314, %569 : vector<1x128xf32>
    %c2_433 = arith.constant 2 : index
    %c14_434 = arith.constant 14 : index
    %c0_435 = arith.constant 0 : index
    %c0_436 = arith.constant 0 : index
    %571 = vector.load %arg4[%c2_433, %c14_434, %c0_435, %c0_436] : memref<4x16x16x128xf32, #tpu.memory_space<vmem>>, vector<1x1x16x128xf32>
    %572 = vector.shape_cast %571 : vector<1x1x16x128xf32> to vector<16x128xf32>
    %573 = arith.mulf %572, %486 : vector<16x128xf32>
    %cst_437 = arith.constant dense<0.000000e+00> : vector<128xf32>
    %574 = vector.multi_reduction <add>, %573, %cst_437 [0] : vector<16x128xf32> to vector<128xf32>
    %575 = vector.shape_cast %574 : vector<128xf32> to vector<1x128xf32>
    %576 = arith.addf %308, %575 : vector<1x128xf32>
    %c2_438 = arith.constant 2 : index
    %c15_439 = arith.constant 15 : index
    %c0_440 = arith.constant 0 : index
    %c0_441 = arith.constant 0 : index
    %577 = vector.load %arg4[%c2_438, %c15_439, %c0_440, %c0_441] : memref<4x16x16x128xf32, #tpu.memory_space<vmem>>, vector<1x1x16x128xf32>
    %578 = vector.shape_cast %577 : vector<1x1x16x128xf32> to vector<16x128xf32>
    %579 = arith.mulf %578, %486 : vector<16x128xf32>
    %cst_442 = arith.constant dense<0.000000e+00> : vector<128xf32>
    %580 = vector.multi_reduction <add>, %579, %cst_442 [0] : vector<16x128xf32> to vector<128xf32>
    %581 = vector.shape_cast %580 : vector<128xf32> to vector<1x128xf32>
    %582 = arith.addf %302, %581 : vector<1x128xf32>
    %c2_443 = arith.constant 2 : index
    %c0_444 = arith.constant 0 : index
    %c0_445 = arith.constant 0 : index
    %583 = vector.load %arg7[%c2_443, %c0_444, %c0_445] : memref<4x16x128xf32, #tpu.memory_space<vmem>>, vector<1x16x128xf32>
    %584 = vector.shape_cast %583 : vector<1x16x128xf32> to vector<16x128xf32>
    %585 = arith.mulf %486, %486 : vector<16x128xf32>
    %cst_446 = arith.constant 1.000000e+00 : f32
    %586 = vector.broadcast %cst_446 : f32 to vector<16x128xf32>
    %587 = arith.subf %586, %585 : vector<16x128xf32>
    %588 = arith.mulf %584, %587 : vector<16x128xf32>
    %cst_447 = arith.constant 1.000000e+00 : f32
    %589 = vector.broadcast %cst_447 : f32 to vector<16x128xf32>
    %590 = arith.addf %588, %589 : vector<16x128xf32>
    %591 = math.absf %590 : vector<16x128xf32>
    %592 = math.log %591 : vector<16x128xf32>
    %593 = arith.addf %403, %592 : vector<16x128xf32>
    %c3_448 = arith.constant 3 : index
    %c0_449 = arith.constant 0 : index
    %c0_450 = arith.constant 0 : index
    %594 = vector.load %arg6[%c3_448, %c0_449, %c0_450] : memref<4x16x128xf32, #tpu.memory_space<vmem>>, vector<1x16x128xf32>
    %595 = vector.shape_cast %594 : vector<1x16x128xf32> to vector<16x128xf32>
    %c3_451 = arith.constant 3 : index
    %c0_452 = arith.constant 0 : index
    %c0_453 = arith.constant 0 : index
    %c0_454 = arith.constant 0 : index
    %596 = vector.load %arg5[%c3_451, %c0_452, %c0_453, %c0_454] : memref<4x16x16x128xf32, #tpu.memory_space<vmem>>, vector<1x1x16x128xf32>
    %597 = vector.shape_cast %596 : vector<1x1x16x128xf32> to vector<16x128xf32>
    %598 = vector.broadcast %582 : vector<1x128xf32> to vector<16x128xf32>
    %599 = arith.mulf %597, %598 : vector<16x128xf32>
    %600 = arith.addf %595, %599 : vector<16x128xf32>
    %c3_455 = arith.constant 3 : index
    %c1_456 = arith.constant 1 : index
    %c0_457 = arith.constant 0 : index
    %c0_458 = arith.constant 0 : index
    %601 = vector.load %arg5[%c3_455, %c1_456, %c0_457, %c0_458] : memref<4x16x16x128xf32, #tpu.memory_space<vmem>>, vector<1x1x16x128xf32>
    %602 = vector.shape_cast %601 : vector<1x1x16x128xf32> to vector<16x128xf32>
    %603 = vector.broadcast %576 : vector<1x128xf32> to vector<16x128xf32>
    %604 = arith.mulf %602, %603 : vector<16x128xf32>
    %605 = arith.addf %600, %604 : vector<16x128xf32>
    %c3_459 = arith.constant 3 : index
    %c2_460 = arith.constant 2 : index
    %c0_461 = arith.constant 0 : index
    %c0_462 = arith.constant 0 : index
    %606 = vector.load %arg5[%c3_459, %c2_460, %c0_461, %c0_462] : memref<4x16x16x128xf32, #tpu.memory_space<vmem>>, vector<1x1x16x128xf32>
    %607 = vector.shape_cast %606 : vector<1x1x16x128xf32> to vector<16x128xf32>
    %608 = vector.broadcast %570 : vector<1x128xf32> to vector<16x128xf32>
    %609 = arith.mulf %607, %608 : vector<16x128xf32>
    %610 = arith.addf %605, %609 : vector<16x128xf32>
    %c3_463 = arith.constant 3 : index
    %c3_464 = arith.constant 3 : index
    %c0_465 = arith.constant 0 : index
    %c0_466 = arith.constant 0 : index
    %611 = vector.load %arg5[%c3_463, %c3_464, %c0_465, %c0_466] : memref<4x16x16x128xf32, #tpu.memory_space<vmem>>, vector<1x1x16x128xf32>
    %612 = vector.shape_cast %611 : vector<1x1x16x128xf32> to vector<16x128xf32>
    %613 = vector.broadcast %564 : vector<1x128xf32> to vector<16x128xf32>
    %614 = arith.mulf %612, %613 : vector<16x128xf32>
    %615 = arith.addf %610, %614 : vector<16x128xf32>
    %c3_467 = arith.constant 3 : index
    %c4_468 = arith.constant 4 : index
    %c0_469 = arith.constant 0 : index
    %c0_470 = arith.constant 0 : index
    %616 = vector.load %arg5[%c3_467, %c4_468, %c0_469, %c0_470] : memref<4x16x16x128xf32, #tpu.memory_space<vmem>>, vector<1x1x16x128xf32>
    %617 = vector.shape_cast %616 : vector<1x1x16x128xf32> to vector<16x128xf32>
    %618 = vector.broadcast %558 : vector<1x128xf32> to vector<16x128xf32>
    %619 = arith.mulf %617, %618 : vector<16x128xf32>
    %620 = arith.addf %615, %619 : vector<16x128xf32>
    %c3_471 = arith.constant 3 : index
    %c5_472 = arith.constant 5 : index
    %c0_473 = arith.constant 0 : index
    %c0_474 = arith.constant 0 : index
    %621 = vector.load %arg5[%c3_471, %c5_472, %c0_473, %c0_474] : memref<4x16x16x128xf32, #tpu.memory_space<vmem>>, vector<1x1x16x128xf32>
    %622 = vector.shape_cast %621 : vector<1x1x16x128xf32> to vector<16x128xf32>
    %623 = vector.broadcast %552 : vector<1x128xf32> to vector<16x128xf32>
    %624 = arith.mulf %622, %623 : vector<16x128xf32>
    %625 = arith.addf %620, %624 : vector<16x128xf32>
    %c3_475 = arith.constant 3 : index
    %c6_476 = arith.constant 6 : index
    %c0_477 = arith.constant 0 : index
    %c0_478 = arith.constant 0 : index
    %626 = vector.load %arg5[%c3_475, %c6_476, %c0_477, %c0_478] : memref<4x16x16x128xf32, #tpu.memory_space<vmem>>, vector<1x1x16x128xf32>
    %627 = vector.shape_cast %626 : vector<1x1x16x128xf32> to vector<16x128xf32>
    %628 = vector.broadcast %546 : vector<1x128xf32> to vector<16x128xf32>
    %629 = arith.mulf %627, %628 : vector<16x128xf32>
    %630 = arith.addf %625, %629 : vector<16x128xf32>
    %c3_479 = arith.constant 3 : index
    %c7_480 = arith.constant 7 : index
    %c0_481 = arith.constant 0 : index
    %c0_482 = arith.constant 0 : index
    %631 = vector.load %arg5[%c3_479, %c7_480, %c0_481, %c0_482] : memref<4x16x16x128xf32, #tpu.memory_space<vmem>>, vector<1x1x16x128xf32>
    %632 = vector.shape_cast %631 : vector<1x1x16x128xf32> to vector<16x128xf32>
    %633 = vector.broadcast %540 : vector<1x128xf32> to vector<16x128xf32>
    %634 = arith.mulf %632, %633 : vector<16x128xf32>
    %635 = arith.addf %630, %634 : vector<16x128xf32>
    %c3_483 = arith.constant 3 : index
    %c8_484 = arith.constant 8 : index
    %c0_485 = arith.constant 0 : index
    %c0_486 = arith.constant 0 : index
    %636 = vector.load %arg5[%c3_483, %c8_484, %c0_485, %c0_486] : memref<4x16x16x128xf32, #tpu.memory_space<vmem>>, vector<1x1x16x128xf32>
    %637 = vector.shape_cast %636 : vector<1x1x16x128xf32> to vector<16x128xf32>
    %638 = vector.broadcast %534 : vector<1x128xf32> to vector<16x128xf32>
    %639 = arith.mulf %637, %638 : vector<16x128xf32>
    %640 = arith.addf %635, %639 : vector<16x128xf32>
    %c3_487 = arith.constant 3 : index
    %c9_488 = arith.constant 9 : index
    %c0_489 = arith.constant 0 : index
    %c0_490 = arith.constant 0 : index
    %641 = vector.load %arg5[%c3_487, %c9_488, %c0_489, %c0_490] : memref<4x16x16x128xf32, #tpu.memory_space<vmem>>, vector<1x1x16x128xf32>
    %642 = vector.shape_cast %641 : vector<1x1x16x128xf32> to vector<16x128xf32>
    %643 = vector.broadcast %528 : vector<1x128xf32> to vector<16x128xf32>
    %644 = arith.mulf %642, %643 : vector<16x128xf32>
    %645 = arith.addf %640, %644 : vector<16x128xf32>
    %c3_491 = arith.constant 3 : index
    %c10_492 = arith.constant 10 : index
    %c0_493 = arith.constant 0 : index
    %c0_494 = arith.constant 0 : index
    %646 = vector.load %arg5[%c3_491, %c10_492, %c0_493, %c0_494] : memref<4x16x16x128xf32, #tpu.memory_space<vmem>>, vector<1x1x16x128xf32>
    %647 = vector.shape_cast %646 : vector<1x1x16x128xf32> to vector<16x128xf32>
    %648 = vector.broadcast %522 : vector<1x128xf32> to vector<16x128xf32>
    %649 = arith.mulf %647, %648 : vector<16x128xf32>
    %650 = arith.addf %645, %649 : vector<16x128xf32>
    %c3_495 = arith.constant 3 : index
    %c11_496 = arith.constant 11 : index
    %c0_497 = arith.constant 0 : index
    %c0_498 = arith.constant 0 : index
    %651 = vector.load %arg5[%c3_495, %c11_496, %c0_497, %c0_498] : memref<4x16x16x128xf32, #tpu.memory_space<vmem>>, vector<1x1x16x128xf32>
    %652 = vector.shape_cast %651 : vector<1x1x16x128xf32> to vector<16x128xf32>
    %653 = vector.broadcast %516 : vector<1x128xf32> to vector<16x128xf32>
    %654 = arith.mulf %652, %653 : vector<16x128xf32>
    %655 = arith.addf %650, %654 : vector<16x128xf32>
    %c3_499 = arith.constant 3 : index
    %c12_500 = arith.constant 12 : index
    %c0_501 = arith.constant 0 : index
    %c0_502 = arith.constant 0 : index
    %656 = vector.load %arg5[%c3_499, %c12_500, %c0_501, %c0_502] : memref<4x16x16x128xf32, #tpu.memory_space<vmem>>, vector<1x1x16x128xf32>
    %657 = vector.shape_cast %656 : vector<1x1x16x128xf32> to vector<16x128xf32>
    %658 = vector.broadcast %510 : vector<1x128xf32> to vector<16x128xf32>
    %659 = arith.mulf %657, %658 : vector<16x128xf32>
    %660 = arith.addf %655, %659 : vector<16x128xf32>
    %c3_503 = arith.constant 3 : index
    %c13_504 = arith.constant 13 : index
    %c0_505 = arith.constant 0 : index
    %c0_506 = arith.constant 0 : index
    %661 = vector.load %arg5[%c3_503, %c13_504, %c0_505, %c0_506] : memref<4x16x16x128xf32, #tpu.memory_space<vmem>>, vector<1x1x16x128xf32>
    %662 = vector.shape_cast %661 : vector<1x1x16x128xf32> to vector<16x128xf32>
    %663 = vector.broadcast %504 : vector<1x128xf32> to vector<16x128xf32>
    %664 = arith.mulf %662, %663 : vector<16x128xf32>
    %665 = arith.addf %660, %664 : vector<16x128xf32>
    %c3_507 = arith.constant 3 : index
    %c14_508 = arith.constant 14 : index
    %c0_509 = arith.constant 0 : index
    %c0_510 = arith.constant 0 : index
    %666 = vector.load %arg5[%c3_507, %c14_508, %c0_509, %c0_510] : memref<4x16x16x128xf32, #tpu.memory_space<vmem>>, vector<1x1x16x128xf32>
    %667 = vector.shape_cast %666 : vector<1x1x16x128xf32> to vector<16x128xf32>
    %668 = vector.broadcast %498 : vector<1x128xf32> to vector<16x128xf32>
    %669 = arith.mulf %667, %668 : vector<16x128xf32>
    %670 = arith.addf %665, %669 : vector<16x128xf32>
    %c3_511 = arith.constant 3 : index
    %c15_512 = arith.constant 15 : index
    %c0_513 = arith.constant 0 : index
    %c0_514 = arith.constant 0 : index
    %671 = vector.load %arg5[%c3_511, %c15_512, %c0_513, %c0_514] : memref<4x16x16x128xf32, #tpu.memory_space<vmem>>, vector<1x1x16x128xf32>
    %672 = vector.shape_cast %671 : vector<1x1x16x128xf32> to vector<16x128xf32>
    %673 = vector.broadcast %492 : vector<1x128xf32> to vector<16x128xf32>
    %674 = arith.mulf %672, %673 : vector<16x128xf32>
    %675 = arith.addf %670, %674 : vector<16x128xf32>
    %676 = math.tanh %675 : vector<16x128xf32>
    %c3_515 = arith.constant 3 : index
    %c0_516 = arith.constant 0 : index
    %c0_517 = arith.constant 0 : index
    %c0_518 = arith.constant 0 : index
    %677 = vector.load %arg4[%c3_515, %c0_516, %c0_517, %c0_518] : memref<4x16x16x128xf32, #tpu.memory_space<vmem>>, vector<1x1x16x128xf32>
    %678 = vector.shape_cast %677 : vector<1x1x16x128xf32> to vector<16x128xf32>
    %679 = arith.mulf %678, %676 : vector<16x128xf32>
    %cst_519 = arith.constant dense<0.000000e+00> : vector<128xf32>
    %680 = vector.multi_reduction <add>, %679, %cst_519 [0] : vector<16x128xf32> to vector<128xf32>
    %681 = vector.shape_cast %680 : vector<128xf32> to vector<1x128xf32>
    %682 = arith.addf %582, %681 : vector<1x128xf32>
    %c3_520 = arith.constant 3 : index
    %c1_521 = arith.constant 1 : index
    %c0_522 = arith.constant 0 : index
    %c0_523 = arith.constant 0 : index
    %683 = vector.load %arg4[%c3_520, %c1_521, %c0_522, %c0_523] : memref<4x16x16x128xf32, #tpu.memory_space<vmem>>, vector<1x1x16x128xf32>
    %684 = vector.shape_cast %683 : vector<1x1x16x128xf32> to vector<16x128xf32>
    %685 = arith.mulf %684, %676 : vector<16x128xf32>
    %cst_524 = arith.constant dense<0.000000e+00> : vector<128xf32>
    %686 = vector.multi_reduction <add>, %685, %cst_524 [0] : vector<16x128xf32> to vector<128xf32>
    %687 = vector.shape_cast %686 : vector<128xf32> to vector<1x128xf32>
    %688 = arith.addf %576, %687 : vector<1x128xf32>
    %c3_525 = arith.constant 3 : index
    %c2_526 = arith.constant 2 : index
    %c0_527 = arith.constant 0 : index
    %c0_528 = arith.constant 0 : index
    %689 = vector.load %arg4[%c3_525, %c2_526, %c0_527, %c0_528] : memref<4x16x16x128xf32, #tpu.memory_space<vmem>>, vector<1x1x16x128xf32>
    %690 = vector.shape_cast %689 : vector<1x1x16x128xf32> to vector<16x128xf32>
    %691 = arith.mulf %690, %676 : vector<16x128xf32>
    %cst_529 = arith.constant dense<0.000000e+00> : vector<128xf32>
    %692 = vector.multi_reduction <add>, %691, %cst_529 [0] : vector<16x128xf32> to vector<128xf32>
    %693 = vector.shape_cast %692 : vector<128xf32> to vector<1x128xf32>
    %694 = arith.addf %570, %693 : vector<1x128xf32>
    %c3_530 = arith.constant 3 : index
    %c3_531 = arith.constant 3 : index
    %c0_532 = arith.constant 0 : index
    %c0_533 = arith.constant 0 : index
    %695 = vector.load %arg4[%c3_530, %c3_531, %c0_532, %c0_533] : memref<4x16x16x128xf32, #tpu.memory_space<vmem>>, vector<1x1x16x128xf32>
    %696 = vector.shape_cast %695 : vector<1x1x16x128xf32> to vector<16x128xf32>
    %697 = arith.mulf %696, %676 : vector<16x128xf32>
    %cst_534 = arith.constant dense<0.000000e+00> : vector<128xf32>
    %698 = vector.multi_reduction <add>, %697, %cst_534 [0] : vector<16x128xf32> to vector<128xf32>
    %699 = vector.shape_cast %698 : vector<128xf32> to vector<1x128xf32>
    %700 = arith.addf %564, %699 : vector<1x128xf32>
    %c3_535 = arith.constant 3 : index
    %c4_536 = arith.constant 4 : index
    %c0_537 = arith.constant 0 : index
    %c0_538 = arith.constant 0 : index
    %701 = vector.load %arg4[%c3_535, %c4_536, %c0_537, %c0_538] : memref<4x16x16x128xf32, #tpu.memory_space<vmem>>, vector<1x1x16x128xf32>
    %702 = vector.shape_cast %701 : vector<1x1x16x128xf32> to vector<16x128xf32>
    %703 = arith.mulf %702, %676 : vector<16x128xf32>
    %cst_539 = arith.constant dense<0.000000e+00> : vector<128xf32>
    %704 = vector.multi_reduction <add>, %703, %cst_539 [0] : vector<16x128xf32> to vector<128xf32>
    %705 = vector.shape_cast %704 : vector<128xf32> to vector<1x128xf32>
    %706 = arith.addf %558, %705 : vector<1x128xf32>
    %c3_540 = arith.constant 3 : index
    %c5_541 = arith.constant 5 : index
    %c0_542 = arith.constant 0 : index
    %c0_543 = arith.constant 0 : index
    %707 = vector.load %arg4[%c3_540, %c5_541, %c0_542, %c0_543] : memref<4x16x16x128xf32, #tpu.memory_space<vmem>>, vector<1x1x16x128xf32>
    %708 = vector.shape_cast %707 : vector<1x1x16x128xf32> to vector<16x128xf32>
    %709 = arith.mulf %708, %676 : vector<16x128xf32>
    %cst_544 = arith.constant dense<0.000000e+00> : vector<128xf32>
    %710 = vector.multi_reduction <add>, %709, %cst_544 [0] : vector<16x128xf32> to vector<128xf32>
    %711 = vector.shape_cast %710 : vector<128xf32> to vector<1x128xf32>
    %712 = arith.addf %552, %711 : vector<1x128xf32>
    %c3_545 = arith.constant 3 : index
    %c6_546 = arith.constant 6 : index
    %c0_547 = arith.constant 0 : index
    %c0_548 = arith.constant 0 : index
    %713 = vector.load %arg4[%c3_545, %c6_546, %c0_547, %c0_548] : memref<4x16x16x128xf32, #tpu.memory_space<vmem>>, vector<1x1x16x128xf32>
    %714 = vector.shape_cast %713 : vector<1x1x16x128xf32> to vector<16x128xf32>
    %715 = arith.mulf %714, %676 : vector<16x128xf32>
    %cst_549 = arith.constant dense<0.000000e+00> : vector<128xf32>
    %716 = vector.multi_reduction <add>, %715, %cst_549 [0] : vector<16x128xf32> to vector<128xf32>
    %717 = vector.shape_cast %716 : vector<128xf32> to vector<1x128xf32>
    %718 = arith.addf %546, %717 : vector<1x128xf32>
    %c3_550 = arith.constant 3 : index
    %c7_551 = arith.constant 7 : index
    %c0_552 = arith.constant 0 : index
    %c0_553 = arith.constant 0 : index
    %719 = vector.load %arg4[%c3_550, %c7_551, %c0_552, %c0_553] : memref<4x16x16x128xf32, #tpu.memory_space<vmem>>, vector<1x1x16x128xf32>
    %720 = vector.shape_cast %719 : vector<1x1x16x128xf32> to vector<16x128xf32>
    %721 = arith.mulf %720, %676 : vector<16x128xf32>
    %cst_554 = arith.constant dense<0.000000e+00> : vector<128xf32>
    %722 = vector.multi_reduction <add>, %721, %cst_554 [0] : vector<16x128xf32> to vector<128xf32>
    %723 = vector.shape_cast %722 : vector<128xf32> to vector<1x128xf32>
    %724 = arith.addf %540, %723 : vector<1x128xf32>
    %c3_555 = arith.constant 3 : index
    %c8_556 = arith.constant 8 : index
    %c0_557 = arith.constant 0 : index
    %c0_558 = arith.constant 0 : index
    %725 = vector.load %arg4[%c3_555, %c8_556, %c0_557, %c0_558] : memref<4x16x16x128xf32, #tpu.memory_space<vmem>>, vector<1x1x16x128xf32>
    %726 = vector.shape_cast %725 : vector<1x1x16x128xf32> to vector<16x128xf32>
    %727 = arith.mulf %726, %676 : vector<16x128xf32>
    %cst_559 = arith.constant dense<0.000000e+00> : vector<128xf32>
    %728 = vector.multi_reduction <add>, %727, %cst_559 [0] : vector<16x128xf32> to vector<128xf32>
    %729 = vector.shape_cast %728 : vector<128xf32> to vector<1x128xf32>
    %730 = arith.addf %534, %729 : vector<1x128xf32>
    %c3_560 = arith.constant 3 : index
    %c9_561 = arith.constant 9 : index
    %c0_562 = arith.constant 0 : index
    %c0_563 = arith.constant 0 : index
    %731 = vector.load %arg4[%c3_560, %c9_561, %c0_562, %c0_563] : memref<4x16x16x128xf32, #tpu.memory_space<vmem>>, vector<1x1x16x128xf32>
    %732 = vector.shape_cast %731 : vector<1x1x16x128xf32> to vector<16x128xf32>
    %733 = arith.mulf %732, %676 : vector<16x128xf32>
    %cst_564 = arith.constant dense<0.000000e+00> : vector<128xf32>
    %734 = vector.multi_reduction <add>, %733, %cst_564 [0] : vector<16x128xf32> to vector<128xf32>
    %735 = vector.shape_cast %734 : vector<128xf32> to vector<1x128xf32>
    %736 = arith.addf %528, %735 : vector<1x128xf32>
    %c3_565 = arith.constant 3 : index
    %c10_566 = arith.constant 10 : index
    %c0_567 = arith.constant 0 : index
    %c0_568 = arith.constant 0 : index
    %737 = vector.load %arg4[%c3_565, %c10_566, %c0_567, %c0_568] : memref<4x16x16x128xf32, #tpu.memory_space<vmem>>, vector<1x1x16x128xf32>
    %738 = vector.shape_cast %737 : vector<1x1x16x128xf32> to vector<16x128xf32>
    %739 = arith.mulf %738, %676 : vector<16x128xf32>
    %cst_569 = arith.constant dense<0.000000e+00> : vector<128xf32>
    %740 = vector.multi_reduction <add>, %739, %cst_569 [0] : vector<16x128xf32> to vector<128xf32>
    %741 = vector.shape_cast %740 : vector<128xf32> to vector<1x128xf32>
    %742 = arith.addf %522, %741 : vector<1x128xf32>
    %c3_570 = arith.constant 3 : index
    %c11_571 = arith.constant 11 : index
    %c0_572 = arith.constant 0 : index
    %c0_573 = arith.constant 0 : index
    %743 = vector.load %arg4[%c3_570, %c11_571, %c0_572, %c0_573] : memref<4x16x16x128xf32, #tpu.memory_space<vmem>>, vector<1x1x16x128xf32>
    %744 = vector.shape_cast %743 : vector<1x1x16x128xf32> to vector<16x128xf32>
    %745 = arith.mulf %744, %676 : vector<16x128xf32>
    %cst_574 = arith.constant dense<0.000000e+00> : vector<128xf32>
    %746 = vector.multi_reduction <add>, %745, %cst_574 [0] : vector<16x128xf32> to vector<128xf32>
    %747 = vector.shape_cast %746 : vector<128xf32> to vector<1x128xf32>
    %748 = arith.addf %516, %747 : vector<1x128xf32>
    %c3_575 = arith.constant 3 : index
    %c12_576 = arith.constant 12 : index
    %c0_577 = arith.constant 0 : index
    %c0_578 = arith.constant 0 : index
    %749 = vector.load %arg4[%c3_575, %c12_576, %c0_577, %c0_578] : memref<4x16x16x128xf32, #tpu.memory_space<vmem>>, vector<1x1x16x128xf32>
    %750 = vector.shape_cast %749 : vector<1x1x16x128xf32> to vector<16x128xf32>
    %751 = arith.mulf %750, %676 : vector<16x128xf32>
    %cst_579 = arith.constant dense<0.000000e+00> : vector<128xf32>
    %752 = vector.multi_reduction <add>, %751, %cst_579 [0] : vector<16x128xf32> to vector<128xf32>
    %753 = vector.shape_cast %752 : vector<128xf32> to vector<1x128xf32>
    %754 = arith.addf %510, %753 : vector<1x128xf32>
    %c3_580 = arith.constant 3 : index
    %c13_581 = arith.constant 13 : index
    %c0_582 = arith.constant 0 : index
    %c0_583 = arith.constant 0 : index
    %755 = vector.load %arg4[%c3_580, %c13_581, %c0_582, %c0_583] : memref<4x16x16x128xf32, #tpu.memory_space<vmem>>, vector<1x1x16x128xf32>
    %756 = vector.shape_cast %755 : vector<1x1x16x128xf32> to vector<16x128xf32>
    %757 = arith.mulf %756, %676 : vector<16x128xf32>
    %cst_584 = arith.constant dense<0.000000e+00> : vector<128xf32>
    %758 = vector.multi_reduction <add>, %757, %cst_584 [0] : vector<16x128xf32> to vector<128xf32>
    %759 = vector.shape_cast %758 : vector<128xf32> to vector<1x128xf32>
    %760 = arith.addf %504, %759 : vector<1x128xf32>
    %c3_585 = arith.constant 3 : index
    %c14_586 = arith.constant 14 : index
    %c0_587 = arith.constant 0 : index
    %c0_588 = arith.constant 0 : index
    %761 = vector.load %arg4[%c3_585, %c14_586, %c0_587, %c0_588] : memref<4x16x16x128xf32, #tpu.memory_space<vmem>>, vector<1x1x16x128xf32>
    %762 = vector.shape_cast %761 : vector<1x1x16x128xf32> to vector<16x128xf32>
    %763 = arith.mulf %762, %676 : vector<16x128xf32>
    %cst_589 = arith.constant dense<0.000000e+00> : vector<128xf32>
    %764 = vector.multi_reduction <add>, %763, %cst_589 [0] : vector<16x128xf32> to vector<128xf32>
    %765 = vector.shape_cast %764 : vector<128xf32> to vector<1x128xf32>
    %766 = arith.addf %498, %765 : vector<1x128xf32>
    %c3_590 = arith.constant 3 : index
    %c15_591 = arith.constant 15 : index
    %c0_592 = arith.constant 0 : index
    %c0_593 = arith.constant 0 : index
    %767 = vector.load %arg4[%c3_590, %c15_591, %c0_592, %c0_593] : memref<4x16x16x128xf32, #tpu.memory_space<vmem>>, vector<1x1x16x128xf32>
    %768 = vector.shape_cast %767 : vector<1x1x16x128xf32> to vector<16x128xf32>
    %769 = arith.mulf %768, %676 : vector<16x128xf32>
    %cst_594 = arith.constant dense<0.000000e+00> : vector<128xf32>
    %770 = vector.multi_reduction <add>, %769, %cst_594 [0] : vector<16x128xf32> to vector<128xf32>
    %771 = vector.shape_cast %770 : vector<128xf32> to vector<1x128xf32>
    %772 = arith.addf %492, %771 : vector<1x128xf32>
    %c3_595 = arith.constant 3 : index
    %c0_596 = arith.constant 0 : index
    %c0_597 = arith.constant 0 : index
    %773 = vector.load %arg7[%c3_595, %c0_596, %c0_597] : memref<4x16x128xf32, #tpu.memory_space<vmem>>, vector<1x16x128xf32>
    %774 = vector.shape_cast %773 : vector<1x16x128xf32> to vector<16x128xf32>
    %775 = arith.mulf %676, %676 : vector<16x128xf32>
    %cst_598 = arith.constant 1.000000e+00 : f32
    %776 = vector.broadcast %cst_598 : f32 to vector<16x128xf32>
    %777 = arith.subf %776, %775 : vector<16x128xf32>
    %778 = arith.mulf %774, %777 : vector<16x128xf32>
    %cst_599 = arith.constant 1.000000e+00 : f32
    %779 = vector.broadcast %cst_599 : f32 to vector<16x128xf32>
    %780 = arith.addf %778, %779 : vector<16x128xf32>
    %781 = math.absf %780 : vector<16x128xf32>
    %782 = math.log %781 : vector<16x128xf32>
    %783 = arith.addf %593, %782 : vector<16x128xf32>
    %784 = tpu.concatenate %772, %766, %760, %754, %748, %742, %736, %730, %724, %718, %712, %706, %700, %694, %688, %682 in 0 : vector<1x128xf32>, vector<1x128xf32>, vector<1x128xf32>, vector<1x128xf32>, vector<1x128xf32>, vector<1x128xf32>, vector<1x128xf32>, vector<1x128xf32>, vector<1x128xf32>, vector<1x128xf32>, vector<1x128xf32>, vector<1x128xf32>, vector<1x128xf32>, vector<1x128xf32>, vector<1x128xf32>, vector<1x128xf32> -> vector<16x128xf32>
    %c0_600 = arith.constant 0 : index
    %c0_601 = arith.constant 0 : index
    %785 = vector.load %arg9[%c0_600, %c0_601] : memref<16x128xf32, #tpu.memory_space<vmem>>, vector<16x128xf32>
    tpu.vector_store %arg9[%c0_600, %c0_601], %784 {strides = array<i32>} : memref<16x128xf32, #tpu.memory_space<vmem>>, vector<16x128xf32>,
    %cst_602 = arith.constant dense<0.000000e+00> : vector<128xf32>
    %786 = vector.multi_reduction <add>, %783, %cst_602 [0] : vector<16x128xf32> to vector<128xf32>
    %787 = vector.shape_cast %786 : vector<128xf32> to vector<1x128xf32>
    %c0_603 = arith.constant 0 : index
    %c0_604 = arith.constant 0 : index
    %788 = vector.load %arg10[%c0_603, %c0_604] : memref<1x128xf32, #tpu.memory_space<vmem>>, vector<1x128xf32>
    tpu.vector_store %arg10[%c0_603, %c0_604], %787 {strides = array<i32>} : memref<1x128xf32, #tpu.memory_space<vmem>>, vector<1x128xf32>,
    return
  }
  func.func @transform_0(%arg0: i32) -> (i32, i32) {
    %c0_i32 = arith.constant 0 : i32
    %c0_i32_0 = arith.constant 0 : i32
    return %c0_i32, %arg0 : i32, i32
  }
  func.func @transform_1(%arg0: i32) -> (i32, i32) {
    %c0_i32 = arith.constant 0 : i32
    %c0_i32_0 = arith.constant 0 : i32
    return %c0_i32, %arg0 : i32, i32
  }
  func.func @transform_2(%arg0: i32) -> (i32, i32) {
    %c0_i32 = arith.constant 0 : i32
    %c0_i32_0 = arith.constant 0 : i32
    return %c0_i32, %arg0 : i32, i32
  }
  func.func @transform_3(%arg0: i32) -> (i32, i32, i32, i32) {
    %c0_i32 = arith.constant 0 : i32
    %c0_i32_0 = arith.constant 0 : i32
    %c0_i32_1 = arith.constant 0 : i32
    %c0_i32_2 = arith.constant 0 : i32
    return %c0_i32, %c0_i32_0, %c0_i32_1, %arg0 : i32, i32, i32, i32
  }
  func.func @transform_4(%arg0: i32) -> (i32, i32, i32, i32) {
    %c0_i32 = arith.constant 0 : i32
    %c0_i32_0 = arith.constant 0 : i32
    %c0_i32_1 = arith.constant 0 : i32
    %c0_i32_2 = arith.constant 0 : i32
    return %c0_i32, %c0_i32_0, %c0_i32_1, %arg0 : i32, i32, i32, i32
  }
  func.func @transform_5(%arg0: i32) -> (i32, i32, i32) {
    %c0_i32 = arith.constant 0 : i32
    %c0_i32_0 = arith.constant 0 : i32
    %c0_i32_1 = arith.constant 0 : i32
    return %c0_i32, %c0_i32_0, %arg0 : i32, i32, i32
  }
  func.func @transform_6(%arg0: i32) -> (i32, i32, i32) {
    %c0_i32 = arith.constant 0 : i32
    %c0_i32_0 = arith.constant 0 : i32
    %c0_i32_1 = arith.constant 0 : i32
    return %c0_i32, %c0_i32_0, %arg0 : i32, i32, i32
  }
  func.func @transform_7(%arg0: i32) -> (i32, i32) {
    %c0_i32 = arith.constant 0 : i32
    %c0_i32_0 = arith.constant 0 : i32
    return %c0_i32, %arg0 : i32, i32
  }
  func.func @transform_8(%arg0: i32) -> (i32, i32) {
    %c0_i32 = arith.constant 0 : i32
    %c0_i32_0 = arith.constant 0 : i32
    return %c0_i32, %arg0 : i32, i32
  }
  func.func @transform_9(%arg0: i32) -> (i32, i32) {
    %c0_i32 = arith.constant 0 : i32
    %c0_i32_0 = arith.constant 0 : i32
    return %c0_i32, %arg0 : i32, i32
  }
}

</mosaic_0001>

<llo_original>
// kernel: tpu_custom_call.1
$region0: #{tpu_custom_call.1}
  #allocation0 [shape = 'u32[]', space=smem, size = 0x4, offset = 0x4, fixed_abs, tag = 'smem constant byte address 0x4 - core index']
  #allocation1 [shape = 'u32[72,128]{1,0:T(1,128)}', space=vmem, size = 0x9000, scoped, tag = 'internal scratch']
  %s0 = inlined_call_operand.hbm [shape: f32[16,256], index: 0, kind: input, shape index: {}]
  %s1 = inlined_call_operand.hbm [shape: f32[16,256], index: 1, kind: input, shape index: {}]
  %s2 = inlined_call_operand.hbm [shape: f32[16,256], index: 2, kind: input, shape index: {}]
  %s3 = inlined_call_operand.hbm [shape: f32[4,16,16,256], index: 3, kind: input, shape index: {}]
  %s4 = inlined_call_operand.hbm [shape: f32[4,16,16,256], index: 4, kind: input, shape index: {}]
  %s5 = inlined_call_operand.hbm [shape: f32[4,16,256], index: 5, kind: input, shape index: {}]
  %s6 = inlined_call_operand.hbm [shape: f32[4,16,256], index: 6, kind: input, shape index: {}]
  %s7 = inlined_call_operand.hbm [shape: f32[16,256], index: 7, kind: output, shape index: {0}]
  %s8 = inlined_call_operand.hbm [shape: f32[16,256], index: 8, kind: output, shape index: {1}]
  %s9 = inlined_call_operand.hbm [shape: f32[1,256], index: 9, kind: output, shape index: {2}]
  %10 = xla_tuple %s7, %s8, %s9
  %s11 = sld [smem:[#allocation0]]
  $region105: #{tpu_custom_call.1} parent=0
    _
  %s13 = ssub.s32 1, %s11
  %s14 = scalar_select 0, %s13, %s11
  $region1: #{tpu_custom_call.1} parent=0
    #allocation2 [shape = 'u8[16384]{0}', space=vmem, size = 0x4000, scoped, tag = 'input window, operand 0']
    #allocation3 [shape = 's32[2]{0}', space=sflag, size = 0x8, scoped, tag = 'scoped memory for tpu_custom_call.1']
    #allocation4 [shape = 's32[2]{0}', space=sflag, size = 0x8, scoped, tag = 'scoped memory for tpu_custom_call.1']
    #allocation5 [shape = 'u8[16384]{0}', space=vmem, size = 0x4000, scoped, tag = 'input window, operand 1']
    #allocation6 [shape = 's32[2]{0}', space=sflag, size = 0x8, scoped, tag = 'scoped memory for tpu_custom_call.1']
    #allocation7 [shape = 'u8[16384]{0}', space=vmem, size = 0x4000, scoped, tag = 'input window, operand 2']
    #allocation8 [shape = 'u8[1048576]{0}', space=vmem, size = 0x100000, scoped, tag = 'input window, operand 3']
    #allocation9 [shape = 's32[2]{0}', space=sflag, size = 0x8, scoped, tag = 'scoped memory for tpu_custom_call.1']
    #allocation10 [shape = 'u8[1048576]{0}', space=vmem, size = 0x100000, scoped, tag = 'input window, operand 4']
    #allocation11 [shape = 'u8[65536]{0}', space=vmem, size = 0x10000, scoped, tag = 'input window, operand 5']
    #allocation12 [shape = 's32[2]{0}', space=sflag, size = 0x8, scoped, tag = 'scoped memory for tpu_custom_call.1']
    #allocation13 [shape = 'u8[65536]{0}', space=vmem, size = 0x10000, scoped, tag = 'input window, operand 6']
    #allocation14 [shape = 'u8[16384]{0}', space=vmem, size = 0x4000, scoped, tag = 'output window, operand 0']
    #allocation15 [shape = 'u8[16384]{0}', space=vmem, size = 0x4000, scoped, tag = 'output window, operand 1']
    #allocation16 [shape = 's32[2]{0}', space=sflag, size = 0x8, scoped, tag = 'scoped memory for tpu_custom_call.1']
    #allocation17 [shape = 'u8[1024]{0}', space=vmem, size = 0x400, scoped, tag = 'output window, operand 2']
    %15 = vsyncpa [#allocation3], 0
    %s16 = scalar_lea.sflag [#allocation3], 1
    %17 = vsyncpa %s16, 0
    %18 = vsyncpa [#allocation6], 0
    %s19 = scalar_lea.sflag [#allocation6], 1
    %20 = vsyncpa %s19, 0
    %21 = vsyncpa [#allocation9], 0
    %s22 = scalar_lea.sflag [#allocation9], 1
    %23 = vsyncpa %s22, 0
    %24 = vsyncpa [#allocation12], 0
    %s25 = scalar_lea.sflag [#allocation12], 1
    %26 = vsyncpa %s25, 0
    %27 = vsyncpa [#allocation4], 0
    %s28 = scalar_lea.sflag [#allocation4], 1
    %29 = vsyncpa %s28, 0
    %30 = vsyncpa [#allocation16], 0
    %s31 = scalar_lea.sflag [#allocation16], 1
    %32 = vsyncpa %s31, 0
    loop: start=0, step=1, limit=4
    $region2: #{tpu_custom_call.1} parent=1 // loop_pre_header
      _
    $region3: #{tpu_custom_call.1} parent=1 // loop_header
      %s34 = sphi 0, %s38
      %p35 = scmp.ge.s32.totalorder %s34, 4
      %s44 = sphi 0, %s46
      %s47 = sphi 0, %s44
      %s48 = sphi 0, %s47
      %s64 = sphi 0, %s48
      %s70 = sphi 0, %s72
      %s73 = sphi 0, %s70
      %s74 = sphi 0, %s73
      %s90 = sphi 0, %s74
      %s96 = sphi 0, %s98
      %s99 = sphi 0, %s96
      %s100 = sphi 0, %s99
      %s116 = sphi 0, %s100
      %s122 = sphi 0, %s124
      %s125 = sphi 0, %s122
      %s126 = sphi 0, %s125
      %s142 = sphi 0, %s126
      %s148 = sphi 0, %s150
      %s151 = sphi 0, %s148
      %s152 = sphi 0, %s151
      %s168 = sphi 0, %s152
      %s174 = sphi 0, %s176
      %s177 = sphi 0, %s174
      %s178 = sphi 0, %s177
      %s194 = sphi 0, %s178
      %s200 = sphi 0, %s202
      %s203 = sphi 0, %s200
      %s204 = sphi 0, %s203
      %s220 = sphi 0, %s204
      %s226 = sphi 0, %s228
      %s229 = sphi 0, %s226
      %s230 = sphi 0, %s229
      %s246 = sphi 0, %s230
      %s252 = sphi 0, %s254
      %s255 = sphi 0, %s252
      %s256 = sphi 0, %s255
      %s272 = sphi 0, %s256
      %s278 = sphi 0, %s280
      %s281 = sphi 0, %s278
      %s282 = sphi 0, %s281
      %s298 = sphi 0, %s282
    $region4: #{tpu_custom_call.1} parent=1 // loop_header_branch
      %37 = sbr.rel (%p35) target = $region8
    $region5: #{tpu_custom_call.1} parent=1 // loop_body
      %s39 = ssub.s32 %s34, 1
      %s40 = ssub.s32 %s34, 2
      %s41 = sadd.s32 %s34, 1
      %s42 = ssub.s32 %s34, %s41
      %p43 = scmp.eq.s32.totalorder %s42, 0
      %s45 = sadd.s32 %s44, 1
      %s46 = scalar_select %p43, %s44, %s45
      %p49 = pneg %p43
      %p50 = scmp.eq.s32.totalorder %s34, 1
      %p51 = por %p49, %p50
      %p52 = scmp.ne.s32.totalorder %s44, %s47
      %p53 = scmp.eq.s32.totalorder %s34, 0
      %p54 = por %p52, %p53
      %p55 = scmp.ne.s32.totalorder %s44, %s47
      %p56 = scmp.eq.s32.totalorder %s39, 1
      %p57 = por %p55, %p56
      %p58 = scmp.ne.s32.totalorder %s47, %s48
      %p59 = scmp.eq.s32.totalorder %s39, 0
      %p60 = por %p58, %p59
      %p61 = scmp.ne.s32.totalorder %s47, %s48
      %p62 = scmp.eq.s32.totalorder %s40, 1
      %p63 = por %p61, %p62
      %p65 = scmp.ne.s32.totalorder %s48, %s64
      %p66 = scmp.eq.s32.totalorder %s40, 0
      %p67 = por %p65, %p66
      %s68 = ssub.s32 %s34, %s41
      %p69 = scmp.eq.s32.totalorder %s68, 0
      %s71 = sadd.s32 %s70, 1
      %s72 = scalar_select %p69, %s70, %s71
      %p75 = pneg %p69
      %p76 = scmp.eq.s32.totalorder %s34, 1
      %p77 = por %p75, %p76
      %p78 = scmp.ne.s32.totalorder %s70, %s73
      %p79 = scmp.eq.s32.totalorder %s34, 0
      %p80 = por %p78, %p79
      %p81 = scmp.ne.s32.totalorder %s70, %s73
      %p82 = scmp.eq.s32.totalorder %s39, 1
      %p83 = por %p81, %p82
      %p84 = scmp.ne.s32.totalorder %s73, %s74
      %p85 = scmp.eq.s32.totalorder %s39, 0
      %p86 = por %p84, %p85
      %p87 = scmp.ne.s32.totalorder %s73, %s74
      %p88 = scmp.eq.s32.totalorder %s40, 1
      %p89 = por %p87, %p88
      %p91 = scmp.ne.s32.totalorder %s74, %s90
      %p92 = scmp.eq.s32.totalorder %s40, 0
      %p93 = por %p91, %p92
      %s94 = ssub.s32 %s34, %s41
      %p95 = scmp.eq.s32.totalorder %s94, 0
      %s97 = sadd.s32 %s96, 1
      %s98 = scalar_select %p95, %s96, %s97
      %p101 = pneg %p95
      %p102 = scmp.eq.s32.totalorder %s34, 1
      %p103 = por %p101, %p102
      %p104 = scmp.ne.s32.totalorder %s96, %s99
      %p105 = scmp.eq.s32.totalorder %s34, 0
      %p106 = por %p104, %p105
      %p107 = scmp.ne.s32.totalorder %s96, %s99
      %p108 = scmp.eq.s32.totalorder %s39, 1
      %p109 = por %p107, %p108
      %p110 = scmp.ne.s32.totalorder %s99, %s100
      %p111 = scmp.eq.s32.totalorder %s39, 0
      %p112 = por %p110, %p111
      %p113 = scmp.ne.s32.totalorder %s99, %s100
      %p114 = scmp.eq.s32.totalorder %s40, 1
      %p115 = por %p113, %p114
      %p117 = scmp.ne.s32.totalorder %s100, %s116
      %p118 = scmp.eq.s32.totalorder %s40, 0
      %p119 = por %p117, %p118
      %s120 = ssub.s32 %s34, %s41
      %p121 = scmp.eq.s32.totalorder %s120, 0
      %s123 = sadd.s32 %s122, 1
      %s124 = scalar_select %p121, %s122, %s123
      %p127 = pneg %p121
      %p128 = scmp.eq.s32.totalorder %s34, 1
      %p129 = por %p127, %p128
      %p130 = scmp.ne.s32.totalorder %s122, %s125
      %p131 = scmp.eq.s32.totalorder %s34, 0
      %p132 = por %p130, %p131
      %p133 = scmp.ne.s32.totalorder %s122, %s125
      %p134 = scmp.eq.s32.totalorder %s39, 1
      %p135 = por %p133, %p134
      %p136 = scmp.ne.s32.totalorder %s125, %s126
      %p137 = scmp.eq.s32.totalorder %s39, 0
      %p138 = por %p136, %p137
      %p139 = scmp.ne.s32.totalorder %s125, %s126
      %p140 = scmp.eq.s32.totalorder %s40, 1
      %p141 = por %p139, %p140
      %p143 = scmp.ne.s32.totalorder %s126, %s142
      %p144 = scmp.eq.s32.totalorder %s40, 0
      %p145 = por %p143, %p144
      %s146 = ssub.s32 %s34, %s41
      %p147 = scmp.eq.s32.totalorder %s146, 0
      %s149 = sadd.s32 %s148, 1
      %s150 = scalar_select %p147, %s148, %s149
      %p153 = pneg %p147
      %p154 = scmp.eq.s32.totalorder %s34, 1
      %p155 = por %p153, %p154
      %p156 = scmp.ne.s32.totalorder %s148, %s151
      %p157 = scmp.eq.s32.totalorder %s34, 0
      %p158 = por %p156, %p157
      %p159 = scmp.ne.s32.totalorder %s148, %s151
      %p160 = scmp.eq.s32.totalorder %s39, 1
      %p161 = por %p159, %p160
      %p162 = scmp.ne.s32.totalorder %s151, %s152
      %p163 = scmp.eq.s32.totalorder %s39, 0
      %p164 = por %p162, %p163
      %p165 = scmp.ne.s32.totalorder %s151, %s152
      %p166 = scmp.eq.s32.totalorder %s40, 1
      %p167 = por %p165, %p166
      %p169 = scmp.ne.s32.totalorder %s152, %s168
      %p170 = scmp.eq.s32.totalorder %s40, 0
      %p171 = por %p169, %p170
      %s172 = ssub.s32 %s34, %s41
      %p173 = scmp.eq.s32.totalorder %s172, 0
      %s175 = sadd.s32 %s174, 1
      %s176 = scalar_select %p173, %s174, %s175
      %p179 = pneg %p173
      %p180 = scmp.eq.s32.totalorder %s34, 1
      %p181 = por %p179, %p180
      %p182 = scmp.ne.s32.totalorder %s174, %s177
      %p183 = scmp.eq.s32.totalorder %s34, 0
      %p184 = por %p182, %p183
      %p185 = scmp.ne.s32.totalorder %s174, %s177
      %p186 = scmp.eq.s32.totalorder %s39, 1
      %p187 = por %p185, %p186
      %p188 = scmp.ne.s32.totalorder %s177, %s178
      %p189 = scmp.eq.s32.totalorder %s39, 0
      %p190 = por %p188, %p189
      %p191 = scmp.ne.s32.totalorder %s177, %s178
      %p192 = scmp.eq.s32.totalorder %s40, 1
      %p193 = por %p191, %p192
      %p195 = scmp.ne.s32.totalorder %s178, %s194
      %p196 = scmp.eq.s32.totalorder %s40, 0
      %p197 = por %p195, %p196
      %s198 = ssub.s32 %s34, %s41
      %p199 = scmp.eq.s32.totalorder %s198, 0
      %s201 = sadd.s32 %s200, 1
      %s202 = scalar_select %p199, %s200, %s201
      %p205 = pneg %p199
      %p206 = scmp.eq.s32.totalorder %s34, 1
      %p207 = por %p205, %p206
      %p208 = scmp.ne.s32.totalorder %s200, %s203
      %p209 = scmp.eq.s32.totalorder %s34, 0
      %p210 = por %p208, %p209
      %p211 = scmp.ne.s32.totalorder %s200, %s203
      %p212 = scmp.eq.s32.totalorder %s39, 1
      %p213 = por %p211, %p212
      %p214 = scmp.ne.s32.totalorder %s203, %s204
      %p215 = scmp.eq.s32.totalorder %s39, 0
      %p216 = por %p214, %p215
      %p217 = scmp.ne.s32.totalorder %s203, %s204
      %p218 = scmp.eq.s32.totalorder %s40, 1
      %p219 = por %p217, %p218
      %p221 = scmp.ne.s32.totalorder %s204, %s220
      %p222 = scmp.eq.s32.totalorder %s40, 0
      %p223 = por %p221, %p222
      %s224 = ssub.s32 %s34, %s41
      %p225 = scmp.eq.s32.totalorder %s224, 0
      %s227 = sadd.s32 %s226, 1
      %s228 = scalar_select %p225, %s226, %s227
      %p231 = pneg %p225
      %p232 = scmp.eq.s32.totalorder %s34, 1
      %p233 = por %p231, %p232
      %p234 = scmp.ne.s32.totalorder %s226, %s229
      %p235 = scmp.eq.s32.totalorder %s34, 0
      %p236 = por %p234, %p235
      %p237 = scmp.ne.s32.totalorder %s226, %s229
      %p238 = scmp.eq.s32.totalorder %s39, 1
      %p239 = por %p237, %p238
      %p240 = scmp.ne.s32.totalorder %s229, %s230
      %p241 = scmp.eq.s32.totalorder %s39, 0
      %p242 = por %p240, %p241
      %p243 = scmp.ne.s32.totalorder %s229, %s230
      %p244 = scmp.eq.s32.totalorder %s40, 1
      %p245 = por %p243, %p244
      %p247 = scmp.ne.s32.totalorder %s230, %s246
      %p248 = scmp.eq.s32.totalorder %s40, 0
      %p249 = por %p247, %p248
      %s250 = ssub.s32 %s34, %s41
      %p251 = scmp.eq.s32.totalorder %s250, 0
      %s253 = sadd.s32 %s252, 1
      %s254 = scalar_select %p251, %s252, %s253
      %p257 = pneg %p251
      %p258 = scmp.eq.s32.totalorder %s34, 1
      %p259 = por %p257, %p258
      %p260 = scmp.ne.s32.totalorder %s252, %s255
      %p261 = scmp.eq.s32.totalorder %s34, 0
      %p262 = por %p260, %p261
      %p263 = scmp.ne.s32.totalorder %s252, %s255
      %p264 = scmp.eq.s32.totalorder %s39, 1
      %p265 = por %p263, %p264
      %p266 = scmp.ne.s32.totalorder %s255, %s256
      %p267 = scmp.eq.s32.totalorder %s39, 0
      %p268 = por %p266, %p267
      %p269 = scmp.ne.s32.totalorder %s255, %s256
      %p270 = scmp.eq.s32.totalorder %s40, 1
      %p271 = por %p269, %p270
      %p273 = scmp.ne.s32.totalorder %s256, %s272
      %p274 = scmp.eq.s32.totalorder %s40, 0
      %p275 = por %p273, %p274
      %s276 = ssub.s32 %s34, %s41
      %p277 = scmp.eq.s32.totalorder %s276, 0
      %s279 = sadd.s32 %s278, 1
      %s280 = scalar_select %p277, %s278, %s279
      %p283 = pneg %p277
      %p284 = scmp.eq.s32.totalorder %s34, 1
      %p285 = por %p283, %p284
      %p286 = scmp.ne.s32.totalorder %s278, %s281
      %p287 = scmp.eq.s32.totalorder %s34, 0
      %p288 = por %p286, %p287
      %p289 = scmp.ne.s32.totalorder %s278, %s281
      %p290 = scmp.eq.s32.totalorder %s39, 1
      %p291 = por %p289, %p290
      %p292 = scmp.ne.s32.totalorder %s281, %s282
      %p293 = scmp.eq.s32.totalorder %s39, 0
      %p294 = por %p292, %p293
      %p295 = scmp.ne.s32.totalorder %s281, %s282
      %p296 = scmp.eq.s32.totalorder %s40, 1
      %p297 = por %p295, %p296
      %p299 = scmp.ne.s32.totalorder %s282, %s298
      %p300 = scmp.eq.s32.totalorder %s40, 0
      %p301 = por %p299, %p300
      %p302 = scmp.le.s32.totalorder 1, %s34
      %p303 = scmp.lt.s32.totalorder %s34, 3
      %p304 = pnand %p302, %p303
      %p305 = pneg %p304
      // Predicated region
      $region9: #{tpu_custom_call.1} parent=5 // pred_check
        _
      $region10: #{tpu_custom_call.1} parent=5 // pred_check_branch
        %307 = sbr.rel (%p304) target = $region12
      $region11: #{tpu_custom_call.1} parent=5 // pred_region
        %s308 = ssub.s32 %s34, 1
      $region12: #{tpu_custom_call.1} parent=5 // pred_fallthru
        _
      %p309 = scmp.lt.s32.totalorder %s34, 2
      // Predicated region
      $region13: #{tpu_custom_call.1} parent=5 // pred_check
        %p310 = pneg %p309
      $region14: #{tpu_custom_call.1} parent=5 // pred_check_branch
        %312 = sbr.rel (%p310) target = $region16
      $region15: #{tpu_custom_call.1} parent=5 // pred_region
        // Predicated region
        $region17: #{tpu_custom_call.1} parent=15 // pred_check
          %p313 = pneg %p54
        $region18: #{tpu_custom_call.1} parent=15 // pred_check_branch
          %315 = sbr.rel (%p313) target = $region20
        $region19: #{tpu_custom_call.1} parent=15 // pred_region
          %s316 = sand.u32 %s44, 1
          %s317 = scalar_lea.sflag [#allocation3], %s316
          %s318 = sand.u32 %s44, 1
          %s319 = smul.addr %s318, 16
          %s320 = scalar_lea.vmem [#allocation2], %s319
          %322 = vsyncadd %s317, 0
          %s323 = smul.addr %s34, 8
          %s324 = scalar_lea.hbm %s0, %s323
          %s325 = sshll.u32 %s324, 4
          %s326 = int_to_ptr.hbm [resolvable:$true] %s325
          %s327 = sshll.u32 %s320, 4
          %s328 = int_to_ptr.vmem [resolvable:$true] %s327
          %333 = dma.hbm_to_vmem [thread:$0]  %s326, 256, %s328, %s317, 256, 128, 8
        $region20: #{tpu_custom_call.1} parent=15 // pred_fallthru
          _
        // Predicated region
        $region21: #{tpu_custom_call.1} parent=15 // pred_check
          %p334 = pneg %p80
        $region22: #{tpu_custom_call.1} parent=15 // pred_check_branch
          %336 = sbr.rel (%p334) target = $region24
        $region23: #{tpu_custom_call.1} parent=15 // pred_region
          %s337 = sand.u32 %s34, 1
          %s338 = scalar_lea.sflag [#allocation6], %s337
          %s339 = sand.u32 %s70, 1
          %s340 = smul.addr %s339, 16
          %s341 = scalar_lea.vmem [#allocation5], %s340
          %343 = vsyncadd %s338, 0
          %s344 = smul.addr %s34, 8
          %s345 = scalar_lea.hbm %s1, %s344
          %s346 = sshll.u32 %s345, 4
          %s347 = int_to_ptr.hbm [resolvable:$true] %s346
          %s348 = sshll.u32 %s341, 4
          %s349 = int_to_ptr.vmem [resolvable:$true] %s348
          %354 = dma.hbm_to_vmem [thread:$0]  %s347, 256, %s349, %s338, 256, 128, 8
        $region24: #{tpu_custom_call.1} parent=15 // pred_fallthru
          _
        // Predicated region
        $region25: #{tpu_custom_call.1} parent=15 // pred_check
          %p355 = pneg %p106
        $region26: #{tpu_custom_call.1} parent=15 // pred_check_branch
          %357 = sbr.rel (%p355) target = $region28
        $region27: #{tpu_custom_call.1} parent=15 // pred_region
          %s358 = sand.u32 %s34, 1
          %s359 = scalar_lea.sflag [#allocation6], %s358
          %s360 = sand.u32 %s96, 1
          %s361 = smul.addr %s360, 16
          %s362 = scalar_lea.vmem [#allocation7], %s361
          %364 = vsyncadd %s359, 0
          %s365 = smul.addr %s34, 8
          %s366 = scalar_lea.hbm %s2, %s365
          %s367 = sshll.u32 %s366, 4
          %s368 = int_to_ptr.hbm [resolvable:$true] %s367
          %s369 = sshll.u32 %s362, 4
          %s370 = int_to_ptr.vmem [resolvable:$true] %s369
          %375 = dma.hbm_to_vmem [thread:$0]  %s368, 256, %s370, %s359, 256, 128, 8
        $region28: #{tpu_custom_call.1} parent=15 // pred_fallthru
          _
        // Predicated region
        $region29: #{tpu_custom_call.1} parent=15 // pred_check
          %p376 = pneg %p132
        $region30: #{tpu_custom_call.1} parent=15 // pred_check_branch
          %378 = sbr.rel (%p376) target = $region32
        $region31: #{tpu_custom_call.1} parent=15 // pred_region
          %s379 = sand.u32 %s34, 1
          %s380 = scalar_lea.sflag [#allocation9], %s379
          %s381 = sand.u32 %s122, 1
          %s382 = smul.addr %s381, 1024
          %s383 = scalar_lea.vmem [#allocation8], %s382
          %385 = vsyncadd %s380, 0
          %s386 = smul.addr %s34, 8
          %s387 = scalar_lea.hbm %s3, %s386
          %s388 = sshll.u32 %s387, 4
          %s389 = int_to_ptr.hbm [resolvable:$true] %s388
          %s390 = sshll.u32 %s383, 4
          %s391 = int_to_ptr.vmem [resolvable:$true] %s390
          %396 = dma.hbm_to_vmem [thread:$0]  %s389, 16384, %s391, %s380, 256, 128, 8
        $region32: #{tpu_custom_call.1} parent=15 // pred_fallthru
          _
        // Predicated region
        $region33: #{tpu_custom_call.1} parent=15 // pred_check
          %p397 = pneg %p158
        $region34: #{tpu_custom_call.1} parent=15 // pred_check_branch
          %399 = sbr.rel (%p397) target = $region36
        $region35: #{tpu_custom_call.1} parent=15 // pred_region
          %s400 = sand.u32 %s34, 1
          %s401 = scalar_lea.sflag [#allocation9], %s400
          %s402 = sand.u32 %s148, 1
          %s403 = smul.addr %s402, 1024
          %s404 = scalar_lea.vmem [#allocation10], %s403
          %406 = vsyncadd %s401, 0
          %s407 = smul.addr %s34, 8
          %s408 = scalar_lea.hbm %s4, %s407
          %s409 = sshll.u32 %s408, 4
          %s410 = int_to_ptr.hbm [resolvable:$true] %s409
          %s411 = sshll.u32 %s404, 4
          %s412 = int_to_ptr.vmem [resolvable:$true] %s411
          %417 = dma.hbm_to_vmem [thread:$0]  %s410, 16384, %s412, %s401, 256, 128, 8
        $region36: #{tpu_custom_call.1} parent=15 // pred_fallthru
          _
        // Predicated region
        $region37: #{tpu_custom_call.1} parent=15 // pred_check
          %p418 = pneg %p184
        $region38: #{tpu_custom_call.1} parent=15 // pred_check_branch
          %420 = sbr.rel (%p418) target = $region40
        $region39: #{tpu_custom_call.1} parent=15 // pred_region
          %s421 = sand.u32 %s34, 1
          %s422 = scalar_lea.sflag [#allocation12], %s421
          %s423 = sand.u32 %s174, 1
          %s424 = smul.addr %s423, 64
          %s425 = scalar_lea.vmem [#allocation11], %s424
          %427 = vsyncadd %s422, 0
          %s428 = smul.addr %s34, 8
          %s429 = scalar_lea.hbm %s5, %s428
          %s430 = sshll.u32 %s429, 4
          %s431 = int_to_ptr.hbm [resolvable:$true] %s430
          %s432 = sshll.u32 %s425, 4
          %s433 = int_to_ptr.vmem [resolvable:$true] %s432
          %438 = dma.hbm_to_vmem [thread:$0]  %s431, 1024, %s433, %s422, 256, 128, 8
        $region40: #{tpu_custom_call.1} parent=15 // pred_fallthru
          _
        // Predicated region
        $region41: #{tpu_custom_call.1} parent=15 // pred_check
          %p439 = pneg %p210
        $region42: #{tpu_custom_call.1} parent=15 // pred_check_branch
          %441 = sbr.rel (%p439) target = $region44
        $region43: #{tpu_custom_call.1} parent=15 // pred_region
          %s442 = sand.u32 %s34, 1
          %s443 = scalar_lea.sflag [#allocation12], %s442
          %s444 = sand.u32 %s200, 1
          %s445 = smul.addr %s444, 64
          %s446 = scalar_lea.vmem [#allocation13], %s445
          %448 = vsyncadd %s443, 0
          %s449 = smul.addr %s34, 8
          %s450 = scalar_lea.hbm %s6, %s449
          %s451 = sshll.u32 %s450, 4
          %s452 = int_to_ptr.hbm [resolvable:$true] %s451
          %s453 = sshll.u32 %s446, 4
          %s454 = int_to_ptr.vmem [resolvable:$true] %s453
          %459 = dma.hbm_to_vmem [thread:$0]  %s452, 1024, %s454, %s443, 256, 128, 8
        $region44: #{tpu_custom_call.1} parent=15 // pred_fallthru
          _
      $region16: #{tpu_custom_call.1} parent=5 // pred_fallthru
        _
      %p460 = scmp.le.s32.totalorder 1, %s34
      %p461 = scmp.lt.s32.totalorder %s34, 3
      %p462 = pnand %p460, %p461
      %p463 = pneg %p462
      // Predicated region
      $region45: #{tpu_custom_call.1} parent=5 // pred_check
        _
      $region46: #{tpu_custom_call.1} parent=5 // pred_check_branch
        %465 = sbr.rel (%p462) target = $region48
      $region47: #{tpu_custom_call.1} parent=5 // pred_region
        %s466 = ssub.s32 %s34, 1
        %s467 = sand.u32 %s47, 1
        %s468 = scalar_lea.sflag [#allocation3], %s467
        %s469 = sand.u32 %s47, 1
        %s470 = smul.addr %s469, 16
        %s471 = scalar_lea.vmem [#allocation2], %s470
        // Predicated region
        $region49: #{tpu_custom_call.1} parent=47 // pred_check
          %p472 = pneg %p60
        $region50: #{tpu_custom_call.1} parent=47 // pred_check_branch
          %474 = sbr.rel (%p472) target = $region52
        $region51: #{tpu_custom_call.1} parent=47 // pred_region
          %476 = dma.done %s468, 256
        $region52: #{tpu_custom_call.1} parent=47 // pred_fallthru
          _
        %s477 = sand.u32 %s39, 1
        %s478 = scalar_lea.sflag [#allocation6], %s477
        %s479 = sand.u32 %s73, 1
        %s480 = smul.addr %s479, 16
        %s481 = scalar_lea.vmem [#allocation5], %s480
        // Predicated region
        $region53: #{tpu_custom_call.1} parent=47 // pred_check
          %p482 = pneg %p86
        $region54: #{tpu_custom_call.1} parent=47 // pred_check_branch
          %484 = sbr.rel (%p482) target = $region56
        $region55: #{tpu_custom_call.1} parent=47 // pred_region
          %486 = dma.done %s478, 256
        $region56: #{tpu_custom_call.1} parent=47 // pred_fallthru
          _
        %s487 = sand.u32 %s39, 1
        %s488 = scalar_lea.sflag [#allocation6], %s487
        %s489 = sand.u32 %s99, 1
        %s490 = smul.addr %s489, 16
        %s491 = scalar_lea.vmem [#allocation7], %s490
        // Predicated region
        $region57: #{tpu_custom_call.1} parent=47 // pred_check
          %p492 = pneg %p112
        $region58: #{tpu_custom_call.1} parent=47 // pred_check_branch
          %494 = sbr.rel (%p492) target = $region60
        $region59: #{tpu_custom_call.1} parent=47 // pred_region
          %496 = dma.done %s488, 256
        $region60: #{tpu_custom_call.1} parent=47 // pred_fallthru
          _
        %s497 = sand.u32 %s39, 1
        %s498 = scalar_lea.sflag [#allocation9], %s497
        %s499 = sand.u32 %s125, 1
        %s500 = smul.addr %s499, 1024
        %s501 = scalar_lea.vmem [#allocation8], %s500
        // Predicated region
        $region61: #{tpu_custom_call.1} parent=47 // pred_check
          %p502 = pneg %p138
        $region62: #{tpu_custom_call.1} parent=47 // pred_check_branch
          %504 = sbr.rel (%p502) target = $region64
        $region63: #{tpu_custom_call.1} parent=47 // pred_region
          %506 = dma.done %s498, 16384
        $region64: #{tpu_custom_call.1} parent=47 // pred_fallthru
          _
        %s507 = sand.u32 %s39, 1
        %s508 = scalar_lea.sflag [#allocation9], %s507
        %s509 = sand.u32 %s151, 1
        %s510 = smul.addr %s509, 1024
        %s511 = scalar_lea.vmem [#allocation10], %s510
        // Predicated region
        $region65: #{tpu_custom_call.1} parent=47 // pred_check
          %p512 = pneg %p164
        $region66: #{tpu_custom_call.1} parent=47 // pred_check_branch
          %514 = sbr.rel (%p512) target = $region68
        $region67: #{tpu_custom_call.1} parent=47 // pred_region
          %516 = dma.done %s508, 16384
        $region68: #{tpu_custom_call.1} parent=47 // pred_fallthru
          _
        %s517 = sand.u32 %s39, 1
        %s518 = scalar_lea.sflag [#allocation12], %s517
        %s519 = sand.u32 %s177, 1
        %s520 = smul.addr %s519, 64
        %s521 = scalar_lea.vmem [#allocation11], %s520
        // Predicated region
        $region69: #{tpu_custom_call.1} parent=47 // pred_check
          %p522 = pneg %p190
        $region70: #{tpu_custom_call.1} parent=47 // pred_check_branch
          %524 = sbr.rel (%p522) target = $region72
        $region71: #{tpu_custom_call.1} parent=47 // pred_region
          %526 = dma.done %s518, 1024
        $region72: #{tpu_custom_call.1} parent=47 // pred_fallthru
          _
        %s527 = sand.u32 %s39, 1
        %s528 = scalar_lea.sflag [#allocation12], %s527
        %s529 = sand.u32 %s203, 1
        %s530 = smul.addr %s529, 64
        %s531 = scalar_lea.vmem [#allocation13], %s530
        // Predicated region
        $region73: #{tpu_custom_call.1} parent=47 // pred_check
          %p532 = pneg %p216
        $region74: #{tpu_custom_call.1} parent=47 // pred_check_branch
          %534 = sbr.rel (%p532) target = $region76
        $region75: #{tpu_custom_call.1} parent=47 // pred_region
          %536 = dma.done %s528, 1024
        $region76: #{tpu_custom_call.1} parent=47 // pred_fallthru
          _
        %s537 = sand.u32 %s47, 1
        %s538 = scalar_lea.sflag [#allocation3], %s537
        %s539 = sand.u32 %s47, 1
        %s540 = smul.addr %s539, 16
        %s541 = scalar_lea.vmem [#allocation2], %s540
        %p542 = pneg %p60
        %p543 = pneg %p57
        %s544 = sand.u32 %s39, 1
        %s545 = scalar_lea.sflag [#allocation6], %s544
        %s546 = sand.u32 %s73, 1
        %s547 = smul.addr %s546, 16
        %s548 = scalar_lea.vmem [#allocation5], %s547
        %p549 = pneg %p86
        %p550 = pneg %p83
        %s551 = sand.u32 %s39, 1
        %s552 = scalar_lea.sflag [#allocation6], %s551
        %s553 = sand.u32 %s99, 1
        %s554 = smul.addr %s553, 16
        %s555 = scalar_lea.vmem [#allocation7], %s554
        %p556 = pneg %p112
        %p557 = pneg %p109
        %s558 = sand.u32 %s39, 1
        %s559 = scalar_lea.sflag [#allocation9], %s558
        %s560 = sand.u32 %s125, 1
        %s561 = smul.addr %s560, 1024
        %s562 = scalar_lea.vmem [#allocation8], %s561
        %p563 = pneg %p138
        %p564 = pneg %p135
        %s565 = sand.u32 %s39, 1
        %s566 = scalar_lea.sflag [#allocation9], %s565
        %s567 = sand.u32 %s151, 1
        %s568 = smul.addr %s567, 1024
        %s569 = scalar_lea.vmem [#allocation10], %s568
        %p570 = pneg %p164
        %p571 = pneg %p161
        %s572 = sand.u32 %s39, 1
        %s573 = scalar_lea.sflag [#allocation12], %s572
        %s574 = sand.u32 %s177, 1
        %s575 = smul.addr %s574, 64
        %s576 = scalar_lea.vmem [#allocation11], %s575
        %p577 = pneg %p190
        %p578 = pneg %p187
        %s579 = sand.u32 %s39, 1
        %s580 = scalar_lea.sflag [#allocation12], %s579
        %s581 = sand.u32 %s203, 1
        %s582 = smul.addr %s581, 64
        %s583 = scalar_lea.vmem [#allocation13], %s582
        %p584 = pneg %p216
        %p585 = pneg %p213
        %p586 = pneg %p242
        %p587 = pneg %p239
        %s588 = sand.u32 %s229, 1
        %s589 = scalar_lea.sflag [#allocation4], %s588
        %s590 = sand.u32 %s229, 1
        %s591 = smul.addr %s590, 16
        %s592 = scalar_lea.vmem [#allocation14], %s591
        %p593 = pneg %p268
        %p594 = pneg %p265
        %s595 = sand.u32 %s39, 1
        %s596 = scalar_lea.sflag [#allocation16], %s595
        %s597 = sand.u32 %s255, 1
        %s598 = smul.addr %s597, 16
        %s599 = scalar_lea.vmem [#allocation15], %s598
        %p600 = pneg %p294
        %p601 = pneg %p291
        %s602 = sand.u32 %s39, 1
        %s603 = scalar_lea.sflag [#allocation16], %s602
        %s604 = sand.u32 %s281, 1
        %s605 = scalar_lea.vmem [#allocation17], %s604
        %v606 = vld [vmem:[%s471] sm:$0xff]
        %v607 = vld [vmem:[%s471 + $0x8] sm:$0xff]
        %v608 = vld [vmem:[%s481] sm:$0xff]
        %v609 = vld [vmem:[%s481 + $0x8] sm:$0xff]
        %v610 = vrsqrt.pop %v608
        %v611 = vmul.f32 %v610, %v608
        %v612 = vmul.f32 %v611, %v610
        %v613 = vmul.f32 0.5, %v612
        %v614 = vsub.f32 1.5, %v613
        %v615 = vmul.f32 %v610, %v614
        %v616 = vmul.f32 %v608, %v615
        %vm617 = vcmp.eq.f32.partialorder %v608, inf
        %v618 = vsel %vm617, %v608, %v616
        %vm619 = vcmp.eq.f32.partialorder %v608, 0.0
        %v620 = vand.u32 %v608, 2147483648
        %v621 = vsel %vm619, %v620, %v618
        %v622 = vrsqrt.pop %v609
        %v623 = vmul.f32 %v622, %v609
        %v624 = vmul.f32 %v623, %v622
        %v625 = vmul.f32 0.5, %v624
        %v626 = vsub.f32 1.5, %v625
        %v627 = vmul.f32 %v622, %v626
        %v628 = vmul.f32 %v609, %v627
        %vm629 = vcmp.eq.f32.partialorder %v609, inf
        %v630 = vsel %vm629, %v609, %v628
        %vm631 = vcmp.eq.f32.partialorder %v609, 0.0
        %v632 = vand.u32 %v609, 2147483648
        %v633 = vsel %vm631, %v632, %v630
        %v634 = vld [vmem:[%s491] sm:$0xff]
        %v635 = vld [vmem:[%s491 + $0x8] sm:$0xff]
        %v636 = vmul.f32 %v621, %v634
        %v637 = vmul.f32 %v633, %v635
        %v638 = vadd.f32 %v606, %v636
        %v639 = vadd.f32 %v607, %v637
        %640 = vst [vmem:[%s592] sm:$0xff] %v638
        %641 = vst [vmem:[%s592 + $0x8] sm:$0xff] %v639
        %v642 = vld [vmem:[%s521] sm:$0xff]
        %v643 = vld [vmem:[%s521 + $0x8] sm:$0xff]
        %v644 = vld [vmem:[%s511] sm:$0xff]
        %v645 = vld [vmem:[%s511 + $0x8] sm:$0xff]
        %v646 = vperm.slane %v638, 0
        %v647 = vmul.f32 %v644, %v646
        %v648 = vmul.f32 %v645, %v646
        %v649 = vadd.f32 %v642, %v647
        %v650 = vadd.f32 %v643, %v648
        %s651 = scalar_lea.vmem %s511, 16 [#allocation10]
        %v652 = vld [vmem:[%s651] sm:$0xff]
        %v653 = vld [vmem:[%s651 + $0x8] sm:$0xff]
        %v654 = vperm.slane %v638, 1
        %v655 = vmul.f32 %v652, %v654
        %v656 = vmul.f32 %v653, %v654
        %v657 = vadd.f32 %v649, %v655
        %v658 = vadd.f32 %v650, %v656
        %s659 = scalar_lea.vmem %s511, 32 [#allocation10]
        %v660 = vld [vmem:[%s659] sm:$0xff]
        %v661 = vld [vmem:[%s659 + $0x8] sm:$0xff]
        %v662 = vperm.slane %v638, 2
        %v663 = vmul.f32 %v660, %v662
        %v664 = vmul.f32 %v661, %v662
        %v665 = vadd.f32 %v657, %v663
        %v666 = vadd.f32 %v658, %v664
        %s667 = scalar_lea.vmem %s511, 48 [#allocation10]
        %v668 = vld [vmem:[%s667] sm:$0xff]
        %v669 = vld [vmem:[%s667 + $0x8] sm:$0xff]
        %v670 = vperm.slane %v638, 3
        %v671 = vmul.f32 %v668, %v670
        %v672 = vmul.f32 %v669, %v670
        %v673 = vadd.f32 %v665, %v671
        %v674 = vadd.f32 %v666, %v672
        %s675 = scalar_lea.vmem %s511, 64 [#allocation10]
        %v676 = vld [vmem:[%s675] sm:$0xff]
        %v677 = vld [vmem:[%s675 + $0x8] sm:$0xff]
        %v678 = vperm.slane %v638, 4
        %v679 = vmul.f32 %v676, %v678
        %v680 = vmul.f32 %v677, %v678
        %v681 = vadd.f32 %v673, %v679
        %v682 = vadd.f32 %v674, %v680
        %s683 = scalar_lea.vmem %s511, 80 [#allocation10]
        %v684 = vld [vmem:[%s683] sm:$0xff]
        %v685 = vld [vmem:[%s683 + $0x8] sm:$0xff]
        %v686 = vperm.slane %v638, 5
        %v687 = vmul.f32 %v684, %v686
        %v688 = vmul.f32 %v685, %v686
        %v689 = vadd.f32 %v681, %v687
        %v690 = vadd.f32 %v682, %v688
        %s691 = scalar_lea.vmem %s511, 96 [#allocation10]
        %v692 = vld [vmem:[%s691] sm:$0xff]
        %v693 = vld [vmem:[%s691 + $0x8] sm:$0xff]
        %v694 = vperm.slane %v638, 6
        %v695 = vmul.f32 %v692, %v694
        %v696 = vmul.f32 %v693, %v694
        %v697 = vadd.f32 %v689, %v695
        %v698 = vadd.f32 %v690, %v696
        %s699 = scalar_lea.vmem %s511, 112 [#allocation10]
        %v700 = vld [vmem:[%s699] sm:$0xff]
        %v701 = vld [vmem:[%s699 + $0x8] sm:$0xff]
        %v702 = vperm.slane %v638, 7
        %v703 = vmul.f32 %v700, %v702
        %v704 = vmul.f32 %v701, %v702
        %v705 = vadd.f32 %v697, %v703
        %v706 = vadd.f32 %v698, %v704
        %s707 = scalar_lea.vmem %s511, 128 [#allocation10]
        %v708 = vld [vmem:[%s707] sm:$0xff]
        %v709 = vld [vmem:[%s707 + $0x8] sm:$0xff]
        %v710 = vperm.slane %v639, 0
        %v711 = vmul.f32 %v708, %v710
        %v712 = vmul.f32 %v709, %v710
        %v713 = vadd.f32 %v705, %v711
        %v714 = vadd.f32 %v706, %v712
        %s715 = scalar_lea.vmem %s511, 144 [#allocation10]
        %v716 = vld [vmem:[%s715] sm:$0xff]
        %v717 = vld [vmem:[%s715 + $0x8] sm:$0xff]
        %v718 = vperm.slane %v639, 1
        %v719 = vmul.f32 %v716, %v718
        %v720 = vmul.f32 %v717, %v718
        %v721 = vadd.f32 %v713, %v719
        %v722 = vadd.f32 %v714, %v720
        %s723 = scalar_lea.vmem %s511, 160 [#allocation10]
        %v724 = vld [vmem:[%s723] sm:$0xff]
        %v725 = vld [vmem:[%s723 + $0x8] sm:$0xff]
        %v726 = vperm.slane %v639, 2
        %v727 = vmul.f32 %v724, %v726
        %v728 = vmul.f32 %v725, %v726
        %v729 = vadd.f32 %v721, %v727
        %v730 = vadd.f32 %v722, %v728
        %s731 = scalar_lea.vmem %s511, 176 [#allocation10]
        %v732 = vld [vmem:[%s731] sm:$0xff]
        %v733 = vld [vmem:[%s731 + $0x8] sm:$0xff]
        %v734 = vperm.slane %v639, 3
        %v735 = vmul.f32 %v732, %v734
        %v736 = vmul.f32 %v733, %v734
        %v737 = vadd.f32 %v729, %v735
        %v738 = vadd.f32 %v730, %v736
        %s739 = scalar_lea.vmem %s511, 192 [#allocation10]
        %v740 = vld [vmem:[%s739] sm:$0xff]
        %v741 = vld [vmem:[%s739 + $0x8] sm:$0xff]
        %v742 = vperm.slane %v639, 4
        %v743 = vmul.f32 %v740, %v742
        %v744 = vmul.f32 %v741, %v742
        %v745 = vadd.f32 %v737, %v743
        %v746 = vadd.f32 %v738, %v744
        %s747 = scalar_lea.vmem %s511, 208 [#allocation10]
        %v748 = vld [vmem:[%s747] sm:$0xff]
        %v749 = vld [vmem:[%s747 + $0x8] sm:$0xff]
        %v750 = vperm.slane %v639, 5
        %v751 = vmul.f32 %v748, %v750
        %v752 = vmul.f32 %v749, %v750
        %v753 = vadd.f32 %v745, %v751
        %v754 = vadd.f32 %v746, %v752
        %s755 = scalar_lea.vmem %s511, 224 [#allocation10]
        %v756 = vld [vmem:[%s755] sm:$0xff]
        %v757 = vld [vmem:[%s755 + $0x8] sm:$0xff]
        %v758 = vperm.slane %v639, 6
        %v759 = vmul.f32 %v756, %v758
        %v760 = vmul.f32 %v757, %v758
        %v761 = vadd.f32 %v753, %v759
        %v762 = vadd.f32 %v754, %v760
        %s763 = scalar_lea.vmem %s511, 240 [#allocation10]
        %v764 = vld [vmem:[%s763] sm:$0xff]
        %v765 = vld [vmem:[%s763 + $0x8] sm:$0xff]
        %v766 = vperm.slane %v639, 7
        %v767 = vmul.f32 %v764, %v766
        %v768 = vmul.f32 %v765, %v766
        %v769 = vadd.f32 %v761, %v767
        %v770 = vadd.f32 %v762, %v768
        %v771 = vtanh.pop %v769
        %v772 = vtanh.pop %v770
        %v773 = vld [vmem:[%s501] sm:$0xff]
        %v774 = vld [vmem:[%s501 + $0x8] sm:$0xff]
        %v775 = vmul.f32 %v773, %v771
        %v776 = vmul.f32 %v774, %v772
        %v777 = vadd.f32 %v775, %v776
        %v778 = vrot.slane %v777, 4
        %v779 = vadd.f32 %v777, %v778
        %v780 = vrot.slane %v779, 2
        %v781 = vadd.f32 %v779, %v780
        %v782 = vrot.slane %v781, 1
        %v783 = vadd.f32 %v781, %v782
        %v784 = vadd.f32 %v638, %v783
        %s785 = scalar_lea.vmem %s501, 16 [#allocation8]
        %v786 = vld [vmem:[%s785] sm:$0xff]
        %v787 = vld [vmem:[%s785 + $0x8] sm:$0xff]
        %v788 = vmul.f32 %v786, %v771
        %v789 = vmul.f32 %v787, %v772
        %v790 = vadd.f32 %v788, %v789
        %v791 = vrot.slane %v790, 4
        %v792 = vadd.f32 %v790, %v791
        %v793 = vrot.slane %v792, 2
        %v794 = vadd.f32 %v792, %v793
        %v795 = vrot.slane %v794, 1
        %v796 = vadd.f32 %v794, %v795
        %v797 = vadd.f32 %v638, %v796
        %s798 = scalar_lea.vmem %s501, 32 [#allocation8]
        %v799 = vld [vmem:[%s798] sm:$0xff]
        %v800 = vld [vmem:[%s798 + $0x8] sm:$0xff]
        %v801 = vmul.f32 %v799, %v771
        %v802 = vmul.f32 %v800, %v772
        %v803 = vadd.f32 %v801, %v802
        %v804 = vrot.slane %v803, 4
        %v805 = vadd.f32 %v803, %v804
        %v806 = vrot.slane %v805, 2
        %v807 = vadd.f32 %v805, %v806
        %v808 = vrot.slane %v807, 1
        %v809 = vadd.f32 %v807, %v808
        %v810 = vadd.f32 %v638, %v809
        %s811 = scalar_lea.vmem %s501, 48 [#allocation8]
        %v812 = vld [vmem:[%s811] sm:$0xff]
        %v813 = vld [vmem:[%s811 + $0x8] sm:$0xff]
        %v814 = vmul.f32 %v812, %v771
        %v815 = vmul.f32 %v813, %v772
        %v816 = vadd.f32 %v814, %v815
        %v817 = vrot.slane %v816, 4
        %v818 = vadd.f32 %v816, %v817
        %v819 = vrot.slane %v818, 2
        %v820 = vadd.f32 %v818, %v819
        %v821 = vrot.slane %v820, 1
        %v822 = vadd.f32 %v820, %v821
        %v823 = vadd.f32 %v638, %v822
        %s824 = scalar_lea.vmem %s501, 64 [#allocation8]
        %v825 = vld [vmem:[%s824] sm:$0xff]
        %v826 = vld [vmem:[%s824 + $0x8] sm:$0xff]
        %v827 = vmul.f32 %v825, %v771
        %v828 = vmul.f32 %v826, %v772
        %v829 = vadd.f32 %v827, %v828
        %v830 = vrot.slane %v829, 4
        %v831 = vadd.f32 %v829, %v830
        %v832 = vrot.slane %v831, 2
        %v833 = vadd.f32 %v831, %v832
        %v834 = vrot.slane %v833, 1
        %v835 = vadd.f32 %v833, %v834
        %v836 = vadd.f32 %v638, %v835
        %s837 = scalar_lea.vmem %s501, 80 [#allocation8]
        %v838 = vld [vmem:[%s837] sm:$0xff]
        %v839 = vld [vmem:[%s837 + $0x8] sm:$0xff]
        %v840 = vmul.f32 %v838, %v771
        %v841 = vmul.f32 %v839, %v772
        %v842 = vadd.f32 %v840, %v841
        %v843 = vrot.slane %v842, 4
        %v844 = vadd.f32 %v842, %v843
        %v845 = vrot.slane %v844, 2
        %v846 = vadd.f32 %v844, %v845
        %v847 = vrot.slane %v846, 1
        %v848 = vadd.f32 %v846, %v847
        %v849 = vadd.f32 %v638, %v848
        %s850 = scalar_lea.vmem %s501, 96 [#allocation8]
        %v851 = vld [vmem:[%s850] sm:$0xff]
        %v852 = vld [vmem:[%s850 + $0x8] sm:$0xff]
        %v853 = vmul.f32 %v851, %v771
        %v854 = vmul.f32 %v852, %v772
        %v855 = vadd.f32 %v853, %v854
        %v856 = vrot.slane %v855, 4
        %v857 = vadd.f32 %v855, %v856
        %v858 = vrot.slane %v857, 2
        %v859 = vadd.f32 %v857, %v858
        %v860 = vrot.slane %v859, 1
        %v861 = vadd.f32 %v859, %v860
        %v862 = vadd.f32 %v638, %v861
        %s863 = scalar_lea.vmem %s501, 112 [#allocation8]
        %v864 = vld [vmem:[%s863] sm:$0xff]
        %v865 = vld [vmem:[%s863 + $0x8] sm:$0xff]
        %v866 = vmul.f32 %v864, %v771
        %v867 = vmul.f32 %v865, %v772
        %v868 = vadd.f32 %v866, %v867
        %v869 = vrot.slane %v868, 4
        %v870 = vadd.f32 %v868, %v869
        %v871 = vrot.slane %v870, 2
        %v872 = vadd.f32 %v870, %v871
        %v873 = vrot.slane %v872, 1
        %v874 = vadd.f32 %v872, %v873
        %v875 = vadd.f32 %v638, %v874
        %s876 = scalar_lea.vmem %s501, 128 [#allocation8]
        %v877 = vld [vmem:[%s876] sm:$0xff]
        %v878 = vld [vmem:[%s876 + $0x8] sm:$0xff]
        %v879 = vmul.f32 %v877, %v771
        %v880 = vmul.f32 %v878, %v772
        %v881 = vadd.f32 %v879, %v880
        %v882 = vrot.slane %v881, 4
        %v883 = vadd.f32 %v881, %v882
        %v884 = vrot.slane %v883, 2
        %v885 = vadd.f32 %v883, %v884
        %v886 = vrot.slane %v885, 1
        %v887 = vadd.f32 %v885, %v886
        %v888 = vadd.f32 %v639, %v887
        %s889 = scalar_lea.vmem %s501, 144 [#allocation8]
        %v890 = vld [vmem:[%s889] sm:$0xff]
        %v891 = vld [vmem:[%s889 + $0x8] sm:$0xff]
        %v892 = vmul.f32 %v890, %v771
        %v893 = vmul.f32 %v891, %v772
        %v894 = vadd.f32 %v892, %v893
        %v895 = vrot.slane %v894, 4
        %v896 = vadd.f32 %v894, %v895
        %v897 = vrot.slane %v896, 2
        %v898 = vadd.f32 %v896, %v897
        %v899 = vrot.slane %v898, 1
        %v900 = vadd.f32 %v898, %v899
        %v901 = vadd.f32 %v639, %v900
        %s902 = scalar_lea.vmem %s501, 160 [#allocation8]
        %v903 = vld [vmem:[%s902] sm:$0xff]
        %v904 = vld [vmem:[%s902 + $0x8] sm:$0xff]
        %v905 = vmul.f32 %v903, %v771
        %v906 = vmul.f32 %v904, %v772
        %v907 = vadd.f32 %v905, %v906
        %v908 = vrot.slane %v907, 4
        %v909 = vadd.f32 %v907, %v908
        %v910 = vrot.slane %v909, 2
        %v911 = vadd.f32 %v909, %v910
        %v912 = vrot.slane %v911, 1
        %v913 = vadd.f32 %v911, %v912
        %v914 = vadd.f32 %v639, %v913
        %s915 = scalar_lea.vmem %s501, 176 [#allocation8]
        %v916 = vld [vmem:[%s915] sm:$0xff]
        %v917 = vld [vmem:[%s915 + $0x8] sm:$0xff]
        %v918 = vmul.f32 %v916, %v771
        %v919 = vmul.f32 %v917, %v772
        %v920 = vadd.f32 %v918, %v919
        %v921 = vrot.slane %v920, 4
        %v922 = vadd.f32 %v920, %v921
        %v923 = vrot.slane %v922, 2
        %v924 = vadd.f32 %v922, %v923
        %v925 = vrot.slane %v924, 1
        %v926 = vadd.f32 %v924, %v925
        %v927 = vadd.f32 %v639, %v926
        %s928 = scalar_lea.vmem %s501, 192 [#allocation8]
        %v929 = vld [vmem:[%s928] sm:$0xff]
        %v930 = vld [vmem:[%s928 + $0x8] sm:$0xff]
        %v931 = vmul.f32 %v929, %v771
        %v932 = vmul.f32 %v930, %v772
        %v933 = vadd.f32 %v931, %v932
        %v934 = vrot.slane %v933, 4
        %v935 = vadd.f32 %v933, %v934
        %v936 = vrot.slane %v935, 2
        %v937 = vadd.f32 %v935, %v936
        %v938 = vrot.slane %v937, 1
        %v939 = vadd.f32 %v937, %v938
        %v940 = vadd.f32 %v639, %v939
        %s941 = scalar_lea.vmem %s501, 208 [#allocation8]
        %v942 = vld [vmem:[%s941] sm:$0xff]
        %v943 = vld [vmem:[%s941 + $0x8] sm:$0xff]
        %v944 = vmul.f32 %v942, %v771
        %v945 = vmul.f32 %v943, %v772
        %v946 = vadd.f32 %v944, %v945
        %v947 = vrot.slane %v946, 4
        %v948 = vadd.f32 %v946, %v947
        %v949 = vrot.slane %v948, 2
        %v950 = vadd.f32 %v948, %v949
        %v951 = vrot.slane %v950, 1
        %v952 = vadd.f32 %v950, %v951
        %v953 = vadd.f32 %v639, %v952
        %s954 = scalar_lea.vmem %s501, 224 [#allocation8]
        %v955 = vld [vmem:[%s954] sm:$0xff]
        %v956 = vld [vmem:[%s954 + $0x8] sm:$0xff]
        %v957 = vmul.f32 %v955, %v771
        %v958 = vmul.f32 %v956, %v772
        %v959 = vadd.f32 %v957, %v958
        %v960 = vrot.slane %v959, 4
        %v961 = vadd.f32 %v959, %v960
        %v962 = vrot.slane %v961, 2
        %v963 = vadd.f32 %v961, %v962
        %v964 = vrot.slane %v963, 1
        %v965 = vadd.f32 %v963, %v964
        %v966 = vadd.f32 %v639, %v965
        %s967 = scalar_lea.vmem %s501, 240 [#allocation8]
        %v968 = vld [vmem:[%s967] sm:$0xff]
        %v969 = vld [vmem:[%s967 + $0x8] sm:$0xff]
        %v970 = vmul.f32 %v968, %v771
        %v971 = vmul.f32 %v969, %v772
        %v972 = vadd.f32 %v970, %v971
        %v973 = vrot.slane %v972, 4
        %v974 = vadd.f32 %v972, %v973
        %v975 = vrot.slane %v974, 2
        %v976 = vadd.f32 %v974, %v975
        %v977 = vrot.slane %v976, 1
        %v978 = vadd.f32 %v976, %v977
        %v979 = vadd.f32 %v639, %v978
        %v980 = vld [vmem:[%s531] sm:$0xff]
        %v981 = vld [vmem:[%s531 + $0x8] sm:$0xff]
        %v982 = vmul.f32 %v771, %v771
        %v983 = vmul.f32 %v772, %v772
        %v984 = vsub.f32 1.0, %v982
        %v985 = vsub.f32 1.0, %v983
        %v986 = vmul.f32 %v980, %v984
        %v987 = vmul.f32 %v981, %v985
        %v988 = vadd.f32 %v986, 1.0
        %v989 = vadd.f32 %v987, 1.0
        %v990 = vand.u32 2147483647, %v988
        %v991 = vand.u32 2147483647, %v989
        %v992 = vlog2.pop %v990
        %v993 = vmul.f32 %v992, 0.6931472
        %v994 = vlog2.pop %v991
        %v995 = vmul.f32 %v994, 0.6931472
        %v996 = vadd.f32 %v993, 0.0
        %v997 = vadd.f32 %v995, 0.0
        %s998 = scalar_lea.vmem %s521, 16 [#allocation11]
        %v999 = vld [vmem:[%s998] sm:$0xff]
        %v1000 = vld [vmem:[%s998 + $0x8] sm:$0xff]
        %s1001 = scalar_lea.vmem %s511, 256 [#allocation10]
        %v1002 = vld [vmem:[%s1001] sm:$0xff]
        %v1003 = vld [vmem:[%s1001 + $0x8] sm:$0xff]
        %v1004 = vperm.slane %v979, 7
        %v1005 = vmul.f32 %v1002, %v1004
        %v1006 = vmul.f32 %v1003, %v1004
        %v1007 = vadd.f32 %v999, %v1005
        %v1008 = vadd.f32 %v1000, %v1006
        %s1009 = scalar_lea.vmem %s511, 272 [#allocation10]
        %v1010 = vld [vmem:[%s1009] sm:$0xff]
        %v1011 = vld [vmem:[%s1009 + $0x8] sm:$0xff]
        %v1012 = vperm.slane %v966, 6
        %v1013 = vmul.f32 %v1010, %v1012
        %v1014 = vmul.f32 %v1011, %v1012
        %v1015 = vadd.f32 %v1007, %v1013
        %v1016 = vadd.f32 %v1008, %v1014
        %s1017 = scalar_lea.vmem %s511, 288 [#allocation10]
        %v1018 = vld [vmem:[%s1017] sm:$0xff]
        %v1019 = vld [vmem:[%s1017 + $0x8] sm:$0xff]
        %v1020 = vperm.slane %v953, 5
        %v1021 = vmul.f32 %v1018, %v1020
        %v1022 = vmul.f32 %v1019, %v1020
        %v1023 = vadd.f32 %v1015, %v1021
        %v1024 = vadd.f32 %v1016, %v1022
        %s1025 = scalar_lea.vmem %s511, 304 [#allocation10]
        %v1026 = vld [vmem:[%s1025] sm:$0xff]
        %v1027 = vld [vmem:[%s1025 + $0x8] sm:$0xff]
        %v1028 = vperm.slane %v940, 4
        %v1029 = vmul.f32 %v1026, %v1028
        %v1030 = vmul.f32 %v1027, %v1028
        %v1031 = vadd.f32 %v1023, %v1029
        %v1032 = vadd.f32 %v1024, %v1030
        %s1033 = scalar_lea.vmem %s511, 320 [#allocation10]
        %v1034 = vld [vmem:[%s1033] sm:$0xff]
        %v1035 = vld [vmem:[%s1033 + $0x8] sm:$0xff]
        %v1036 = vperm.slane %v927, 3
        %v1037 = vmul.f32 %v1034, %v1036
        %v1038 = vmul.f32 %v1035, %v1036
        %v1039 = vadd.f32 %v1031, %v1037
        %v1040 = vadd.f32 %v1032, %v1038
        %s1041 = scalar_lea.vmem %s511, 336 [#allocation10]
        %v1042 = vld [vmem:[%s1041] sm:$0xff]
        %v1043 = vld [vmem:[%s1041 + $0x8] sm:$0xff]
        %v1044 = vperm.slane %v914, 2
        %v1045 = vmul.f32 %v1042, %v1044
        %v1046 = vmul.f32 %v1043, %v1044
        %v1047 = vadd.f32 %v1039, %v1045
        %v1048 = vadd.f32 %v1040, %v1046
        %s1049 = scalar_lea.vmem %s511, 352 [#allocation10]
        %v1050 = vld [vmem:[%s1049] sm:$0xff]
        %v1051 = vld [vmem:[%s1049 + $0x8] sm:$0xff]
        %v1052 = vperm.slane %v901, 1
        %v1053 = vmul.f32 %v1050, %v1052
        %v1054 = vmul.f32 %v1051, %v1052
        %v1055 = vadd.f32 %v1047, %v1053
        %v1056 = vadd.f32 %v1048, %v1054
        %s1057 = scalar_lea.vmem %s511, 368 [#allocation10]
        %v1058 = vld [vmem:[%s1057] sm:$0xff]
        %v1059 = vld [vmem:[%s1057 + $0x8] sm:$0xff]
        %v1060 = vperm.slane %v888, 0
        %v1061 = vmul.f32 %v1058, %v1060
        %v1062 = vmul.f32 %v1059, %v1060
        %v1063 = vadd.f32 %v1055, %v1061
        %v1064 = vadd.f32 %v1056, %v1062
        %s1065 = scalar_lea.vmem %s511, 384 [#allocation10]
        %v1066 = vld [vmem:[%s1065] sm:$0xff]
        %v1067 = vld [vmem:[%s1065 + $0x8] sm:$0xff]
        %v1068 = vperm.slane %v875, 7
        %v1069 = vmul.f32 %v1066, %v1068
        %v1070 = vmul.f32 %v1067, %v1068
        %v1071 = vadd.f32 %v1063, %v1069
        %v1072 = vadd.f32 %v1064, %v1070
        %s1073 = scalar_lea.vmem %s511, 400 [#allocation10]
        %v1074 = vld [vmem:[%s1073] sm:$0xff]
        %v1075 = vld [vmem:[%s1073 + $0x8] sm:$0xff]
        %v1076 = vperm.slane %v862, 6
        %v1077 = vmul.f32 %v1074, %v1076
        %v1078 = vmul.f32 %v1075, %v1076
        %v1079 = vadd.f32 %v1071, %v1077
        %v1080 = vadd.f32 %v1072, %v1078
        %s1081 = scalar_lea.vmem %s511, 416 [#allocation10]
        %v1082 = vld [vmem:[%s1081] sm:$0xff]
        %v1083 = vld [vmem:[%s1081 + $0x8] sm:$0xff]
        %v1084 = vperm.slane %v849, 5
        %v1085 = vmul.f32 %v1082, %v1084
        %v1086 = vmul.f32 %v1083, %v1084
        %v1087 = vadd.f32 %v1079, %v1085
        %v1088 = vadd.f32 %v1080, %v1086
        %s1089 = scalar_lea.vmem %s511, 432 [#allocation10]
        %v1090 = vld [vmem:[%s1089] sm:$0xff]
        %v1091 = vld [vmem:[%s1089 + $0x8] sm:$0xff]
        %v1092 = vperm.slane %v836, 4
        %v1093 = vmul.f32 %v1090, %v1092
        %v1094 = vmul.f32 %v1091, %v1092
        %v1095 = vadd.f32 %v1087, %v1093
        %v1096 = vadd.f32 %v1088, %v1094
        %s1097 = scalar_lea.vmem %s511, 448 [#allocation10]
        %v1098 = vld [vmem:[%s1097] sm:$0xff]
        %v1099 = vld [vmem:[%s1097 + $0x8] sm:$0xff]
        %v1100 = vperm.slane %v823, 3
        %v1101 = vmul.f32 %v1098, %v1100
        %v1102 = vmul.f32 %v1099, %v1100
        %v1103 = vadd.f32 %v1095, %v1101
        %v1104 = vadd.f32 %v1096, %v1102
        %s1105 = scalar_lea.vmem %s511, 464 [#allocation10]
        %v1106 = vld [vmem:[%s1105] sm:$0xff]
        %v1107 = vld [vmem:[%s1105 + $0x8] sm:$0xff]
        %v1108 = vperm.slane %v810, 2
        %v1109 = vmul.f32 %v1106, %v1108
        %v1110 = vmul.f32 %v1107, %v1108
        %v1111 = vadd.f32 %v1103, %v1109
        %v1112 = vadd.f32 %v1104, %v1110
        %s1113 = scalar_lea.vmem %s511, 480 [#allocation10]
        %v1114 = vld [vmem:[%s1113] sm:$0xff]
        %v1115 = vld [vmem:[%s1113 + $0x8] sm:$0xff]
        %v1116 = vperm.slane %v797, 1
        %v1117 = vmul.f32 %v1114, %v1116
        %v1118 = vmul.f32 %v1115, %v1116
        %v1119 = vadd.f32 %v1111, %v1117
        %v1120 = vadd.f32 %v1112, %v1118
        %s1121 = scalar_lea.vmem %s511, 496 [#allocation10]
        %v1122 = vld [vmem:[%s1121] sm:$0xff]
        %v1123 = vld [vmem:[%s1121 + $0x8] sm:$0xff]
        %v1124 = vperm.slane %v784, 0
        %v1125 = vmul.f32 %v1122, %v1124
        %v1126 = vmul.f32 %v1123, %v1124
        %v1127 = vadd.f32 %v1119, %v1125
        %v1128 = vadd.f32 %v1120, %v1126
        %v1129 = vtanh.pop %v1127
        %v1130 = vtanh.pop %v1128
        %s1131 = scalar_lea.vmem %s501, 256 [#allocation8]
        %v1132 = vld [vmem:[%s1131] sm:$0xff]
        %v1133 = vld [vmem:[%s1131 + $0x8] sm:$0xff]
        %v1134 = vmul.f32 %v1132, %v1129
        %v1135 = vmul.f32 %v1133, %v1130
        %v1136 = vadd.f32 %v1134, %v1135
        %v1137 = vrot.slane %v1136, 4
        %v1138 = vadd.f32 %v1136, %v1137
        %v1139 = vrot.slane %v1138, 2
        %v1140 = vadd.f32 %v1138, %v1139
        %v1141 = vrot.slane %v1140, 1
        %v1142 = vadd.f32 %v1140, %v1141
        %v1143 = vadd.f32 %v979, %v1142
        %s1144 = scalar_lea.vmem %s501, 272 [#allocation8]
        %v1145 = vld [vmem:[%s1144] sm:$0xff]
        %v1146 = vld [vmem:[%s1144 + $0x8] sm:$0xff]
        %v1147 = vmul.f32 %v1145, %v1129
        %v1148 = vmul.f32 %v1146, %v1130
        %v1149 = vadd.f32 %v1147, %v1148
        %v1150 = vrot.slane %v1149, 4
        %v1151 = vadd.f32 %v1149, %v1150
        %v1152 = vrot.slane %v1151, 2
        %v1153 = vadd.f32 %v1151, %v1152
        %v1154 = vrot.slane %v1153, 1
        %v1155 = vadd.f32 %v1153, %v1154
        %v1156 = vadd.f32 %v966, %v1155
        %s1157 = scalar_lea.vmem %s501, 288 [#allocation8]
        %v1158 = vld [vmem:[%s1157] sm:$0xff]
        %v1159 = vld [vmem:[%s1157 + $0x8] sm:$0xff]
        %v1160 = vmul.f32 %v1158, %v1129
        %v1161 = vmul.f32 %v1159, %v1130
        %v1162 = vadd.f32 %v1160, %v1161
        %v1163 = vrot.slane %v1162, 4
        %v1164 = vadd.f32 %v1162, %v1163
        %v1165 = vrot.slane %v1164, 2
        %v1166 = vadd.f32 %v1164, %v1165
        %v1167 = vrot.slane %v1166, 1
        %v1168 = vadd.f32 %v1166, %v1167
        %v1169 = vadd.f32 %v953, %v1168
        %s1170 = scalar_lea.vmem %s501, 304 [#allocation8]
        %v1171 = vld [vmem:[%s1170] sm:$0xff]
        %v1172 = vld [vmem:[%s1170 + $0x8] sm:$0xff]
        %v1173 = vmul.f32 %v1171, %v1129
        %v1174 = vmul.f32 %v1172, %v1130
        %v1175 = vadd.f32 %v1173, %v1174
        %v1176 = vrot.slane %v1175, 4
        %v1177 = vadd.f32 %v1175, %v1176
        %v1178 = vrot.slane %v1177, 2
        %v1179 = vadd.f32 %v1177, %v1178
        %v1180 = vrot.slane %v1179, 1
        %v1181 = vadd.f32 %v1179, %v1180
        %v1182 = vadd.f32 %v940, %v1181
        %s1183 = scalar_lea.vmem %s501, 320 [#allocation8]
        %v1184 = vld [vmem:[%s1183] sm:$0xff]
        %v1185 = vld [vmem:[%s1183 + $0x8] sm:$0xff]
        %v1186 = vmul.f32 %v1184, %v1129
        %v1187 = vmul.f32 %v1185, %v1130
        %v1188 = vadd.f32 %v1186, %v1187
        %v1189 = vrot.slane %v1188, 4
        %v1190 = vadd.f32 %v1188, %v1189
        %v1191 = vrot.slane %v1190, 2
        %v1192 = vadd.f32 %v1190, %v1191
        %v1193 = vrot.slane %v1192, 1
        %v1194 = vadd.f32 %v1192, %v1193
        %v1195 = vadd.f32 %v927, %v1194
        %s1196 = scalar_lea.vmem %s501, 336 [#allocation8]
        %v1197 = vld [vmem:[%s1196] sm:$0xff]
        %v1198 = vld [vmem:[%s1196 + $0x8] sm:$0xff]
        %v1199 = vmul.f32 %v1197, %v1129
        %v1200 = vmul.f32 %v1198, %v1130
        %v1201 = vadd.f32 %v1199, %v1200
        %v1202 = vrot.slane %v1201, 4
        %v1203 = vadd.f32 %v1201, %v1202
        %v1204 = vrot.slane %v1203, 2
        %v1205 = vadd.f32 %v1203, %v1204
        %v1206 = vrot.slane %v1205, 1
        %v1207 = vadd.f32 %v1205, %v1206
        %v1208 = vadd.f32 %v914, %v1207
        %s1209 = scalar_lea.vmem %s501, 352 [#allocation8]
        %v1210 = vld [vmem:[%s1209] sm:$0xff]
        %v1211 = vld [vmem:[%s1209 + $0x8] sm:$0xff]
        %v1212 = vmul.f32 %v1210, %v1129
        %v1213 = vmul.f32 %v1211, %v1130
        %v1214 = vadd.f32 %v1212, %v1213
        %v1215 = vrot.slane %v1214, 4
        %v1216 = vadd.f32 %v1214, %v1215
        %v1217 = vrot.slane %v1216, 2
        %v1218 = vadd.f32 %v1216, %v1217
        %v1219 = vrot.slane %v1218, 1
        %v1220 = vadd.f32 %v1218, %v1219
        %v1221 = vadd.f32 %v901, %v1220
        %s1222 = scalar_lea.vmem %s501, 368 [#allocation8]
        %v1223 = vld [vmem:[%s1222] sm:$0xff]
        %v1224 = vld [vmem:[%s1222 + $0x8] sm:$0xff]
        %v1225 = vmul.f32 %v1223, %v1129
        %v1226 = vmul.f32 %v1224, %v1130
        %v1227 = vadd.f32 %v1225, %v1226
        %v1228 = vrot.slane %v1227, 4
        %v1229 = vadd.f32 %v1227, %v1228
        %v1230 = vrot.slane %v1229, 2
        %v1231 = vadd.f32 %v1229, %v1230
        %v1232 = vrot.slane %v1231, 1
        %v1233 = vadd.f32 %v1231, %v1232
        %v1234 = vadd.f32 %v888, %v1233
        %s1235 = scalar_lea.vmem %s501, 384 [#allocation8]
        %v1236 = vld [vmem:[%s1235] sm:$0xff]
        %v1237 = vld [vmem:[%s1235 + $0x8] sm:$0xff]
        %v1238 = vmul.f32 %v1236, %v1129
        %v1239 = vmul.f32 %v1237, %v1130
        %v1240 = vadd.f32 %v1238, %v1239
        %v1241 = vrot.slane %v1240, 4
        %v1242 = vadd.f32 %v1240, %v1241
        %v1243 = vrot.slane %v1242, 2
        %v1244 = vadd.f32 %v1242, %v1243
        %v1245 = vrot.slane %v1244, 1
        %v1246 = vadd.f32 %v1244, %v1245
        %v1247 = vadd.f32 %v875, %v1246
        %s1248 = scalar_lea.vmem %s501, 400 [#allocation8]
        %v1249 = vld [vmem:[%s1248] sm:$0xff]
        %v1250 = vld [vmem:[%s1248 + $0x8] sm:$0xff]
        %v1251 = vmul.f32 %v1249, %v1129
        %v1252 = vmul.f32 %v1250, %v1130
        %v1253 = vadd.f32 %v1251, %v1252
        %v1254 = vrot.slane %v1253, 4
        %v1255 = vadd.f32 %v1253, %v1254
        %v1256 = vrot.slane %v1255, 2
        %v1257 = vadd.f32 %v1255, %v1256
        %v1258 = vrot.slane %v1257, 1
        %v1259 = vadd.f32 %v1257, %v1258
        %v1260 = vadd.f32 %v862, %v1259
        %s1261 = scalar_lea.vmem %s501, 416 [#allocation8]
        %v1262 = vld [vmem:[%s1261] sm:$0xff]
        %v1263 = vld [vmem:[%s1261 + $0x8] sm:$0xff]
        %v1264 = vmul.f32 %v1262, %v1129
        %v1265 = vmul.f32 %v1263, %v1130
        %v1266 = vadd.f32 %v1264, %v1265
        %v1267 = vrot.slane %v1266, 4
        %v1268 = vadd.f32 %v1266, %v1267
        %v1269 = vrot.slane %v1268, 2
        %v1270 = vadd.f32 %v1268, %v1269
        %v1271 = vrot.slane %v1270, 1
        %v1272 = vadd.f32 %v1270, %v1271
        %v1273 = vadd.f32 %v849, %v1272
        %s1274 = scalar_lea.vmem %s501, 432 [#allocation8]
        %v1275 = vld [vmem:[%s1274] sm:$0xff]
        %v1276 = vld [vmem:[%s1274 + $0x8] sm:$0xff]
        %v1277 = vmul.f32 %v1275, %v1129
        %v1278 = vmul.f32 %v1276, %v1130
        %v1279 = vadd.f32 %v1277, %v1278
        %v1280 = vrot.slane %v1279, 4
        %v1281 = vadd.f32 %v1279, %v1280
        %v1282 = vrot.slane %v1281, 2
        %v1283 = vadd.f32 %v1281, %v1282
        %v1284 = vrot.slane %v1283, 1
        %v1285 = vadd.f32 %v1283, %v1284
        %v1286 = vadd.f32 %v836, %v1285
        %s1287 = scalar_lea.vmem %s501, 448 [#allocation8]
        %v1288 = vld [vmem:[%s1287] sm:$0xff]
        %v1289 = vld [vmem:[%s1287 + $0x8] sm:$0xff]
        %v1290 = vmul.f32 %v1288, %v1129
        %v1291 = vmul.f32 %v1289, %v1130
        %v1292 = vadd.f32 %v1290, %v1291
        %v1293 = vrot.slane %v1292, 4
        %v1294 = vadd.f32 %v1292, %v1293
        %v1295 = vrot.slane %v1294, 2
        %v1296 = vadd.f32 %v1294, %v1295
        %v1297 = vrot.slane %v1296, 1
        %v1298 = vadd.f32 %v1296, %v1297
        %v1299 = vadd.f32 %v823, %v1298
        %s1300 = scalar_lea.vmem %s501, 464 [#allocation8]
        %v1301 = vld [vmem:[%s1300] sm:$0xff]
        %v1302 = vld [vmem:[%s1300 + $0x8] sm:$0xff]
        %v1303 = vmul.f32 %v1301, %v1129
        %v1304 = vmul.f32 %v1302, %v1130
        %v1305 = vadd.f32 %v1303, %v1304
        %v1306 = vrot.slane %v1305, 4
        %v1307 = vadd.f32 %v1305, %v1306
        %v1308 = vrot.slane %v1307, 2
        %v1309 = vadd.f32 %v1307, %v1308
        %v1310 = vrot.slane %v1309, 1
        %v1311 = vadd.f32 %v1309, %v1310
        %v1312 = vadd.f32 %v810, %v1311
        %s1313 = scalar_lea.vmem %s501, 480 [#allocation8]
        %v1314 = vld [vmem:[%s1313] sm:$0xff]
        %v1315 = vld [vmem:[%s1313 + $0x8] sm:$0xff]
        %v1316 = vmul.f32 %v1314, %v1129
        %v1317 = vmul.f32 %v1315, %v1130
        %v1318 = vadd.f32 %v1316, %v1317
        %v1319 = vrot.slane %v1318, 4
        %v1320 = vadd.f32 %v1318, %v1319
        %v1321 = vrot.slane %v1320, 2
        %v1322 = vadd.f32 %v1320, %v1321
        %v1323 = vrot.slane %v1322, 1
        %v1324 = vadd.f32 %v1322, %v1323
        %v1325 = vadd.f32 %v797, %v1324
        %s1326 = scalar_lea.vmem %s501, 496 [#allocation8]
        %v1327 = vld [vmem:[%s1326] sm:$0xff]
        %v1328 = vld [vmem:[%s1326 + $0x8] sm:$0xff]
        %v1329 = vmul.f32 %v1327, %v1129
        %v1330 = vmul.f32 %v1328, %v1130
        %v1331 = vadd.f32 %v1329, %v1330
        %v1332 = vrot.slane %v1331, 4
        %v1333 = vadd.f32 %v1331, %v1332
        %v1334 = vrot.slane %v1333, 2
        %v1335 = vadd.f32 %v1333, %v1334
        %v1336 = vrot.slane %v1335, 1
        %v1337 = vadd.f32 %v1335, %v1336
        %v1338 = vadd.f32 %v784, %v1337
        %s1339 = scalar_lea.vmem %s531, 16 [#allocation13]
        %v1340 = vld [vmem:[%s1339] sm:$0xff]
        %v1341 = vld [vmem:[%s1339 + $0x8] sm:$0xff]
        %v1342 = vmul.f32 %v1129, %v1129
        %v1343 = vmul.f32 %v1130, %v1130
        %v1344 = vsub.f32 1.0, %v1342
        %v1345 = vsub.f32 1.0, %v1343
        %v1346 = vmul.f32 %v1340, %v1344
        %v1347 = vmul.f32 %v1341, %v1345
        %v1348 = vadd.f32 %v1346, 1.0
        %v1349 = vadd.f32 %v1347, 1.0
        %v1350 = vand.u32 2147483647, %v1348
        %v1351 = vand.u32 2147483647, %v1349
        %v1352 = vlog2.pop %v1350
        %v1353 = vmul.f32 %v1352, 0.6931472
        %v1354 = vlog2.pop %v1351
        %v1355 = vmul.f32 %v1354, 0.6931472
        %v1356 = vadd.f32 %v996, %v1353
        %v1357 = vadd.f32 %v997, %v1355
        %s1358 = scalar_lea.vmem %s521, 32 [#allocation11]
        %v1359 = vld [vmem:[%s1358] sm:$0xff]
        %v1360 = vld [vmem:[%s1358 + $0x8] sm:$0xff]
        %s1361 = scalar_lea.vmem %s511, 512 [#allocation10]
        %v1362 = vld [vmem:[%s1361] sm:$0xff]
        %v1363 = vld [vmem:[%s1361 + $0x8] sm:$0xff]
        %v1364 = vperm.slane %v1338, 0
        %v1365 = vmul.f32 %v1362, %v1364
        %v1366 = vmul.f32 %v1363, %v1364
        %v1367 = vadd.f32 %v1359, %v1365
        %v1368 = vadd.f32 %v1360, %v1366
        %s1369 = scalar_lea.vmem %s511, 528 [#allocation10]
        %v1370 = vld [vmem:[%s1369] sm:$0xff]
        %v1371 = vld [vmem:[%s1369 + $0x8] sm:$0xff]
        %v1372 = vperm.slane %v1325, 1
        %v1373 = vmul.f32 %v1370, %v1372
        %v1374 = vmul.f32 %v1371, %v1372
        %v1375 = vadd.f32 %v1367, %v1373
        %v1376 = vadd.f32 %v1368, %v1374
        %s1377 = scalar_lea.vmem %s511, 544 [#allocation10]
        %v1378 = vld [vmem:[%s1377] sm:$0xff]
        %v1379 = vld [vmem:[%s1377 + $0x8] sm:$0xff]
        %v1380 = vperm.slane %v1312, 2
        %v1381 = vmul.f32 %v1378, %v1380
        %v1382 = vmul.f32 %v1379, %v1380
        %v1383 = vadd.f32 %v1375, %v1381
        %v1384 = vadd.f32 %v1376, %v1382
        %s1385 = scalar_lea.vmem %s511, 560 [#allocation10]
        %v1386 = vld [vmem:[%s1385] sm:$0xff]
        %v1387 = vld [vmem:[%s1385 + $0x8] sm:$0xff]
        %v1388 = vperm.slane %v1299, 3
        %v1389 = vmul.f32 %v1386, %v1388
        %v1390 = vmul.f32 %v1387, %v1388
        %v1391 = vadd.f32 %v1383, %v1389
        %v1392 = vadd.f32 %v1384, %v1390
        %s1393 = scalar_lea.vmem %s511, 576 [#allocation10]
        %v1394 = vld [vmem:[%s1393] sm:$0xff]
        %v1395 = vld [vmem:[%s1393 + $0x8] sm:$0xff]
        %v1396 = vperm.slane %v1286, 4
        %v1397 = vmul.f32 %v1394, %v1396
        %v1398 = vmul.f32 %v1395, %v1396
        %v1399 = vadd.f32 %v1391, %v1397
        %v1400 = vadd.f32 %v1392, %v1398
        %s1401 = scalar_lea.vmem %s511, 592 [#allocation10]
        %v1402 = vld [vmem:[%s1401] sm:$0xff]
        %v1403 = vld [vmem:[%s1401 + $0x8] sm:$0xff]
        %v1404 = vperm.slane %v1273, 5
        %v1405 = vmul.f32 %v1402, %v1404
        %v1406 = vmul.f32 %v1403, %v1404
        %v1407 = vadd.f32 %v1399, %v1405
        %v1408 = vadd.f32 %v1400, %v1406
        %s1409 = scalar_lea.vmem %s511, 608 [#allocation10]
        %v1410 = vld [vmem:[%s1409] sm:$0xff]
        %v1411 = vld [vmem:[%s1409 + $0x8] sm:$0xff]
        %v1412 = vperm.slane %v1260, 6
        %v1413 = vmul.f32 %v1410, %v1412
        %v1414 = vmul.f32 %v1411, %v1412
        %v1415 = vadd.f32 %v1407, %v1413
        %v1416 = vadd.f32 %v1408, %v1414
        %s1417 = scalar_lea.vmem %s511, 624 [#allocation10]
        %v1418 = vld [vmem:[%s1417] sm:$0xff]
        %v1419 = vld [vmem:[%s1417 + $0x8] sm:$0xff]
        %v1420 = vperm.slane %v1247, 7
        %v1421 = vmul.f32 %v1418, %v1420
        %v1422 = vmul.f32 %v1419, %v1420
        %v1423 = vadd.f32 %v1415, %v1421
        %v1424 = vadd.f32 %v1416, %v1422
        %s1425 = scalar_lea.vmem %s511, 640 [#allocation10]
        %v1426 = vld [vmem:[%s1425] sm:$0xff]
        %v1427 = vld [vmem:[%s1425 + $0x8] sm:$0xff]
        %v1428 = vperm.slane %v1234, 0
        %v1429 = vmul.f32 %v1426, %v1428
        %v1430 = vmul.f32 %v1427, %v1428
        %v1431 = vadd.f32 %v1423, %v1429
        %v1432 = vadd.f32 %v1424, %v1430
        %s1433 = scalar_lea.vmem %s511, 656 [#allocation10]
        %v1434 = vld [vmem:[%s1433] sm:$0xff]
        %v1435 = vld [vmem:[%s1433 + $0x8] sm:$0xff]
        %v1436 = vperm.slane %v1221, 1
        %v1437 = vmul.f32 %v1434, %v1436
        %v1438 = vmul.f32 %v1435, %v1436
        %v1439 = vadd.f32 %v1431, %v1437
        %v1440 = vadd.f32 %v1432, %v1438
        %s1441 = scalar_lea.vmem %s511, 672 [#allocation10]
        %v1442 = vld [vmem:[%s1441] sm:$0xff]
        %v1443 = vld [vmem:[%s1441 + $0x8] sm:$0xff]
        %v1444 = vperm.slane %v1208, 2
        %v1445 = vmul.f32 %v1442, %v1444
        %v1446 = vmul.f32 %v1443, %v1444
        %v1447 = vadd.f32 %v1439, %v1445
        %v1448 = vadd.f32 %v1440, %v1446
        %s1449 = scalar_lea.vmem %s511, 688 [#allocation10]
        %v1450 = vld [vmem:[%s1449] sm:$0xff]
        %v1451 = vld [vmem:[%s1449 + $0x8] sm:$0xff]
        %v1452 = vperm.slane %v1195, 3
        %v1453 = vmul.f32 %v1450, %v1452
        %v1454 = vmul.f32 %v1451, %v1452
        %v1455 = vadd.f32 %v1447, %v1453
        %v1456 = vadd.f32 %v1448, %v1454
        %s1457 = scalar_lea.vmem %s511, 704 [#allocation10]
        %v1458 = vld [vmem:[%s1457] sm:$0xff]
        %v1459 = vld [vmem:[%s1457 + $0x8] sm:$0xff]
        %v1460 = vperm.slane %v1182, 4
        %v1461 = vmul.f32 %v1458, %v1460
        %v1462 = vmul.f32 %v1459, %v1460
        %v1463 = vadd.f32 %v1455, %v1461
        %v1464 = vadd.f32 %v1456, %v1462
        %s1465 = scalar_lea.vmem %s511, 720 [#allocation10]
        %v1466 = vld [vmem:[%s1465] sm:$0xff]
        %v1467 = vld [vmem:[%s1465 + $0x8] sm:$0xff]
        %v1468 = vperm.slane %v1169, 5
        %v1469 = vmul.f32 %v1466, %v1468
        %v1470 = vmul.f32 %v1467, %v1468
        %v1471 = vadd.f32 %v1463, %v1469
        %v1472 = vadd.f32 %v1464, %v1470
        %s1473 = scalar_lea.vmem %s511, 736 [#allocation10]
        %v1474 = vld [vmem:[%s1473] sm:$0xff]
        %v1475 = vld [vmem:[%s1473 + $0x8] sm:$0xff]
        %v1476 = vperm.slane %v1156, 6
        %v1477 = vmul.f32 %v1474, %v1476
        %v1478 = vmul.f32 %v1475, %v1476
        %v1479 = vadd.f32 %v1471, %v1477
        %v1480 = vadd.f32 %v1472, %v1478
        %s1481 = scalar_lea.vmem %s511, 752 [#allocation10]
        %v1482 = vld [vmem:[%s1481] sm:$0xff]
        %v1483 = vld [vmem:[%s1481 + $0x8] sm:$0xff]
        %v1484 = vperm.slane %v1143, 7
        %v1485 = vmul.f32 %v1482, %v1484
        %v1486 = vmul.f32 %v1483, %v1484
        %v1487 = vadd.f32 %v1479, %v1485
        %v1488 = vadd.f32 %v1480, %v1486
        %v1489 = vtanh.pop %v1487
        %v1490 = vtanh.pop %v1488
        %s1491 = scalar_lea.vmem %s501, 512 [#allocation8]
        %v1492 = vld [vmem:[%s1491] sm:$0xff]
        %v1493 = vld [vmem:[%s1491 + $0x8] sm:$0xff]
        %v1494 = vmul.f32 %v1492, %v1489
        %v1495 = vmul.f32 %v1493, %v1490
        %v1496 = vadd.f32 %v1494, %v1495
        %v1497 = vrot.slane %v1496, 4
        %v1498 = vadd.f32 %v1496, %v1497
        %v1499 = vrot.slane %v1498, 2
        %v1500 = vadd.f32 %v1498, %v1499
        %v1501 = vrot.slane %v1500, 1
        %v1502 = vadd.f32 %v1500, %v1501
        %v1503 = vadd.f32 %v1338, %v1502
        %s1504 = scalar_lea.vmem %s501, 528 [#allocation8]
        %v1505 = vld [vmem:[%s1504] sm:$0xff]
        %v1506 = vld [vmem:[%s1504 + $0x8] sm:$0xff]
        %v1507 = vmul.f32 %v1505, %v1489
        %v1508 = vmul.f32 %v1506, %v1490
        %v1509 = vadd.f32 %v1507, %v1508
        %v1510 = vrot.slane %v1509, 4
        %v1511 = vadd.f32 %v1509, %v1510
        %v1512 = vrot.slane %v1511, 2
        %v1513 = vadd.f32 %v1511, %v1512
        %v1514 = vrot.slane %v1513, 1
        %v1515 = vadd.f32 %v1513, %v1514
        %v1516 = vadd.f32 %v1325, %v1515
        %s1517 = scalar_lea.vmem %s501, 544 [#allocation8]
        %v1518 = vld [vmem:[%s1517] sm:$0xff]
        %v1519 = vld [vmem:[%s1517 + $0x8] sm:$0xff]
        %v1520 = vmul.f32 %v1518, %v1489
        %v1521 = vmul.f32 %v1519, %v1490
        %v1522 = vadd.f32 %v1520, %v1521
        %v1523 = vrot.slane %v1522, 4
        %v1524 = vadd.f32 %v1522, %v1523
        %v1525 = vrot.slane %v1524, 2
        %v1526 = vadd.f32 %v1524, %v1525
        %v1527 = vrot.slane %v1526, 1
        %v1528 = vadd.f32 %v1526, %v1527
        %v1529 = vadd.f32 %v1312, %v1528
        %s1530 = scalar_lea.vmem %s501, 560 [#allocation8]
        %v1531 = vld [vmem:[%s1530] sm:$0xff]
        %v1532 = vld [vmem:[%s1530 + $0x8] sm:$0xff]
        %v1533 = vmul.f32 %v1531, %v1489
        %v1534 = vmul.f32 %v1532, %v1490
        %v1535 = vadd.f32 %v1533, %v1534
        %v1536 = vrot.slane %v1535, 4
        %v1537 = vadd.f32 %v1535, %v1536
        %v1538 = vrot.slane %v1537, 2
        %v1539 = vadd.f32 %v1537, %v1538
        %v1540 = vrot.slane %v1539, 1
        %v1541 = vadd.f32 %v1539, %v1540
        %v1542 = vadd.f32 %v1299, %v1541
        %s1543 = scalar_lea.vmem %s501, 576 [#allocation8]
        %v1544 = vld [vmem:[%s1543] sm:$0xff]
        %v1545 = vld [vmem:[%s1543 + $0x8] sm:$0xff]
        %v1546 = vmul.f32 %v1544, %v1489
        %v1547 = vmul.f32 %v1545, %v1490
        %v1548 = vadd.f32 %v1546, %v1547
        %v1549 = vrot.slane %v1548, 4
        %v1550 = vadd.f32 %v1548, %v1549
        %v1551 = vrot.slane %v1550, 2
        %v1552 = vadd.f32 %v1550, %v1551
        %v1553 = vrot.slane %v1552, 1
        %v1554 = vadd.f32 %v1552, %v1553
        %v1555 = vadd.f32 %v1286, %v1554
        %s1556 = scalar_lea.vmem %s501, 592 [#allocation8]
        %v1557 = vld [vmem:[%s1556] sm:$0xff]
        %v1558 = vld [vmem:[%s1556 + $0x8] sm:$0xff]
        %v1559 = vmul.f32 %v1557, %v1489
        %v1560 = vmul.f32 %v1558, %v1490
        %v1561 = vadd.f32 %v1559, %v1560
        %v1562 = vrot.slane %v1561, 4
        %v1563 = vadd.f32 %v1561, %v1562
        %v1564 = vrot.slane %v1563, 2
        %v1565 = vadd.f32 %v1563, %v1564
        %v1566 = vrot.slane %v1565, 1
        %v1567 = vadd.f32 %v1565, %v1566
        %v1568 = vadd.f32 %v1273, %v1567
        %s1569 = scalar_lea.vmem %s501, 608 [#allocation8]
        %v1570 = vld [vmem:[%s1569] sm:$0xff]
        %v1571 = vld [vmem:[%s1569 + $0x8] sm:$0xff]
        %v1572 = vmul.f32 %v1570, %v1489
        %v1573 = vmul.f32 %v1571, %v1490
        %v1574 = vadd.f32 %v1572, %v1573
        %v1575 = vrot.slane %v1574, 4
        %v1576 = vadd.f32 %v1574, %v1575
        %v1577 = vrot.slane %v1576, 2
        %v1578 = vadd.f32 %v1576, %v1577
        %v1579 = vrot.slane %v1578, 1
        %v1580 = vadd.f32 %v1578, %v1579
        %v1581 = vadd.f32 %v1260, %v1580
        %s1582 = scalar_lea.vmem %s501, 624 [#allocation8]
        %v1583 = vld [vmem:[%s1582] sm:$0xff]
        %v1584 = vld [vmem:[%s1582 + $0x8] sm:$0xff]
        %v1585 = vmul.f32 %v1583, %v1489
        %v1586 = vmul.f32 %v1584, %v1490
        %v1587 = vadd.f32 %v1585, %v1586
        %v1588 = vrot.slane %v1587, 4
        %v1589 = vadd.f32 %v1587, %v1588
        %v1590 = vrot.slane %v1589, 2
        %v1591 = vadd.f32 %v1589, %v1590
        %v1592 = vrot.slane %v1591, 1
        %v1593 = vadd.f32 %v1591, %v1592
        %v1594 = vadd.f32 %v1247, %v1593
        %s1595 = scalar_lea.vmem %s501, 640 [#allocation8]
        %v1596 = vld [vmem:[%s1595] sm:$0xff]
        %v1597 = vld [vmem:[%s1595 + $0x8] sm:$0xff]
        %v1598 = vmul.f32 %v1596, %v1489
        %v1599 = vmul.f32 %v1597, %v1490
        %v1600 = vadd.f32 %v1598, %v1599
        %v1601 = vrot.slane %v1600, 4
        %v1602 = vadd.f32 %v1600, %v1601
        %v1603 = vrot.slane %v1602, 2
        %v1604 = vadd.f32 %v1602, %v1603
        %v1605 = vrot.slane %v1604, 1
        %v1606 = vadd.f32 %v1604, %v1605
        %v1607 = vadd.f32 %v1234, %v1606
        %s1608 = scalar_lea.vmem %s501, 656 [#allocation8]
        %v1609 = vld [vmem:[%s1608] sm:$0xff]
        %v1610 = vld [vmem:[%s1608 + $0x8] sm:$0xff]
        %v1611 = vmul.f32 %v1609, %v1489
        %v1612 = vmul.f32 %v1610, %v1490
        %v1613 = vadd.f32 %v1611, %v1612
        %v1614 = vrot.slane %v1613, 4
        %v1615 = vadd.f32 %v1613, %v1614
        %v1616 = vrot.slane %v1615, 2
        %v1617 = vadd.f32 %v1615, %v1616
        %v1618 = vrot.slane %v1617, 1
        %v1619 = vadd.f32 %v1617, %v1618
        %v1620 = vadd.f32 %v1221, %v1619
        %s1621 = scalar_lea.vmem %s501, 672 [#allocation8]
        %v1622 = vld [vmem:[%s1621] sm:$0xff]
        %v1623 = vld [vmem:[%s1621 + $0x8] sm:$0xff]
        %v1624 = vmul.f32 %v1622, %v1489
        %v1625 = vmul.f32 %v1623, %v1490
        %v1626 = vadd.f32 %v1624, %v1625
        %v1627 = vrot.slane %v1626, 4
        %v1628 = vadd.f32 %v1626, %v1627
        %v1629 = vrot.slane %v1628, 2
        %v1630 = vadd.f32 %v1628, %v1629
        %v1631 = vrot.slane %v1630, 1
        %v1632 = vadd.f32 %v1630, %v1631
        %v1633 = vadd.f32 %v1208, %v1632
        %s1634 = scalar_lea.vmem %s501, 688 [#allocation8]
        %v1635 = vld [vmem:[%s1634] sm:$0xff]
        %v1636 = vld [vmem:[%s1634 + $0x8] sm:$0xff]
        %v1637 = vmul.f32 %v1635, %v1489
        %v1638 = vmul.f32 %v1636, %v1490
        %v1639 = vadd.f32 %v1637, %v1638
        %v1640 = vrot.slane %v1639, 4
        %v1641 = vadd.f32 %v1639, %v1640
        %v1642 = vrot.slane %v1641, 2
        %v1643 = vadd.f32 %v1641, %v1642
        %v1644 = vrot.slane %v1643, 1
        %v1645 = vadd.f32 %v1643, %v1644
        %v1646 = vadd.f32 %v1195, %v1645
        %s1647 = scalar_lea.vmem %s501, 704 [#allocation8]
        %v1648 = vld [vmem:[%s1647] sm:$0xff]
        %v1649 = vld [vmem:[%s1647 + $0x8] sm:$0xff]
        %v1650 = vmul.f32 %v1648, %v1489
        %v1651 = vmul.f32 %v1649, %v1490
        %v1652 = vadd.f32 %v1650, %v1651
        %v1653 = vrot.slane %v1652, 4
        %v1654 = vadd.f32 %v1652, %v1653
        %v1655 = vrot.slane %v1654, 2
        %v1656 = vadd.f32 %v1654, %v1655
        %v1657 = vrot.slane %v1656, 1
        %v1658 = vadd.f32 %v1656, %v1657
        %v1659 = vadd.f32 %v1182, %v1658
        %s1660 = scalar_lea.vmem %s501, 720 [#allocation8]
        %v1661 = vld [vmem:[%s1660] sm:$0xff]
        %v1662 = vld [vmem:[%s1660 + $0x8] sm:$0xff]
        %v1663 = vmul.f32 %v1661, %v1489
        %v1664 = vmul.f32 %v1662, %v1490
        %v1665 = vadd.f32 %v1663, %v1664
        %v1666 = vrot.slane %v1665, 4
        %v1667 = vadd.f32 %v1665, %v1666
        %v1668 = vrot.slane %v1667, 2
        %v1669 = vadd.f32 %v1667, %v1668
        %v1670 = vrot.slane %v1669, 1
        %v1671 = vadd.f32 %v1669, %v1670
        %v1672 = vadd.f32 %v1169, %v1671
        %s1673 = scalar_lea.vmem %s501, 736 [#allocation8]
        %v1674 = vld [vmem:[%s1673] sm:$0xff]
        %v1675 = vld [vmem:[%s1673 + $0x8] sm:$0xff]
        %v1676 = vmul.f32 %v1674, %v1489
        %v1677 = vmul.f32 %v1675, %v1490
        %v1678 = vadd.f32 %v1676, %v1677
        %v1679 = vrot.slane %v1678, 4
        %v1680 = vadd.f32 %v1678, %v1679
        %v1681 = vrot.slane %v1680, 2
        %v1682 = vadd.f32 %v1680, %v1681
        %v1683 = vrot.slane %v1682, 1
        %v1684 = vadd.f32 %v1682, %v1683
        %v1685 = vadd.f32 %v1156, %v1684
        %s1686 = scalar_lea.vmem %s501, 752 [#allocation8]
        %v1687 = vld [vmem:[%s1686] sm:$0xff]
        %v1688 = vld [vmem:[%s1686 + $0x8] sm:$0xff]
        %v1689 = vmul.f32 %v1687, %v1489
        %v1690 = vmul.f32 %v1688, %v1490
        %v1691 = vadd.f32 %v1689, %v1690
        %v1692 = vrot.slane %v1691, 4
        %v1693 = vadd.f32 %v1691, %v1692
        %v1694 = vrot.slane %v1693, 2
        %v1695 = vadd.f32 %v1693, %v1694
        %v1696 = vrot.slane %v1695, 1
        %v1697 = vadd.f32 %v1695, %v1696
        %v1698 = vadd.f32 %v1143, %v1697
        %s1699 = scalar_lea.vmem %s531, 32 [#allocation13]
        %v1700 = vld [vmem:[%s1699] sm:$0xff]
        %v1701 = vld [vmem:[%s1699 + $0x8] sm:$0xff]
        %v1702 = vmul.f32 %v1489, %v1489
        %v1703 = vmul.f32 %v1490, %v1490
        %v1704 = vsub.f32 1.0, %v1702
        %v1705 = vsub.f32 1.0, %v1703
        %v1706 = vmul.f32 %v1700, %v1704
        %v1707 = vmul.f32 %v1701, %v1705
        %v1708 = vadd.f32 %v1706, 1.0
        %v1709 = vadd.f32 %v1707, 1.0
        %v1710 = vand.u32 2147483647, %v1708
        %v1711 = vand.u32 2147483647, %v1709
        %v1712 = vlog2.pop %v1710
        %v1713 = vmul.f32 %v1712, 0.6931472
        %v1714 = vlog2.pop %v1711
        %v1715 = vmul.f32 %v1714, 0.6931472
        %v1716 = vadd.f32 %v1356, %v1713
        %v1717 = vadd.f32 %v1357, %v1715
        %s1718 = scalar_lea.vmem %s521, 48 [#allocation11]
        %v1719 = vld [vmem:[%s1718] sm:$0xff]
        %v1720 = vld [vmem:[%s1718 + $0x8] sm:$0xff]
        %s1721 = scalar_lea.vmem %s511, 768 [#allocation10]
        %v1722 = vld [vmem:[%s1721] sm:$0xff]
        %v1723 = vld [vmem:[%s1721 + $0x8] sm:$0xff]
        %v1724 = vperm.slane %v1698, 7
        %v1725 = vmul.f32 %v1722, %v1724
        %v1726 = vmul.f32 %v1723, %v1724
        %v1727 = vadd.f32 %v1719, %v1725
        %v1728 = vadd.f32 %v1720, %v1726
        %s1729 = scalar_lea.vmem %s511, 784 [#allocation10]
        %v1730 = vld [vmem:[%s1729] sm:$0xff]
        %v1731 = vld [vmem:[%s1729 + $0x8] sm:$0xff]
        %v1732 = vperm.slane %v1685, 6
        %v1733 = vmul.f32 %v1730, %v1732
        %v1734 = vmul.f32 %v1731, %v1732
        %v1735 = vadd.f32 %v1727, %v1733
        %v1736 = vadd.f32 %v1728, %v1734
        %s1737 = scalar_lea.vmem %s511, 800 [#allocation10]
        %v1738 = vld [vmem:[%s1737] sm:$0xff]
        %v1739 = vld [vmem:[%s1737 + $0x8] sm:$0xff]
        %v1740 = vperm.slane %v1672, 5
        %v1741 = vmul.f32 %v1738, %v1740
        %v1742 = vmul.f32 %v1739, %v1740
        %v1743 = vadd.f32 %v1735, %v1741
        %v1744 = vadd.f32 %v1736, %v1742
        %s1745 = scalar_lea.vmem %s511, 816 [#allocation10]
        %v1746 = vld [vmem:[%s1745] sm:$0xff]
        %v1747 = vld [vmem:[%s1745 + $0x8] sm:$0xff]
        %v1748 = vperm.slane %v1659, 4
        %v1749 = vmul.f32 %v1746, %v1748
        %v1750 = vmul.f32 %v1747, %v1748
        %v1751 = vadd.f32 %v1743, %v1749
        %v1752 = vadd.f32 %v1744, %v1750
        %s1753 = scalar_lea.vmem %s511, 832 [#allocation10]
        %v1754 = vld [vmem:[%s1753] sm:$0xff]
        %v1755 = vld [vmem:[%s1753 + $0x8] sm:$0xff]
        %v1756 = vperm.slane %v1646, 3
        %v1757 = vmul.f32 %v1754, %v1756
        %v1758 = vmul.f32 %v1755, %v1756
        %v1759 = vadd.f32 %v1751, %v1757
        %v1760 = vadd.f32 %v1752, %v1758
        %s1761 = scalar_lea.vmem %s511, 848 [#allocation10]
        %v1762 = vld [vmem:[%s1761] sm:$0xff]
        %v1763 = vld [vmem:[%s1761 + $0x8] sm:$0xff]
        %v1764 = vperm.slane %v1633, 2
        %v1765 = vmul.f32 %v1762, %v1764
        %v1766 = vmul.f32 %v1763, %v1764
        %v1767 = vadd.f32 %v1759, %v1765
        %v1768 = vadd.f32 %v1760, %v1766
        %s1769 = scalar_lea.vmem %s511, 864 [#allocation10]
        %v1770 = vld [vmem:[%s1769] sm:$0xff]
        %v1771 = vld [vmem:[%s1769 + $0x8] sm:$0xff]
        %v1772 = vperm.slane %v1620, 1
        %v1773 = vmul.f32 %v1770, %v1772
        %v1774 = vmul.f32 %v1771, %v1772
        %v1775 = vadd.f32 %v1767, %v1773
        %v1776 = vadd.f32 %v1768, %v1774
        %s1777 = scalar_lea.vmem %s511, 880 [#allocation10]
        %v1778 = vld [vmem:[%s1777] sm:$0xff]
        %v1779 = vld [vmem:[%s1777 + $0x8] sm:$0xff]
        %v1780 = vperm.slane %v1607, 0
        %v1781 = vmul.f32 %v1778, %v1780
        %v1782 = vmul.f32 %v1779, %v1780
        %v1783 = vadd.f32 %v1775, %v1781
        %v1784 = vadd.f32 %v1776, %v1782
        %s1785 = scalar_lea.vmem %s511, 896 [#allocation10]
        %v1786 = vld [vmem:[%s1785] sm:$0xff]
        %v1787 = vld [vmem:[%s1785 + $0x8] sm:$0xff]
        %v1788 = vperm.slane %v1594, 7
        %v1789 = vmul.f32 %v1786, %v1788
        %v1790 = vmul.f32 %v1787, %v1788
        %v1791 = vadd.f32 %v1783, %v1789
        %v1792 = vadd.f32 %v1784, %v1790
        %s1793 = scalar_lea.vmem %s511, 912 [#allocation10]
        %v1794 = vld [vmem:[%s1793] sm:$0xff]
        %v1795 = vld [vmem:[%s1793 + $0x8] sm:$0xff]
        %v1796 = vperm.slane %v1581, 6
        %v1797 = vmul.f32 %v1794, %v1796
        %v1798 = vmul.f32 %v1795, %v1796
        %v1799 = vadd.f32 %v1791, %v1797
        %v1800 = vadd.f32 %v1792, %v1798
        %s1801 = scalar_lea.vmem %s511, 928 [#allocation10]
        %v1802 = vld [vmem:[%s1801] sm:$0xff]
        %v1803 = vld [vmem:[%s1801 + $0x8] sm:$0xff]
        %v1804 = vperm.slane %v1568, 5
        %v1805 = vmul.f32 %v1802, %v1804
        %v1806 = vmul.f32 %v1803, %v1804
        %v1807 = vadd.f32 %v1799, %v1805
        %v1808 = vadd.f32 %v1800, %v1806
        %s1809 = scalar_lea.vmem %s511, 944 [#allocation10]
        %v1810 = vld [vmem:[%s1809] sm:$0xff]
        %v1811 = vld [vmem:[%s1809 + $0x8] sm:$0xff]
        %v1812 = vperm.slane %v1555, 4
        %v1813 = vmul.f32 %v1810, %v1812
        %v1814 = vmul.f32 %v1811, %v1812
        %v1815 = vadd.f32 %v1807, %v1813
        %v1816 = vadd.f32 %v1808, %v1814
        %s1817 = scalar_lea.vmem %s511, 960 [#allocation10]
        %v1818 = vld [vmem:[%s1817] sm:$0xff]
        %v1819 = vld [vmem:[%s1817 + $0x8] sm:$0xff]
        %v1820 = vperm.slane %v1542, 3
        %v1821 = vmul.f32 %v1818, %v1820
        %v1822 = vmul.f32 %v1819, %v1820
        %v1823 = vadd.f32 %v1815, %v1821
        %v1824 = vadd.f32 %v1816, %v1822
        %s1825 = scalar_lea.vmem %s511, 976 [#allocation10]
        %v1826 = vld [vmem:[%s1825] sm:$0xff]
        %v1827 = vld [vmem:[%s1825 + $0x8] sm:$0xff]
        %v1828 = vperm.slane %v1529, 2
        %v1829 = vmul.f32 %v1826, %v1828
        %v1830 = vmul.f32 %v1827, %v1828
        %v1831 = vadd.f32 %v1823, %v1829
        %v1832 = vadd.f32 %v1824, %v1830
        %s1833 = scalar_lea.vmem %s511, 992 [#allocation10]
        %v1834 = vld [vmem:[%s1833] sm:$0xff]
        %v1835 = vld [vmem:[%s1833 + $0x8] sm:$0xff]
        %v1836 = vperm.slane %v1516, 1
        %v1837 = vmul.f32 %v1834, %v1836
        %v1838 = vmul.f32 %v1835, %v1836
        %v1839 = vadd.f32 %v1831, %v1837
        %v1840 = vadd.f32 %v1832, %v1838
        %s1841 = scalar_lea.vmem %s511, 1008 [#allocation10]
        %v1842 = vld [vmem:[%s1841] sm:$0xff]
        %v1843 = vld [vmem:[%s1841 + $0x8] sm:$0xff]
        %v1844 = vperm.slane %v1503, 0
        %v1845 = vmul.f32 %v1842, %v1844
        %v1846 = vmul.f32 %v1843, %v1844
        %v1847 = vadd.f32 %v1839, %v1845
        %v1848 = vadd.f32 %v1840, %v1846
        %v1849 = vtanh.pop %v1847
        %v1850 = vtanh.pop %v1848
        %s1851 = scalar_lea.vmem %s501, 768 [#allocation8]
        %v1852 = vld [vmem:[%s1851] sm:$0xff]
        %v1853 = vld [vmem:[%s1851 + $0x8] sm:$0xff]
        %v1854 = vmul.f32 %v1852, %v1849
        %v1855 = vmul.f32 %v1853, %v1850
        %v1856 = vadd.f32 %v1854, %v1855
        %v1857 = vrot.slane %v1856, 4
        %v1858 = vadd.f32 %v1856, %v1857
        %v1859 = vrot.slane %v1858, 2
        %v1860 = vadd.f32 %v1858, %v1859
        %v1861 = vrot.slane %v1860, 1
        %v1862 = vadd.f32 %v1860, %v1861
        %v1863 = vadd.f32 %v1698, %v1862
        %s1864 = scalar_lea.vmem %s501, 784 [#allocation8]
        %v1865 = vld [vmem:[%s1864] sm:$0xff]
        %v1866 = vld [vmem:[%s1864 + $0x8] sm:$0xff]
        %v1867 = vmul.f32 %v1865, %v1849
        %v1868 = vmul.f32 %v1866, %v1850
        %v1869 = vadd.f32 %v1867, %v1868
        %v1870 = vrot.slane %v1869, 4
        %v1871 = vadd.f32 %v1869, %v1870
        %v1872 = vrot.slane %v1871, 2
        %v1873 = vadd.f32 %v1871, %v1872
        %v1874 = vrot.slane %v1873, 1
        %v1875 = vadd.f32 %v1873, %v1874
        %v1876 = vadd.f32 %v1685, %v1875
        %s1877 = scalar_lea.vmem %s501, 800 [#allocation8]
        %v1878 = vld [vmem:[%s1877] sm:$0xff]
        %v1879 = vld [vmem:[%s1877 + $0x8] sm:$0xff]
        %v1880 = vmul.f32 %v1878, %v1849
        %v1881 = vmul.f32 %v1879, %v1850
        %v1882 = vadd.f32 %v1880, %v1881
        %v1883 = vrot.slane %v1882, 4
        %v1884 = vadd.f32 %v1882, %v1883
        %v1885 = vrot.slane %v1884, 2
        %v1886 = vadd.f32 %v1884, %v1885
        %v1887 = vrot.slane %v1886, 1
        %v1888 = vadd.f32 %v1886, %v1887
        %v1889 = vadd.f32 %v1672, %v1888
        %s1890 = scalar_lea.vmem %s501, 816 [#allocation8]
        %v1891 = vld [vmem:[%s1890] sm:$0xff]
        %v1892 = vld [vmem:[%s1890 + $0x8] sm:$0xff]
        %v1893 = vmul.f32 %v1891, %v1849
        %v1894 = vmul.f32 %v1892, %v1850
        %v1895 = vadd.f32 %v1893, %v1894
        %v1896 = vrot.slane %v1895, 4
        %v1897 = vadd.f32 %v1895, %v1896
        %v1898 = vrot.slane %v1897, 2
        %v1899 = vadd.f32 %v1897, %v1898
        %v1900 = vrot.slane %v1899, 1
        %v1901 = vadd.f32 %v1899, %v1900
        %v1902 = vadd.f32 %v1659, %v1901
        %s1903 = scalar_lea.vmem %s501, 832 [#allocation8]
        %v1904 = vld [vmem:[%s1903] sm:$0xff]
        %v1905 = vld [vmem:[%s1903 + $0x8] sm:$0xff]
        %v1906 = vmul.f32 %v1904, %v1849
        %v1907 = vmul.f32 %v1905, %v1850
        %v1908 = vadd.f32 %v1906, %v1907
        %v1909 = vrot.slane %v1908, 4
        %v1910 = vadd.f32 %v1908, %v1909
        %v1911 = vrot.slane %v1910, 2
        %v1912 = vadd.f32 %v1910, %v1911
        %v1913 = vrot.slane %v1912, 1
        %v1914 = vadd.f32 %v1912, %v1913
        %v1915 = vadd.f32 %v1646, %v1914
        %s1916 = scalar_lea.vmem %s501, 848 [#allocation8]
        %v1917 = vld [vmem:[%s1916] sm:$0xff]
        %v1918 = vld [vmem:[%s1916 + $0x8] sm:$0xff]
        %v1919 = vmul.f32 %v1917, %v1849
        %v1920 = vmul.f32 %v1918, %v1850
        %v1921 = vadd.f32 %v1919, %v1920
        %v1922 = vrot.slane %v1921, 4
        %v1923 = vadd.f32 %v1921, %v1922
        %v1924 = vrot.slane %v1923, 2
        %v1925 = vadd.f32 %v1923, %v1924
        %v1926 = vrot.slane %v1925, 1
        %v1927 = vadd.f32 %v1925, %v1926
        %v1928 = vadd.f32 %v1633, %v1927
        %s1929 = scalar_lea.vmem %s501, 864 [#allocation8]
        %v1930 = vld [vmem:[%s1929] sm:$0xff]
        %v1931 = vld [vmem:[%s1929 + $0x8] sm:$0xff]
        %v1932 = vmul.f32 %v1930, %v1849
        %v1933 = vmul.f32 %v1931, %v1850
        %v1934 = vadd.f32 %v1932, %v1933
        %v1935 = vrot.slane %v1934, 4
        %v1936 = vadd.f32 %v1934, %v1935
        %v1937 = vrot.slane %v1936, 2
        %v1938 = vadd.f32 %v1936, %v1937
        %v1939 = vrot.slane %v1938, 1
        %v1940 = vadd.f32 %v1938, %v1939
        %v1941 = vadd.f32 %v1620, %v1940
        %s1942 = scalar_lea.vmem %s501, 880 [#allocation8]
        %v1943 = vld [vmem:[%s1942] sm:$0xff]
        %v1944 = vld [vmem:[%s1942 + $0x8] sm:$0xff]
        %v1945 = vmul.f32 %v1943, %v1849
        %v1946 = vmul.f32 %v1944, %v1850
        %v1947 = vadd.f32 %v1945, %v1946
        %v1948 = vrot.slane %v1947, 4
        %v1949 = vadd.f32 %v1947, %v1948
        %v1950 = vrot.slane %v1949, 2
        %v1951 = vadd.f32 %v1949, %v1950
        %v1952 = vrot.slane %v1951, 1
        %v1953 = vadd.f32 %v1951, %v1952
        %v1954 = vadd.f32 %v1607, %v1953
        %s1955 = scalar_lea.vmem %s501, 896 [#allocation8]
        %v1956 = vld [vmem:[%s1955] sm:$0xff]
        %v1957 = vld [vmem:[%s1955 + $0x8] sm:$0xff]
        %v1958 = vmul.f32 %v1956, %v1849
        %v1959 = vmul.f32 %v1957, %v1850
        %v1960 = vadd.f32 %v1958, %v1959
        %v1961 = vrot.slane %v1960, 4
        %v1962 = vadd.f32 %v1960, %v1961
        %v1963 = vrot.slane %v1962, 2
        %v1964 = vadd.f32 %v1962, %v1963
        %v1965 = vrot.slane %v1964, 1
        %v1966 = vadd.f32 %v1964, %v1965
        %v1967 = vadd.f32 %v1594, %v1966
        %s1968 = scalar_lea.vmem %s501, 912 [#allocation8]
        %v1969 = vld [vmem:[%s1968] sm:$0xff]
        %v1970 = vld [vmem:[%s1968 + $0x8] sm:$0xff]
        %v1971 = vmul.f32 %v1969, %v1849
        %v1972 = vmul.f32 %v1970, %v1850
        %v1973 = vadd.f32 %v1971, %v1972
        %v1974 = vrot.slane %v1973, 4
        %v1975 = vadd.f32 %v1973, %v1974
        %v1976 = vrot.slane %v1975, 2
        %v1977 = vadd.f32 %v1975, %v1976
        %v1978 = vrot.slane %v1977, 1
        %v1979 = vadd.f32 %v1977, %v1978
        %v1980 = vadd.f32 %v1581, %v1979
        %s1981 = scalar_lea.vmem %s501, 928 [#allocation8]
        %v1982 = vld [vmem:[%s1981] sm:$0xff]
        %v1983 = vld [vmem:[%s1981 + $0x8] sm:$0xff]
        %v1984 = vmul.f32 %v1982, %v1849
        %v1985 = vmul.f32 %v1983, %v1850
        %v1986 = vadd.f32 %v1984, %v1985
        %v1987 = vrot.slane %v1986, 4
        %v1988 = vadd.f32 %v1986, %v1987
        %v1989 = vrot.slane %v1988, 2
        %v1990 = vadd.f32 %v1988, %v1989
        %v1991 = vrot.slane %v1990, 1
        %v1992 = vadd.f32 %v1990, %v1991
        %v1993 = vadd.f32 %v1568, %v1992
        %s1994 = scalar_lea.vmem %s501, 944 [#allocation8]
        %v1995 = vld [vmem:[%s1994] sm:$0xff]
        %v1996 = vld [vmem:[%s1994 + $0x8] sm:$0xff]
        %v1997 = vmul.f32 %v1995, %v1849
        %v1998 = vmul.f32 %v1996, %v1850
        %v1999 = vadd.f32 %v1997, %v1998
        %v2000 = vrot.slane %v1999, 4
        %v2001 = vadd.f32 %v1999, %v2000
        %v2002 = vrot.slane %v2001, 2
        %v2003 = vadd.f32 %v2001, %v2002
        %v2004 = vrot.slane %v2003, 1
        %v2005 = vadd.f32 %v2003, %v2004
        %v2006 = vadd.f32 %v1555, %v2005
        %s2007 = scalar_lea.vmem %s501, 960 [#allocation8]
        %v2008 = vld [vmem:[%s2007] sm:$0xff]
        %v2009 = vld [vmem:[%s2007 + $0x8] sm:$0xff]
        %v2010 = vmul.f32 %v2008, %v1849
        %v2011 = vmul.f32 %v2009, %v1850
        %v2012 = vadd.f32 %v2010, %v2011
        %v2013 = vrot.slane %v2012, 4
        %v2014 = vadd.f32 %v2012, %v2013
        %v2015 = vrot.slane %v2014, 2
        %v2016 = vadd.f32 %v2014, %v2015
        %v2017 = vrot.slane %v2016, 1
        %v2018 = vadd.f32 %v2016, %v2017
        %v2019 = vadd.f32 %v1542, %v2018
        %s2020 = scalar_lea.vmem %s501, 976 [#allocation8]
        %v2021 = vld [vmem:[%s2020] sm:$0xff]
        %v2022 = vld [vmem:[%s2020 + $0x8] sm:$0xff]
        %v2023 = vmul.f32 %v2021, %v1849
        %v2024 = vmul.f32 %v2022, %v1850
        %v2025 = vadd.f32 %v2023, %v2024
        %v2026 = vrot.slane %v2025, 4
        %v2027 = vadd.f32 %v2025, %v2026
        %v2028 = vrot.slane %v2027, 2
        %v2029 = vadd.f32 %v2027, %v2028
        %v2030 = vrot.slane %v2029, 1
        %v2031 = vadd.f32 %v2029, %v2030
        %v2032 = vadd.f32 %v1529, %v2031
        %s2033 = scalar_lea.vmem %s501, 992 [#allocation8]
        %v2034 = vld [vmem:[%s2033] sm:$0xff]
        %v2035 = vld [vmem:[%s2033 + $0x8] sm:$0xff]
        %v2036 = vmul.f32 %v2034, %v1849
        %v2037 = vmul.f32 %v2035, %v1850
        %v2038 = vadd.f32 %v2036, %v2037
        %v2039 = vrot.slane %v2038, 4
        %v2040 = vadd.f32 %v2038, %v2039
        %v2041 = vrot.slane %v2040, 2
        %v2042 = vadd.f32 %v2040, %v2041
        %v2043 = vrot.slane %v2042, 1
        %v2044 = vadd.f32 %v2042, %v2043
        %v2045 = vadd.f32 %v1516, %v2044
        %s2046 = scalar_lea.vmem %s501, 1008 [#allocation8]
        %v2047 = vld [vmem:[%s2046] sm:$0xff]
        %v2048 = vld [vmem:[%s2046 + $0x8] sm:$0xff]
        %v2049 = vmul.f32 %v2047, %v1849
        %v2050 = vmul.f32 %v2048, %v1850
        %v2051 = vadd.f32 %v2049, %v2050
        %v2052 = vrot.slane %v2051, 4
        %v2053 = vadd.f32 %v2051, %v2052
        %v2054 = vrot.slane %v2053, 2
        %v2055 = vadd.f32 %v2053, %v2054
        %v2056 = vrot.slane %v2055, 1
        %v2057 = vadd.f32 %v2055, %v2056
        %v2058 = vadd.f32 %v1503, %v2057
        %s2059 = scalar_lea.vmem %s531, 48 [#allocation13]
        %v2060 = vld [vmem:[%s2059] sm:$0xff]
        %v2061 = vld [vmem:[%s2059 + $0x8] sm:$0xff]
        %v2062 = vmul.f32 %v1849, %v1849
        %v2063 = vmul.f32 %v1850, %v1850
        %v2064 = vsub.f32 1.0, %v2062
        %v2065 = vsub.f32 1.0, %v2063
        %v2066 = vmul.f32 %v2060, %v2064
        %v2067 = vmul.f32 %v2061, %v2065
        %v2068 = vadd.f32 %v2066, 1.0
        %v2069 = vadd.f32 %v2067, 1.0
        %v2070 = vand.u32 2147483647, %v2068
        %v2071 = vand.u32 2147483647, %v2069
        %v2072 = vlog2.pop %v2070
        %v2073 = vmul.f32 %v2072, 0.6931472
        %v2074 = vlog2.pop %v2071
        %v2075 = vmul.f32 %v2074, 0.6931472
        %v2076 = vadd.f32 %v1716, %v2073
        %v2077 = vadd.f32 %v1717, %v2075
        %vm2078 = vcmask 1040384
        %v2079 = vsel %vm2078, %v2058, %v2045
        %vm2080 = vcmask 1041408
        %v2081 = vsel %vm2080, %v2079, %v2032
        %vm2082 = vcmask 1042432
        %v2083 = vsel %vm2082, %v2081, %v2019
        %vm2084 = vcmask 1043456
        %v2085 = vsel %vm2084, %v2083, %v2006
        %vm2086 = vcmask 1044480
        %v2087 = vsel %vm2086, %v2085, %v1993
        %vm2088 = vcmask 1045504
        %v2089 = vsel %vm2088, %v2087, %v1980
        %vm2090 = vcmask 1046528
        %v2091 = vsel %vm2090, %v2089, %v1967
        %v2092 = vsel %vm2078, %v1954, %v1941
        %v2093 = vsel %vm2080, %v2092, %v1928
        %v2094 = vsel %vm2082, %v2093, %v1915
        %v2095 = vsel %vm2084, %v2094, %v1902
        %v2096 = vsel %vm2086, %v2095, %v1889
        %v2097 = vsel %vm2088, %v2096, %v1876
        %v2098 = vsel %vm2090, %v2097, %v1863
        %2099 = vst [vmem:[%s599] sm:$0xff] %v2091
        %2100 = vst [vmem:[%s599 + $0x8] sm:$0xff] %v2098
        %v2101 = vadd.f32 %v2076, %v2077
        %v2102 = vrot.slane %v2101, 4
        %v2103 = vadd.f32 %v2101, %v2102
        %v2104 = vrot.slane %v2103, 2
        %v2105 = vadd.f32 %v2103, %v2104
        %v2106 = vrot.slane %v2105, 1
        %v2107 = vadd.f32 %v2105, %v2106
        %2108 = vst [vmem:[%s605] sm:$0x1] %v2107
        %s2109 = sand.u32 %s229, 1
        %s2110 = scalar_lea.sflag [#allocation4], %s2109
        %s2111 = sand.u32 %s229, 1
        %s2112 = smul.addr %s2111, 16
        %s2113 = scalar_lea.vmem [#allocation14], %s2112
        %s2114 = sand.u32 %s39, 1
        %s2115 = scalar_lea.sflag [#allocation16], %s2114
        %s2116 = sand.u32 %s255, 1
        %s2117 = smul.addr %s2116, 16
        %s2118 = scalar_lea.vmem [#allocation15], %s2117
        %s2119 = sand.u32 %s39, 1
        %s2120 = scalar_lea.sflag [#allocation16], %s2119
        %s2121 = sand.u32 %s281, 1
        %s2122 = scalar_lea.vmem [#allocation17], %s2121
        // Predicated region
        $region77: #{tpu_custom_call.1} parent=47 // pred_check
          %p2123 = pneg %p239
        $region78: #{tpu_custom_call.1} parent=47 // pred_check_branch
          %2125 = sbr.rel (%p2123) target = $region80
        $region79: #{tpu_custom_call.1} parent=47 // pred_region
          %2127 = vsyncadd %s2110, 0
          %s2128 = smul.addr %s39, 8
          %s2129 = scalar_lea.hbm %s7, %s2128
          %s2130 = sshll.u32 %s2113, 4
          %s2131 = int_to_ptr.vmem [resolvable:$true] %s2130
          %s2132 = sshll.u32 %s2129, 4
          %s2133 = int_to_ptr.hbm [resolvable:$true] %s2132
          %2138 = dma.vmem_to_hbm [thread:$0]  %s2131, 256, %s2133, %s2110, 128, 256, 8
        $region80: #{tpu_custom_call.1} parent=47 // pred_fallthru
          _
        // Predicated region
        $region81: #{tpu_custom_call.1} parent=47 // pred_check
          %p2139 = pneg %p265
        $region82: #{tpu_custom_call.1} parent=47 // pred_check_branch
          %2141 = sbr.rel (%p2139) target = $region84
        $region83: #{tpu_custom_call.1} parent=47 // pred_region
          %2143 = vsyncadd %s2115, 0
          %s2144 = smul.addr %s39, 8
          %s2145 = scalar_lea.hbm %s8, %s2144
          %s2146 = sshll.u32 %s2118, 4
          %s2147 = int_to_ptr.vmem [resolvable:$true] %s2146
          %s2148 = sshll.u32 %s2145, 4
          %s2149 = int_to_ptr.hbm [resolvable:$true] %s2148
          %2154 = dma.vmem_to_hbm [thread:$0]  %s2147, 256, %s2149, %s2115, 128, 256, 8
        $region84: #{tpu_custom_call.1} parent=47 // pred_fallthru
          _
        // Predicated region
        $region85: #{tpu_custom_call.1} parent=47 // pred_check
          %p2155 = pneg %p291
        $region86: #{tpu_custom_call.1} parent=47 // pred_check_branch
          %2157 = sbr.rel (%p2155) target = $region88
        $region87: #{tpu_custom_call.1} parent=47 // pred_region
          %2159 = vsyncadd %s2120, 0
          %s2160 = scalar_lea.hbm %s9, %s39
          %s2162 = sshll.u32 %s2122, 4
          %s2163 = int_to_ptr.vmem [resolvable:$true] %s2162
          %s2164 = sshll.u32 %s2160, 4
          %s2165 = int_to_ptr.hbm [resolvable:$true] %s2164
          %2167 = dma.vmem_to_hbm [thread:$0]  %s2163, 16, %s2165, %s2120
        $region88: #{tpu_custom_call.1} parent=47 // pred_fallthru
          _
      $region48: #{tpu_custom_call.1} parent=5 // pred_fallthru
        _
      %p2168 = scmp.le.s32.totalorder 2, %s34
      // Predicated region
      $region89: #{tpu_custom_call.1} parent=5 // pred_check
        %p2169 = pneg %p2168
      $region90: #{tpu_custom_call.1} parent=5 // pred_check_branch
        %2171 = sbr.rel (%p2169) target = $region92
      $region91: #{tpu_custom_call.1} parent=5 // pred_region
        %s2172 = ssub.s32 %s34, 2
        // Predicated region
        $region93: #{tpu_custom_call.1} parent=91 // pred_check
          %p2173 = pneg %p245
        $region94: #{tpu_custom_call.1} parent=91 // pred_check_branch
          %2175 = sbr.rel (%p2173) target = $region96
        $region95: #{tpu_custom_call.1} parent=91 // pred_region
          %s2176 = sand.u32 %s230, 1
          %s2177 = scalar_lea.sflag [#allocation4], %s2176
          %s2178 = sand.u32 %s230, 1
          %s2179 = smul.addr %s2178, 16
          %s2180 = scalar_lea.vmem [#allocation14], %s2179
          %2182 = dma.done %s2177, 256
        $region96: #{tpu_custom_call.1} parent=91 // pred_fallthru
          _
        // Predicated region
        $region97: #{tpu_custom_call.1} parent=91 // pred_check
          %p2183 = pneg %p271
        $region98: #{tpu_custom_call.1} parent=91 // pred_check_branch
          %2185 = sbr.rel (%p2183) target = $region100
        $region99: #{tpu_custom_call.1} parent=91 // pred_region
          %s2186 = sand.u32 %s40, 1
          %s2187 = scalar_lea.sflag [#allocation16], %s2186
          %s2188 = sand.u32 %s256, 1
          %s2189 = smul.addr %s2188, 16
          %s2190 = scalar_lea.vmem [#allocation15], %s2189
          %2192 = dma.done %s2187, 256
        $region100: #{tpu_custom_call.1} parent=91 // pred_fallthru
          _
        // Predicated region
        $region101: #{tpu_custom_call.1} parent=91 // pred_check
          %p2193 = pneg %p297
        $region102: #{tpu_custom_call.1} parent=91 // pred_check_branch
          %2195 = sbr.rel (%p2193) target = $region104
        $region103: #{tpu_custom_call.1} parent=91 // pred_region
          %s2196 = sand.u32 %s40, 1
          %s2197 = scalar_lea.sflag [#allocation16], %s2196
          %s2198 = sand.u32 %s282, 1
          %s2199 = scalar_lea.vmem [#allocation17], %s2198
          %2201 = dma.done %s2197, 16
        $region104: #{tpu_custom_call.1} parent=91 // pred_fallthru
          _
      $region92: #{tpu_custom_call.1} parent=5 // pred_fallthru
        _
    $region6: #{tpu_custom_call.1} parent=1 // loop_footer
      %s38 = sadd.s32 1, %s34
    $region7: #{tpu_custom_call.1} parent=1 // loop_footer_branch
      %33 = sbr.rel target = $region3
    $region8: #{tpu_custom_call.1} parent=1 // loop_exit
      _
    %2202 = vsyncpa [#allocation3], 1
    %s2203 = scalar_lea.sflag [#allocation3], 1
    %2204 = vsyncpa %s2203, 1
    %2205 = vsyncpa [#allocation6], 1
    %s2206 = scalar_lea.sflag [#allocation6], 1
    %2207 = vsyncpa %s2206, 1
    %2208 = vsyncpa [#allocation9], 1
    %s2209 = scalar_lea.sflag [#allocation9], 1
    %2210 = vsyncpa %s2209, 1
    %2211 = vsyncpa [#allocation12], 1
    %s2212 = scalar_lea.sflag [#allocation12], 1
    %2213 = vsyncpa %s2212, 1
    %2214 = vsyncpa [#allocation4], 1
    %s2215 = scalar_lea.sflag [#allocation4], 1
    %2216 = vsyncpa %s2215, 1
    %2217 = vsyncpa [#allocation16], 1
    %s2218 = scalar_lea.sflag [#allocation16], 1
    %2219 = vsyncpa %s2218, 1

</llo_original>
